<compile_context>
chip_gen: v7x
topology: tpu7x:2x2x1
jax: 0.10.0
libtpu: 0.0.40
codegen_flags: <defaults>
</compile_context>

<pallas_src>
import functools

import jax
import jax.numpy as jnp
from jax import lax
from jax.experimental import pallas as pl
from jax.experimental.pallas import tpu as pltpu


def bottleneck_kernel(x_ref, wdw_ref, gamma_ref, beta_ref, w2_ref, w3_ref,
                      out_ref, xpad_ref, *, H, W, C, K, eps, pad, lpad,
                      h_tile):
    # --- build the zero-padded slab in VMEM (no wrapper-side jnp.pad).
    #     Interior lives at rows [pad, pad+H), cols [lpad, lpad+W) so the
    #     store is sublane-aligned; halos come from the zero fill. ---
    xpad_ref[...] = jnp.zeros_like(xpad_ref)
    xpad_ref[pad:pad + H, lpad:lpad + W, :] = x_ref[...]

    wdw = wdw_ref[...]                                    # (K, K, C) f32

    # --- depthwise KxK conv, stride 1: K shifted windows along W (sublanes),
    #     ky offsets slice the leading H axis (free). ---
    acc = jnp.zeros((H, W, C), jnp.float32)
    for kx in range(K):
        c0 = lpad - pad + kx
        xs = xpad_ref[:, c0:c0 + W, :]                    # (H + 2*pad, W, C)
        for ky in range(K):
            acc = acc + xs[ky:ky + H] * wdw[ky, kx]

    # --- LayerNorm: per-channel stats over spatial.  Unbiased variance and
    #     eps added to std (outside sqrt) -- matches the PyTorch LayerNorm
    #     module in the spec.  Folded into a per-channel scale/shift. ---
    hw = H * W
    acc2 = acc.reshape(hw, C)
    mean = jnp.mean(acc2, axis=0, keepdims=True)                      # (1, C)
    var = jnp.sum((acc2 - mean) ** 2, axis=0, keepdims=True) / (hw - 1)
    inv = pl.reciprocal(jnp.sqrt(var) + eps, approx=True)             # EUP
    scale = gamma_ref[...] * inv                                      # (1, C)
    shift = beta_ref[...] - mean * scale                              # (1, C)

    # --- expand (1x1, C -> 4C) -> exact (erf) GELU -> project (1x1) ->
    #     residual add, tiled over H rows to bound the (rows, 4C) temp. ---
    for h0 in range(0, H, h_tile):
        ht = min(h_tile, H - h0)
        rows = ht * W
        y = (acc[h0:h0 + ht] * scale + shift).reshape(rows, C)        # f32
        h = jnp.dot(y.astype(jnp.bfloat16), w2_ref[...],
                    preferred_element_type=jnp.float32)               # (rows, 4C)
        h = 0.5 * h * (1.0 + lax.erf(h * 0.7071067811865476))         # exact GELU
        o = jnp.dot(h.astype(jnp.bfloat16), w3_ref[...],
                    preferred_element_type=jnp.float32)               # (rows, C)
        o = o + x_ref[h0:h0 + ht].reshape(rows, C)                    # residual (f32)
        out_ref[h0:h0 + ht] = o.reshape(ht, W, C)


def bottleneck_forward(x_nchw, w_dw, gamma, beta, w2, w3, *, kernel_size=7,
                       eps=1e-5):
    N, C, H, W = x_nchw.shape
    hidden = w2.shape[1]
    planes = w3.shape[1]
    # residual `out += identity` requires planes == in_planes (downsample=None)
    assert planes == C
    pad = (kernel_size - 1) // 2
    lpad = -(-pad // 8) * 8                  # aligned column offset for interior
    Hp = H + 2 * pad
    Wp = lpad + W + pad                      # left halo sits in cols [lpad-pad, lpad)

    # Layout glue: NCHW -> NHWC so 1x1 convs are MXU matmuls.
    # TODO(synk): in an NHWC-native pipeline these boundary transposes
    # (one HBM read+write of x and of the output) disappear entirely.
    x = jnp.transpose(x_nchw, (0, 2, 3, 1)).astype(jnp.float32)
    w2b = w2.astype(jnp.bfloat16)            # cast matmul weights once, outside
    w3b = w3.astype(jnp.bfloat16)

    # H-row tile for the expand/GELU/project stage: keep the f32 (rows, 4C)
    # intermediate around <= ~2 MiB (v7x has only 64 MiB physical VMEM).
    rows_budget = max(W, (2 * 1024 * 1024) // (hidden * 4))
    h_tile = max(1, min(H, rows_budget // W))

    # Explicit scoped-VMEM budget (v5e default is only 16 MiB).
    est = (Hp * Wp * C * 4                         # padded slab scratch
           + 4 * H * W * C * 4                     # acc + live temporaries
           + 2 * 2 * H * W * C * 4                 # x / out blocks (double-buffered)
           + 2 * (kernel_size * kernel_size * C * 4 + 2 * C * 4
                  + C * hidden * 2 + hidden * planes * 2)
           + 4 * h_tile * W * hidden * 4)          # per-tile matmul/GELU temps
    vmem_limit = int(min(max(2 * est, 32 * 1024 * 1024), 100 * 1024 * 1024))

    kern = functools.partial(bottleneck_kernel, H=H, W=W, C=C, K=kernel_size,
                             eps=eps, pad=pad, lpad=lpad, h_tile=h_tile)
    out_nhwc = pl.pallas_call(
        kern,
        out_shape=jax.ShapeDtypeStruct((N, H, W, planes), jnp.float32),
        grid_spec=pltpu.PrefetchScalarGridSpec(
            num_scalar_prefetch=0,
            grid=(N,),
            in_specs=[
                pl.BlockSpec((None, H, W, C), lambda n: (n, 0, 0, 0)),
                pl.BlockSpec((kernel_size, kernel_size, C),
                             lambda n: (0, 0, 0)),
                pl.BlockSpec((1, C), lambda n: (0, 0)),
                pl.BlockSpec((1, C), lambda n: (0, 0)),
                pl.BlockSpec((C, hidden), lambda n: (0, 0)),
                pl.BlockSpec((hidden, planes), lambda n: (0, 0)),
            ],
            out_specs=pl.BlockSpec((None, H, W, planes),
                                   lambda n: (n, 0, 0, 0)),
            scratch_shapes=[pltpu.VMEM((Hp, Wp, C), jnp.float32)],
        ),
        compiler_params=pltpu.CompilerParams(
            dimension_semantics=("parallel",),
            vmem_limit_bytes=vmem_limit),
    )(x, w_dw.astype(jnp.float32),
      gamma.reshape(1, C).astype(jnp.float32),
      beta.reshape(1, C).astype(jnp.float32), w2b, w3b)

    return jnp.transpose(out_nhwc, (0, 3, 1, 2))          # back to NCHW


def reference(x_nchw, w_dw, gamma, beta, w2, w3, *, kernel_size=7, eps=1e-5):
    """Plain-JAX f32 reference mirroring the PyTorch forward exactly."""
    N, C, H, W = x_nchw.shape
    pad = (kernel_size - 1) // 2
    # depthwise conv (PyTorch weight layout (C, 1, K, K))
    w_t = jnp.transpose(w_dw, (2, 0, 1))[:, None, :, :]
    out = lax.conv_general_dilated(
        x_nchw, w_t, (1, 1), [(pad, pad), (pad, pad)],
        dimension_numbers=("NCHW", "OIHW", "NCHW"), feature_group_count=C)
    y = out.reshape(N, C, H * W)
    mean = y.mean(-1, keepdims=True)
    std = jnp.sqrt(jnp.sum((y - mean) ** 2, -1, keepdims=True) / (H * W - 1))
    y = (y - mean) / (std + eps)
    y = y.reshape(N, C, H, W) * gamma.reshape(1, C, 1, 1) + beta.reshape(1, C, 1, 1)
    h = jnp.einsum("nchw,cd->ndhw", y, w2)
    h = 0.5 * h * (1.0 + lax.erf(h / jnp.sqrt(2.0)))
    o = jnp.einsum("ndhw,dp->nphw", h, w3)
    return o + x_nchw


if __name__ == "__main__":
    key = jax.random.PRNGKey(0)
    N, C, H, W = 2, 4, 16, 16          # in_planes = 4
    K = 7
    planes = C                         # planes == in_planes (no downsample)
    hidden = C * 4                     # expansion = 4

    k1, k2, k3, k4 = jax.random.split(key, 4)
    x = jax.random.normal(k1, (N, C, H, W), jnp.float32)
    w_dw = jax.random.normal(k2, (K, K, C), jnp.float32) * 0.1       # depthwise
    w2 = jax.random.normal(k3, (C, hidden), jnp.float32) * 0.1       # conv2 (1x1)
    w3 = jax.random.normal(k4, (hidden, planes), jnp.float32) * 0.1  # conv3 (1x1)
    gamma = jnp.ones((C,), jnp.float32)   # LayerNorm weight init (ones)
    beta = jnp.zeros((C,), jnp.float32)   # LayerNorm bias init (zeros)

    out = bottleneck_forward(x, w_dw, gamma, beta, w2, w3, kernel_size=K)
    out = jax.block_until_ready(out)

    ref = reference(x, w_dw, gamma, beta, w2, w3, kernel_size=K)
    assert out.shape == (N, planes, H, W)
    err = float(jnp.max(jnp.abs(out - ref)))
    # tolerance loosened slightly vs. pure-f32: the two 1x1-conv matmuls now
    # run in bf16 on the MXU (f32 accumulation, f32 LN stats / residual).
    assert jnp.allclose(out, ref, atol=1e-2, rtol=1e-2), err

    print("KERNEL_OK")
</pallas_src>

<mosaic_0001>
module attributes {stable_mosaic.version = 11 : i64} {
  func.func @bottleneck_kernel(%arg0: i32, %arg1: memref<1x16x16x4xf32, #tpu.memory_space<vmem>>, %arg2: memref<7x7x4xf32, #tpu.memory_space<vmem>>, %arg3: memref<1x4xf32, #tpu.memory_space<vmem>>, %arg4: memref<1x4xf32, #tpu.memory_space<vmem>>, %arg5: memref<4x16xbf16, #tpu.memory_space<vmem>>, %arg6: memref<16x4xbf16, #tpu.memory_space<vmem>>, %arg7: memref<1x16x16x4xf32, #tpu.memory_space<vmem>>, %arg8: memref<22x27x4xf32, #tpu.memory_space<vmem>>) attributes {dimension_semantics = [#tpu.dimension_semantics<parallel>], iteration_bounds = array<i64: 2>, scalar_prefetch = 0 : i64, scratch_operands = 1 : i64, tpu.core_type = #tpu.core_type<tc>, window_params = [{transform_indices = @transform_0, window_bounds = array<i64: 1, 16, 16, 4>}, {pipeline_mode = #tpu.pipeline_mode<synchronous>, transform_indices = @transform_1, window_bounds = array<i64: 7, 7, 4>}, {pipeline_mode = #tpu.pipeline_mode<synchronous>, transform_indices = @transform_2, window_bounds = array<i64: 1, 4>}, {pipeline_mode = #tpu.pipeline_mode<synchronous>, transform_indices = @transform_3, window_bounds = array<i64: 1, 4>}, {pipeline_mode = #tpu.pipeline_mode<synchronous>, transform_indices = @transform_4, window_bounds = array<i64: 4, 16>}, {pipeline_mode = #tpu.pipeline_mode<synchronous>, transform_indices = @transform_5, window_bounds = array<i64: 16, 4>}, {transform_indices = @transform_6, window_bounds = array<i64: 1, 16, 16, 4>}]} {
    %cst = arith.constant 0.000000e+00 : f32
    %0 = vector.broadcast %cst : f32 to vector<22x27x4xf32>
    %c0 = arith.constant 0 : index
    %c0_0 = arith.constant 0 : index
    %c0_1 = arith.constant 0 : index
    %1 = vector.load %arg8[%c0, %c0_0, %c0_1] : memref<22x27x4xf32, #tpu.memory_space<vmem>>, vector<22x27x4xf32>
    tpu.vector_store %arg8[%c0, %c0_0, %c0_1], %0 {strides = array<i32>} : memref<22x27x4xf32, #tpu.memory_space<vmem>>, vector<22x27x4xf32>,
    %c0_2 = arith.constant 0 : index
    %c0_3 = arith.constant 0 : index
    %c0_4 = arith.constant 0 : index
    %c0_5 = arith.constant 0 : index
    %2 = vector.load %arg1[%c0_2, %c0_3, %c0_4, %c0_5] : memref<1x16x16x4xf32, #tpu.memory_space<vmem>>, vector<1x16x16x4xf32>
    %3 = vector.shape_cast %2 : vector<1x16x16x4xf32> to vector<16x16x4xf32>
    %c3 = arith.constant 3 : index
    %c8 = arith.constant 8 : index
    %c0_6 = arith.constant 0 : index
    %4 = vector.load %arg8[%c3, %c8, %c0_6] : memref<22x27x4xf32, #tpu.memory_space<vmem>>, vector<16x16x4xf32>
    tpu.vector_store %arg8[%c3, %c8, %c0_6], %3 {strides = array<i32>} : memref<22x27x4xf32, #tpu.memory_space<vmem>>, vector<16x16x4xf32>,
    %c0_7 = arith.constant 0 : index
    %c0_8 = arith.constant 0 : index
    %c0_9 = arith.constant 0 : index
    %5 = vector.load %arg2[%c0_7, %c0_8, %c0_9] : memref<7x7x4xf32, #tpu.memory_space<vmem>>, vector<7x7x4xf32>
    %cst_10 = arith.constant 0.000000e+00 : f32
    %6 = vector.broadcast %cst_10 : f32 to vector<16x16x4xf32>
    %c0_11 = arith.constant 0 : index
    %c5 = arith.constant 5 : index
    %c0_12 = arith.constant 0 : index
    %7 = vector.load %arg8[%c0_11, %c5, %c0_12] : memref<22x27x4xf32, #tpu.memory_space<vmem>>, vector<22x16x4xf32>
    %8 = vector.extract_strided_slice %7 {offsets = [0, 0, 0], sizes = [16, 16, 4], strides = [1, 1, 1]} : vector<22x16x4xf32> to vector<16x16x4xf32>
    %9 = vector.extract_strided_slice %5 {offsets = [0, 0, 0], sizes = [1, 1, 4], strides = [1, 1, 1]} : vector<7x7x4xf32> to vector<1x1x4xf32>
    %10 = vector.shape_cast %9 : vector<1x1x4xf32> to vector<4xf32>
    %11 = vector.shape_cast %10 : vector<4xf32> to vector<1x1x4xf32>
    %12 = vector.broadcast %11 : vector<1x1x4xf32> to vector<16x16x4xf32>
    %13 = arith.mulf %8, %12 : vector<16x16x4xf32>
    %14 = arith.addf %6, %13 : vector<16x16x4xf32>
    %15 = vector.extract_strided_slice %7 {offsets = [1, 0, 0], sizes = [16, 16, 4], strides = [1, 1, 1]} : vector<22x16x4xf32> to vector<16x16x4xf32>
    %16 = vector.extract_strided_slice %5 {offsets = [1, 0, 0], sizes = [1, 1, 4], strides = [1, 1, 1]} : vector<7x7x4xf32> to vector<1x1x4xf32>
    %17 = vector.shape_cast %16 : vector<1x1x4xf32> to vector<4xf32>
    %18 = vector.shape_cast %17 : vector<4xf32> to vector<1x1x4xf32>
    %19 = vector.broadcast %18 : vector<1x1x4xf32> to vector<16x16x4xf32>
    %20 = arith.mulf %15, %19 : vector<16x16x4xf32>
    %21 = arith.addf %14, %20 : vector<16x16x4xf32>
    %22 = vector.extract_strided_slice %7 {offsets = [2, 0, 0], sizes = [16, 16, 4], strides = [1, 1, 1]} : vector<22x16x4xf32> to vector<16x16x4xf32>
    %23 = vector.extract_strided_slice %5 {offsets = [2, 0, 0], sizes = [1, 1, 4], strides = [1, 1, 1]} : vector<7x7x4xf32> to vector<1x1x4xf32>
    %24 = vector.shape_cast %23 : vector<1x1x4xf32> to vector<4xf32>
    %25 = vector.shape_cast %24 : vector<4xf32> to vector<1x1x4xf32>
    %26 = vector.broadcast %25 : vector<1x1x4xf32> to vector<16x16x4xf32>
    %27 = arith.mulf %22, %26 : vector<16x16x4xf32>
    %28 = arith.addf %21, %27 : vector<16x16x4xf32>
    %29 = vector.extract_strided_slice %7 {offsets = [3, 0, 0], sizes = [16, 16, 4], strides = [1, 1, 1]} : vector<22x16x4xf32> to vector<16x16x4xf32>
    %30 = vector.extract_strided_slice %5 {offsets = [3, 0, 0], sizes = [1, 1, 4], strides = [1, 1, 1]} : vector<7x7x4xf32> to vector<1x1x4xf32>
    %31 = vector.shape_cast %30 : vector<1x1x4xf32> to vector<4xf32>
    %32 = vector.shape_cast %31 : vector<4xf32> to vector<1x1x4xf32>
    %33 = vector.broadcast %32 : vector<1x1x4xf32> to vector<16x16x4xf32>
    %34 = arith.mulf %29, %33 : vector<16x16x4xf32>
    %35 = arith.addf %28, %34 : vector<16x16x4xf32>
    %36 = vector.extract_strided_slice %7 {offsets = [4, 0, 0], sizes = [16, 16, 4], strides = [1, 1, 1]} : vector<22x16x4xf32> to vector<16x16x4xf32>
    %37 = vector.extract_strided_slice %5 {offsets = [4, 0, 0], sizes = [1, 1, 4], strides = [1, 1, 1]} : vector<7x7x4xf32> to vector<1x1x4xf32>
    %38 = vector.shape_cast %37 : vector<1x1x4xf32> to vector<4xf32>
    %39 = vector.shape_cast %38 : vector<4xf32> to vector<1x1x4xf32>
    %40 = vector.broadcast %39 : vector<1x1x4xf32> to vector<16x16x4xf32>
    %41 = arith.mulf %36, %40 : vector<16x16x4xf32>
    %42 = arith.addf %35, %41 : vector<16x16x4xf32>
    %43 = vector.extract_strided_slice %7 {offsets = [5, 0, 0], sizes = [16, 16, 4], strides = [1, 1, 1]} : vector<22x16x4xf32> to vector<16x16x4xf32>
    %44 = vector.extract_strided_slice %5 {offsets = [5, 0, 0], sizes = [1, 1, 4], strides = [1, 1, 1]} : vector<7x7x4xf32> to vector<1x1x4xf32>
    %45 = vector.shape_cast %44 : vector<1x1x4xf32> to vector<4xf32>
    %46 = vector.shape_cast %45 : vector<4xf32> to vector<1x1x4xf32>
    %47 = vector.broadcast %46 : vector<1x1x4xf32> to vector<16x16x4xf32>
    %48 = arith.mulf %43, %47 : vector<16x16x4xf32>
    %49 = arith.addf %42, %48 : vector<16x16x4xf32>
    %50 = vector.extract_strided_slice %7 {offsets = [6, 0, 0], sizes = [16, 16, 4], strides = [1, 1, 1]} : vector<22x16x4xf32> to vector<16x16x4xf32>
    %51 = vector.extract_strided_slice %5 {offsets = [6, 0, 0], sizes = [1, 1, 4], strides = [1, 1, 1]} : vector<7x7x4xf32> to vector<1x1x4xf32>
    %52 = vector.shape_cast %51 : vector<1x1x4xf32> to vector<4xf32>
    %53 = vector.shape_cast %52 : vector<4xf32> to vector<1x1x4xf32>
    %54 = vector.broadcast %53 : vector<1x1x4xf32> to vector<16x16x4xf32>
    %55 = arith.mulf %50, %54 : vector<16x16x4xf32>
    %56 = arith.addf %49, %55 : vector<16x16x4xf32>
    %c0_13 = arith.constant 0 : index
    %c6 = arith.constant 6 : index
    %c0_14 = arith.constant 0 : index
    %57 = vector.load %arg8[%c0_13, %c6, %c0_14] : memref<22x27x4xf32, #tpu.memory_space<vmem>>, vector<22x16x4xf32>
    %58 = vector.extract_strided_slice %57 {offsets = [0, 0, 0], sizes = [16, 16, 4], strides = [1, 1, 1]} : vector<22x16x4xf32> to vector<16x16x4xf32>
    %59 = vector.extract_strided_slice %5 {offsets = [0, 1, 0], sizes = [1, 1, 4], strides = [1, 1, 1]} : vector<7x7x4xf32> to vector<1x1x4xf32>
    %60 = vector.shape_cast %59 : vector<1x1x4xf32> to vector<4xf32>
    %61 = vector.shape_cast %60 : vector<4xf32> to vector<1x1x4xf32>
    %62 = vector.broadcast %61 : vector<1x1x4xf32> to vector<16x16x4xf32>
    %63 = arith.mulf %58, %62 : vector<16x16x4xf32>
    %64 = arith.addf %56, %63 : vector<16x16x4xf32>
    %65 = vector.extract_strided_slice %57 {offsets = [1, 0, 0], sizes = [16, 16, 4], strides = [1, 1, 1]} : vector<22x16x4xf32> to vector<16x16x4xf32>
    %66 = vector.extract_strided_slice %5 {offsets = [1, 1, 0], sizes = [1, 1, 4], strides = [1, 1, 1]} : vector<7x7x4xf32> to vector<1x1x4xf32>
    %67 = vector.shape_cast %66 : vector<1x1x4xf32> to vector<4xf32>
    %68 = vector.shape_cast %67 : vector<4xf32> to vector<1x1x4xf32>
    %69 = vector.broadcast %68 : vector<1x1x4xf32> to vector<16x16x4xf32>
    %70 = arith.mulf %65, %69 : vector<16x16x4xf32>
    %71 = arith.addf %64, %70 : vector<16x16x4xf32>
    %72 = vector.extract_strided_slice %57 {offsets = [2, 0, 0], sizes = [16, 16, 4], strides = [1, 1, 1]} : vector<22x16x4xf32> to vector<16x16x4xf32>
    %73 = vector.extract_strided_slice %5 {offsets = [2, 1, 0], sizes = [1, 1, 4], strides = [1, 1, 1]} : vector<7x7x4xf32> to vector<1x1x4xf32>
    %74 = vector.shape_cast %73 : vector<1x1x4xf32> to vector<4xf32>
    %75 = vector.shape_cast %74 : vector<4xf32> to vector<1x1x4xf32>
    %76 = vector.broadcast %75 : vector<1x1x4xf32> to vector<16x16x4xf32>
    %77 = arith.mulf %72, %76 : vector<16x16x4xf32>
    %78 = arith.addf %71, %77 : vector<16x16x4xf32>
    %79 = vector.extract_strided_slice %57 {offsets = [3, 0, 0], sizes = [16, 16, 4], strides = [1, 1, 1]} : vector<22x16x4xf32> to vector<16x16x4xf32>
    %80 = vector.extract_strided_slice %5 {offsets = [3, 1, 0], sizes = [1, 1, 4], strides = [1, 1, 1]} : vector<7x7x4xf32> to vector<1x1x4xf32>
    %81 = vector.shape_cast %80 : vector<1x1x4xf32> to vector<4xf32>
    %82 = vector.shape_cast %81 : vector<4xf32> to vector<1x1x4xf32>
    %83 = vector.broadcast %82 : vector<1x1x4xf32> to vector<16x16x4xf32>
    %84 = arith.mulf %79, %83 : vector<16x16x4xf32>
    %85 = arith.addf %78, %84 : vector<16x16x4xf32>
    %86 = vector.extract_strided_slice %57 {offsets = [4, 0, 0], sizes = [16, 16, 4], strides = [1, 1, 1]} : vector<22x16x4xf32> to vector<16x16x4xf32>
    %87 = vector.extract_strided_slice %5 {offsets = [4, 1, 0], sizes = [1, 1, 4], strides = [1, 1, 1]} : vector<7x7x4xf32> to vector<1x1x4xf32>
    %88 = vector.shape_cast %87 : vector<1x1x4xf32> to vector<4xf32>
    %89 = vector.shape_cast %88 : vector<4xf32> to vector<1x1x4xf32>
    %90 = vector.broadcast %89 : vector<1x1x4xf32> to vector<16x16x4xf32>
    %91 = arith.mulf %86, %90 : vector<16x16x4xf32>
    %92 = arith.addf %85, %91 : vector<16x16x4xf32>
    %93 = vector.extract_strided_slice %57 {offsets = [5, 0, 0], sizes = [16, 16, 4], strides = [1, 1, 1]} : vector<22x16x4xf32> to vector<16x16x4xf32>
    %94 = vector.extract_strided_slice %5 {offsets = [5, 1, 0], sizes = [1, 1, 4], strides = [1, 1, 1]} : vector<7x7x4xf32> to vector<1x1x4xf32>
    %95 = vector.shape_cast %94 : vector<1x1x4xf32> to vector<4xf32>
    %96 = vector.shape_cast %95 : vector<4xf32> to vector<1x1x4xf32>
    %97 = vector.broadcast %96 : vector<1x1x4xf32> to vector<16x16x4xf32>
    %98 = arith.mulf %93, %97 : vector<16x16x4xf32>
    %99 = arith.addf %92, %98 : vector<16x16x4xf32>
    %100 = vector.extract_strided_slice %57 {offsets = [6, 0, 0], sizes = [16, 16, 4], strides = [1, 1, 1]} : vector<22x16x4xf32> to vector<16x16x4xf32>
    %101 = vector.extract_strided_slice %5 {offsets = [6, 1, 0], sizes = [1, 1, 4], strides = [1, 1, 1]} : vector<7x7x4xf32> to vector<1x1x4xf32>
    %102 = vector.shape_cast %101 : vector<1x1x4xf32> to vector<4xf32>
    %103 = vector.shape_cast %102 : vector<4xf32> to vector<1x1x4xf32>
    %104 = vector.broadcast %103 : vector<1x1x4xf32> to vector<16x16x4xf32>
    %105 = arith.mulf %100, %104 : vector<16x16x4xf32>
    %106 = arith.addf %99, %105 : vector<16x16x4xf32>
    %c0_15 = arith.constant 0 : index
    %c7 = arith.constant 7 : index
    %c0_16 = arith.constant 0 : index
    %107 = vector.load %arg8[%c0_15, %c7, %c0_16] : memref<22x27x4xf32, #tpu.memory_space<vmem>>, vector<22x16x4xf32>
    %108 = vector.extract_strided_slice %107 {offsets = [0, 0, 0], sizes = [16, 16, 4], strides = [1, 1, 1]} : vector<22x16x4xf32> to vector<16x16x4xf32>
    %109 = vector.extract_strided_slice %5 {offsets = [0, 2, 0], sizes = [1, 1, 4], strides = [1, 1, 1]} : vector<7x7x4xf32> to vector<1x1x4xf32>
    %110 = vector.shape_cast %109 : vector<1x1x4xf32> to vector<4xf32>
    %111 = vector.shape_cast %110 : vector<4xf32> to vector<1x1x4xf32>
    %112 = vector.broadcast %111 : vector<1x1x4xf32> to vector<16x16x4xf32>
    %113 = arith.mulf %108, %112 : vector<16x16x4xf32>
    %114 = arith.addf %106, %113 : vector<16x16x4xf32>
    %115 = vector.extract_strided_slice %107 {offsets = [1, 0, 0], sizes = [16, 16, 4], strides = [1, 1, 1]} : vector<22x16x4xf32> to vector<16x16x4xf32>
    %116 = vector.extract_strided_slice %5 {offsets = [1, 2, 0], sizes = [1, 1, 4], strides = [1, 1, 1]} : vector<7x7x4xf32> to vector<1x1x4xf32>
    %117 = vector.shape_cast %116 : vector<1x1x4xf32> to vector<4xf32>
    %118 = vector.shape_cast %117 : vector<4xf32> to vector<1x1x4xf32>
    %119 = vector.broadcast %118 : vector<1x1x4xf32> to vector<16x16x4xf32>
    %120 = arith.mulf %115, %119 : vector<16x16x4xf32>
    %121 = arith.addf %114, %120 : vector<16x16x4xf32>
    %122 = vector.extract_strided_slice %107 {offsets = [2, 0, 0], sizes = [16, 16, 4], strides = [1, 1, 1]} : vector<22x16x4xf32> to vector<16x16x4xf32>
    %123 = vector.extract_strided_slice %5 {offsets = [2, 2, 0], sizes = [1, 1, 4], strides = [1, 1, 1]} : vector<7x7x4xf32> to vector<1x1x4xf32>
    %124 = vector.shape_cast %123 : vector<1x1x4xf32> to vector<4xf32>
    %125 = vector.shape_cast %124 : vector<4xf32> to vector<1x1x4xf32>
    %126 = vector.broadcast %125 : vector<1x1x4xf32> to vector<16x16x4xf32>
    %127 = arith.mulf %122, %126 : vector<16x16x4xf32>
    %128 = arith.addf %121, %127 : vector<16x16x4xf32>
    %129 = vector.extract_strided_slice %107 {offsets = [3, 0, 0], sizes = [16, 16, 4], strides = [1, 1, 1]} : vector<22x16x4xf32> to vector<16x16x4xf32>
    %130 = vector.extract_strided_slice %5 {offsets = [3, 2, 0], sizes = [1, 1, 4], strides = [1, 1, 1]} : vector<7x7x4xf32> to vector<1x1x4xf32>
    %131 = vector.shape_cast %130 : vector<1x1x4xf32> to vector<4xf32>
    %132 = vector.shape_cast %131 : vector<4xf32> to vector<1x1x4xf32>
    %133 = vector.broadcast %132 : vector<1x1x4xf32> to vector<16x16x4xf32>
    %134 = arith.mulf %129, %133 : vector<16x16x4xf32>
    %135 = arith.addf %128, %134 : vector<16x16x4xf32>
    %136 = vector.extract_strided_slice %107 {offsets = [4, 0, 0], sizes = [16, 16, 4], strides = [1, 1, 1]} : vector<22x16x4xf32> to vector<16x16x4xf32>
    %137 = vector.extract_strided_slice %5 {offsets = [4, 2, 0], sizes = [1, 1, 4], strides = [1, 1, 1]} : vector<7x7x4xf32> to vector<1x1x4xf32>
    %138 = vector.shape_cast %137 : vector<1x1x4xf32> to vector<4xf32>
    %139 = vector.shape_cast %138 : vector<4xf32> to vector<1x1x4xf32>
    %140 = vector.broadcast %139 : vector<1x1x4xf32> to vector<16x16x4xf32>
    %141 = arith.mulf %136, %140 : vector<16x16x4xf32>
    %142 = arith.addf %135, %141 : vector<16x16x4xf32>
    %143 = vector.extract_strided_slice %107 {offsets = [5, 0, 0], sizes = [16, 16, 4], strides = [1, 1, 1]} : vector<22x16x4xf32> to vector<16x16x4xf32>
    %144 = vector.extract_strided_slice %5 {offsets = [5, 2, 0], sizes = [1, 1, 4], strides = [1, 1, 1]} : vector<7x7x4xf32> to vector<1x1x4xf32>
    %145 = vector.shape_cast %144 : vector<1x1x4xf32> to vector<4xf32>
    %146 = vector.shape_cast %145 : vector<4xf32> to vector<1x1x4xf32>
    %147 = vector.broadcast %146 : vector<1x1x4xf32> to vector<16x16x4xf32>
    %148 = arith.mulf %143, %147 : vector<16x16x4xf32>
    %149 = arith.addf %142, %148 : vector<16x16x4xf32>
    %150 = vector.extract_strided_slice %107 {offsets = [6, 0, 0], sizes = [16, 16, 4], strides = [1, 1, 1]} : vector<22x16x4xf32> to vector<16x16x4xf32>
    %151 = vector.extract_strided_slice %5 {offsets = [6, 2, 0], sizes = [1, 1, 4], strides = [1, 1, 1]} : vector<7x7x4xf32> to vector<1x1x4xf32>
    %152 = vector.shape_cast %151 : vector<1x1x4xf32> to vector<4xf32>
    %153 = vector.shape_cast %152 : vector<4xf32> to vector<1x1x4xf32>
    %154 = vector.broadcast %153 : vector<1x1x4xf32> to vector<16x16x4xf32>
    %155 = arith.mulf %150, %154 : vector<16x16x4xf32>
    %156 = arith.addf %149, %155 : vector<16x16x4xf32>
    %c0_17 = arith.constant 0 : index
    %c8_18 = arith.constant 8 : index
    %c0_19 = arith.constant 0 : index
    %157 = vector.load %arg8[%c0_17, %c8_18, %c0_19] : memref<22x27x4xf32, #tpu.memory_space<vmem>>, vector<22x16x4xf32>
    %158 = vector.extract_strided_slice %157 {offsets = [0, 0, 0], sizes = [16, 16, 4], strides = [1, 1, 1]} : vector<22x16x4xf32> to vector<16x16x4xf32>
    %159 = vector.extract_strided_slice %5 {offsets = [0, 3, 0], sizes = [1, 1, 4], strides = [1, 1, 1]} : vector<7x7x4xf32> to vector<1x1x4xf32>
    %160 = vector.shape_cast %159 : vector<1x1x4xf32> to vector<4xf32>
    %161 = vector.shape_cast %160 : vector<4xf32> to vector<1x1x4xf32>
    %162 = vector.broadcast %161 : vector<1x1x4xf32> to vector<16x16x4xf32>
    %163 = arith.mulf %158, %162 : vector<16x16x4xf32>
    %164 = arith.addf %156, %163 : vector<16x16x4xf32>
    %165 = vector.extract_strided_slice %157 {offsets = [1, 0, 0], sizes = [16, 16, 4], strides = [1, 1, 1]} : vector<22x16x4xf32> to vector<16x16x4xf32>
    %166 = vector.extract_strided_slice %5 {offsets = [1, 3, 0], sizes = [1, 1, 4], strides = [1, 1, 1]} : vector<7x7x4xf32> to vector<1x1x4xf32>
    %167 = vector.shape_cast %166 : vector<1x1x4xf32> to vector<4xf32>
    %168 = vector.shape_cast %167 : vector<4xf32> to vector<1x1x4xf32>
    %169 = vector.broadcast %168 : vector<1x1x4xf32> to vector<16x16x4xf32>
    %170 = arith.mulf %165, %169 : vector<16x16x4xf32>
    %171 = arith.addf %164, %170 : vector<16x16x4xf32>
    %172 = vector.extract_strided_slice %157 {offsets = [2, 0, 0], sizes = [16, 16, 4], strides = [1, 1, 1]} : vector<22x16x4xf32> to vector<16x16x4xf32>
    %173 = vector.extract_strided_slice %5 {offsets = [2, 3, 0], sizes = [1, 1, 4], strides = [1, 1, 1]} : vector<7x7x4xf32> to vector<1x1x4xf32>
    %174 = vector.shape_cast %173 : vector<1x1x4xf32> to vector<4xf32>
    %175 = vector.shape_cast %174 : vector<4xf32> to vector<1x1x4xf32>
    %176 = vector.broadcast %175 : vector<1x1x4xf32> to vector<16x16x4xf32>
    %177 = arith.mulf %172, %176 : vector<16x16x4xf32>
    %178 = arith.addf %171, %177 : vector<16x16x4xf32>
    %179 = vector.extract_strided_slice %157 {offsets = [3, 0, 0], sizes = [16, 16, 4], strides = [1, 1, 1]} : vector<22x16x4xf32> to vector<16x16x4xf32>
    %180 = vector.extract_strided_slice %5 {offsets = [3, 3, 0], sizes = [1, 1, 4], strides = [1, 1, 1]} : vector<7x7x4xf32> to vector<1x1x4xf32>
    %181 = vector.shape_cast %180 : vector<1x1x4xf32> to vector<4xf32>
    %182 = vector.shape_cast %181 : vector<4xf32> to vector<1x1x4xf32>
    %183 = vector.broadcast %182 : vector<1x1x4xf32> to vector<16x16x4xf32>
    %184 = arith.mulf %179, %183 : vector<16x16x4xf32>
    %185 = arith.addf %178, %184 : vector<16x16x4xf32>
    %186 = vector.extract_strided_slice %157 {offsets = [4, 0, 0], sizes = [16, 16, 4], strides = [1, 1, 1]} : vector<22x16x4xf32> to vector<16x16x4xf32>
    %187 = vector.extract_strided_slice %5 {offsets = [4, 3, 0], sizes = [1, 1, 4], strides = [1, 1, 1]} : vector<7x7x4xf32> to vector<1x1x4xf32>
    %188 = vector.shape_cast %187 : vector<1x1x4xf32> to vector<4xf32>
    %189 = vector.shape_cast %188 : vector<4xf32> to vector<1x1x4xf32>
    %190 = vector.broadcast %189 : vector<1x1x4xf32> to vector<16x16x4xf32>
    %191 = arith.mulf %186, %190 : vector<16x16x4xf32>
    %192 = arith.addf %185, %191 : vector<16x16x4xf32>
    %193 = vector.extract_strided_slice %157 {offsets = [5, 0, 0], sizes = [16, 16, 4], strides = [1, 1, 1]} : vector<22x16x4xf32> to vector<16x16x4xf32>
    %194 = vector.extract_strided_slice %5 {offsets = [5, 3, 0], sizes = [1, 1, 4], strides = [1, 1, 1]} : vector<7x7x4xf32> to vector<1x1x4xf32>
    %195 = vector.shape_cast %194 : vector<1x1x4xf32> to vector<4xf32>
    %196 = vector.shape_cast %195 : vector<4xf32> to vector<1x1x4xf32>
    %197 = vector.broadcast %196 : vector<1x1x4xf32> to vector<16x16x4xf32>
    %198 = arith.mulf %193, %197 : vector<16x16x4xf32>
    %199 = arith.addf %192, %198 : vector<16x16x4xf32>
    %200 = vector.extract_strided_slice %157 {offsets = [6, 0, 0], sizes = [16, 16, 4], strides = [1, 1, 1]} : vector<22x16x4xf32> to vector<16x16x4xf32>
    %201 = vector.extract_strided_slice %5 {offsets = [6, 3, 0], sizes = [1, 1, 4], strides = [1, 1, 1]} : vector<7x7x4xf32> to vector<1x1x4xf32>
    %202 = vector.shape_cast %201 : vector<1x1x4xf32> to vector<4xf32>
    %203 = vector.shape_cast %202 : vector<4xf32> to vector<1x1x4xf32>
    %204 = vector.broadcast %203 : vector<1x1x4xf32> to vector<16x16x4xf32>
    %205 = arith.mulf %200, %204 : vector<16x16x4xf32>
    %206 = arith.addf %199, %205 : vector<16x16x4xf32>
    %c0_20 = arith.constant 0 : index
    %c9 = arith.constant 9 : index
    %c0_21 = arith.constant 0 : index
    %207 = vector.load %arg8[%c0_20, %c9, %c0_21] : memref<22x27x4xf32, #tpu.memory_space<vmem>>, vector<22x16x4xf32>
    %208 = vector.extract_strided_slice %207 {offsets = [0, 0, 0], sizes = [16, 16, 4], strides = [1, 1, 1]} : vector<22x16x4xf32> to vector<16x16x4xf32>
    %209 = vector.extract_strided_slice %5 {offsets = [0, 4, 0], sizes = [1, 1, 4], strides = [1, 1, 1]} : vector<7x7x4xf32> to vector<1x1x4xf32>
    %210 = vector.shape_cast %209 : vector<1x1x4xf32> to vector<4xf32>
    %211 = vector.shape_cast %210 : vector<4xf32> to vector<1x1x4xf32>
    %212 = vector.broadcast %211 : vector<1x1x4xf32> to vector<16x16x4xf32>
    %213 = arith.mulf %208, %212 : vector<16x16x4xf32>
    %214 = arith.addf %206, %213 : vector<16x16x4xf32>
    %215 = vector.extract_strided_slice %207 {offsets = [1, 0, 0], sizes = [16, 16, 4], strides = [1, 1, 1]} : vector<22x16x4xf32> to vector<16x16x4xf32>
    %216 = vector.extract_strided_slice %5 {offsets = [1, 4, 0], sizes = [1, 1, 4], strides = [1, 1, 1]} : vector<7x7x4xf32> to vector<1x1x4xf32>
    %217 = vector.shape_cast %216 : vector<1x1x4xf32> to vector<4xf32>
    %218 = vector.shape_cast %217 : vector<4xf32> to vector<1x1x4xf32>
    %219 = vector.broadcast %218 : vector<1x1x4xf32> to vector<16x16x4xf32>
    %220 = arith.mulf %215, %219 : vector<16x16x4xf32>
    %221 = arith.addf %214, %220 : vector<16x16x4xf32>
    %222 = vector.extract_strided_slice %207 {offsets = [2, 0, 0], sizes = [16, 16, 4], strides = [1, 1, 1]} : vector<22x16x4xf32> to vector<16x16x4xf32>
    %223 = vector.extract_strided_slice %5 {offsets = [2, 4, 0], sizes = [1, 1, 4], strides = [1, 1, 1]} : vector<7x7x4xf32> to vector<1x1x4xf32>
    %224 = vector.shape_cast %223 : vector<1x1x4xf32> to vector<4xf32>
    %225 = vector.shape_cast %224 : vector<4xf32> to vector<1x1x4xf32>
    %226 = vector.broadcast %225 : vector<1x1x4xf32> to vector<16x16x4xf32>
    %227 = arith.mulf %222, %226 : vector<16x16x4xf32>
    %228 = arith.addf %221, %227 : vector<16x16x4xf32>
    %229 = vector.extract_strided_slice %207 {offsets = [3, 0, 0], sizes = [16, 16, 4], strides = [1, 1, 1]} : vector<22x16x4xf32> to vector<16x16x4xf32>
    %230 = vector.extract_strided_slice %5 {offsets = [3, 4, 0], sizes = [1, 1, 4], strides = [1, 1, 1]} : vector<7x7x4xf32> to vector<1x1x4xf32>
    %231 = vector.shape_cast %230 : vector<1x1x4xf32> to vector<4xf32>
    %232 = vector.shape_cast %231 : vector<4xf32> to vector<1x1x4xf32>
    %233 = vector.broadcast %232 : vector<1x1x4xf32> to vector<16x16x4xf32>
    %234 = arith.mulf %229, %233 : vector<16x16x4xf32>
    %235 = arith.addf %228, %234 : vector<16x16x4xf32>
    %236 = vector.extract_strided_slice %207 {offsets = [4, 0, 0], sizes = [16, 16, 4], strides = [1, 1, 1]} : vector<22x16x4xf32> to vector<16x16x4xf32>
    %237 = vector.extract_strided_slice %5 {offsets = [4, 4, 0], sizes = [1, 1, 4], strides = [1, 1, 1]} : vector<7x7x4xf32> to vector<1x1x4xf32>
    %238 = vector.shape_cast %237 : vector<1x1x4xf32> to vector<4xf32>
    %239 = vector.shape_cast %238 : vector<4xf32> to vector<1x1x4xf32>
    %240 = vector.broadcast %239 : vector<1x1x4xf32> to vector<16x16x4xf32>
    %241 = arith.mulf %236, %240 : vector<16x16x4xf32>
    %242 = arith.addf %235, %241 : vector<16x16x4xf32>
    %243 = vector.extract_strided_slice %207 {offsets = [5, 0, 0], sizes = [16, 16, 4], strides = [1, 1, 1]} : vector<22x16x4xf32> to vector<16x16x4xf32>
    %244 = vector.extract_strided_slice %5 {offsets = [5, 4, 0], sizes = [1, 1, 4], strides = [1, 1, 1]} : vector<7x7x4xf32> to vector<1x1x4xf32>
    %245 = vector.shape_cast %244 : vector<1x1x4xf32> to vector<4xf32>
    %246 = vector.shape_cast %245 : vector<4xf32> to vector<1x1x4xf32>
    %247 = vector.broadcast %246 : vector<1x1x4xf32> to vector<16x16x4xf32>
    %248 = arith.mulf %243, %247 : vector<16x16x4xf32>
    %249 = arith.addf %242, %248 : vector<16x16x4xf32>
    %250 = vector.extract_strided_slice %207 {offsets = [6, 0, 0], sizes = [16, 16, 4], strides = [1, 1, 1]} : vector<22x16x4xf32> to vector<16x16x4xf32>
    %251 = vector.extract_strided_slice %5 {offsets = [6, 4, 0], sizes = [1, 1, 4], strides = [1, 1, 1]} : vector<7x7x4xf32> to vector<1x1x4xf32>
    %252 = vector.shape_cast %251 : vector<1x1x4xf32> to vector<4xf32>
    %253 = vector.shape_cast %252 : vector<4xf32> to vector<1x1x4xf32>
    %254 = vector.broadcast %253 : vector<1x1x4xf32> to vector<16x16x4xf32>
    %255 = arith.mulf %250, %254 : vector<16x16x4xf32>
    %256 = arith.addf %249, %255 : vector<16x16x4xf32>
    %c0_22 = arith.constant 0 : index
    %c10 = arith.constant 10 : index
    %c0_23 = arith.constant 0 : index
    %257 = vector.load %arg8[%c0_22, %c10, %c0_23] : memref<22x27x4xf32, #tpu.memory_space<vmem>>, vector<22x16x4xf32>
    %258 = vector.extract_strided_slice %257 {offsets = [0, 0, 0], sizes = [16, 16, 4], strides = [1, 1, 1]} : vector<22x16x4xf32> to vector<16x16x4xf32>
    %259 = vector.extract_strided_slice %5 {offsets = [0, 5, 0], sizes = [1, 1, 4], strides = [1, 1, 1]} : vector<7x7x4xf32> to vector<1x1x4xf32>
    %260 = vector.shape_cast %259 : vector<1x1x4xf32> to vector<4xf32>
    %261 = vector.shape_cast %260 : vector<4xf32> to vector<1x1x4xf32>
    %262 = vector.broadcast %261 : vector<1x1x4xf32> to vector<16x16x4xf32>
    %263 = arith.mulf %258, %262 : vector<16x16x4xf32>
    %264 = arith.addf %256, %263 : vector<16x16x4xf32>
    %265 = vector.extract_strided_slice %257 {offsets = [1, 0, 0], sizes = [16, 16, 4], strides = [1, 1, 1]} : vector<22x16x4xf32> to vector<16x16x4xf32>
    %266 = vector.extract_strided_slice %5 {offsets = [1, 5, 0], sizes = [1, 1, 4], strides = [1, 1, 1]} : vector<7x7x4xf32> to vector<1x1x4xf32>
    %267 = vector.shape_cast %266 : vector<1x1x4xf32> to vector<4xf32>
    %268 = vector.shape_cast %267 : vector<4xf32> to vector<1x1x4xf32>
    %269 = vector.broadcast %268 : vector<1x1x4xf32> to vector<16x16x4xf32>
    %270 = arith.mulf %265, %269 : vector<16x16x4xf32>
    %271 = arith.addf %264, %270 : vector<16x16x4xf32>
    %272 = vector.extract_strided_slice %257 {offsets = [2, 0, 0], sizes = [16, 16, 4], strides = [1, 1, 1]} : vector<22x16x4xf32> to vector<16x16x4xf32>
    %273 = vector.extract_strided_slice %5 {offsets = [2, 5, 0], sizes = [1, 1, 4], strides = [1, 1, 1]} : vector<7x7x4xf32> to vector<1x1x4xf32>
    %274 = vector.shape_cast %273 : vector<1x1x4xf32> to vector<4xf32>
    %275 = vector.shape_cast %274 : vector<4xf32> to vector<1x1x4xf32>
    %276 = vector.broadcast %275 : vector<1x1x4xf32> to vector<16x16x4xf32>
    %277 = arith.mulf %272, %276 : vector<16x16x4xf32>
    %278 = arith.addf %271, %277 : vector<16x16x4xf32>
    %279 = vector.extract_strided_slice %257 {offsets = [3, 0, 0], sizes = [16, 16, 4], strides = [1, 1, 1]} : vector<22x16x4xf32> to vector<16x16x4xf32>
    %280 = vector.extract_strided_slice %5 {offsets = [3, 5, 0], sizes = [1, 1, 4], strides = [1, 1, 1]} : vector<7x7x4xf32> to vector<1x1x4xf32>
    %281 = vector.shape_cast %280 : vector<1x1x4xf32> to vector<4xf32>
    %282 = vector.shape_cast %281 : vector<4xf32> to vector<1x1x4xf32>
    %283 = vector.broadcast %282 : vector<1x1x4xf32> to vector<16x16x4xf32>
    %284 = arith.mulf %279, %283 : vector<16x16x4xf32>
    %285 = arith.addf %278, %284 : vector<16x16x4xf32>
    %286 = vector.extract_strided_slice %257 {offsets = [4, 0, 0], sizes = [16, 16, 4], strides = [1, 1, 1]} : vector<22x16x4xf32> to vector<16x16x4xf32>
    %287 = vector.extract_strided_slice %5 {offsets = [4, 5, 0], sizes = [1, 1, 4], strides = [1, 1, 1]} : vector<7x7x4xf32> to vector<1x1x4xf32>
    %288 = vector.shape_cast %287 : vector<1x1x4xf32> to vector<4xf32>
    %289 = vector.shape_cast %288 : vector<4xf32> to vector<1x1x4xf32>
    %290 = vector.broadcast %289 : vector<1x1x4xf32> to vector<16x16x4xf32>
    %291 = arith.mulf %286, %290 : vector<16x16x4xf32>
    %292 = arith.addf %285, %291 : vector<16x16x4xf32>
    %293 = vector.extract_strided_slice %257 {offsets = [5, 0, 0], sizes = [16, 16, 4], strides = [1, 1, 1]} : vector<22x16x4xf32> to vector<16x16x4xf32>
    %294 = vector.extract_strided_slice %5 {offsets = [5, 5, 0], sizes = [1, 1, 4], strides = [1, 1, 1]} : vector<7x7x4xf32> to vector<1x1x4xf32>
    %295 = vector.shape_cast %294 : vector<1x1x4xf32> to vector<4xf32>
    %296 = vector.shape_cast %295 : vector<4xf32> to vector<1x1x4xf32>
    %297 = vector.broadcast %296 : vector<1x1x4xf32> to vector<16x16x4xf32>
    %298 = arith.mulf %293, %297 : vector<16x16x4xf32>
    %299 = arith.addf %292, %298 : vector<16x16x4xf32>
    %300 = vector.extract_strided_slice %257 {offsets = [6, 0, 0], sizes = [16, 16, 4], strides = [1, 1, 1]} : vector<22x16x4xf32> to vector<16x16x4xf32>
    %301 = vector.extract_strided_slice %5 {offsets = [6, 5, 0], sizes = [1, 1, 4], strides = [1, 1, 1]} : vector<7x7x4xf32> to vector<1x1x4xf32>
    %302 = vector.shape_cast %301 : vector<1x1x4xf32> to vector<4xf32>
    %303 = vector.shape_cast %302 : vector<4xf32> to vector<1x1x4xf32>
    %304 = vector.broadcast %303 : vector<1x1x4xf32> to vector<16x16x4xf32>
    %305 = arith.mulf %300, %304 : vector<16x16x4xf32>
    %306 = arith.addf %299, %305 : vector<16x16x4xf32>
    %c0_24 = arith.constant 0 : index
    %c11 = arith.constant 11 : index
    %c0_25 = arith.constant 0 : index
    %307 = vector.load %arg8[%c0_24, %c11, %c0_25] : memref<22x27x4xf32, #tpu.memory_space<vmem>>, vector<22x16x4xf32>
    %308 = vector.extract_strided_slice %307 {offsets = [0, 0, 0], sizes = [16, 16, 4], strides = [1, 1, 1]} : vector<22x16x4xf32> to vector<16x16x4xf32>
    %309 = vector.extract_strided_slice %5 {offsets = [0, 6, 0], sizes = [1, 1, 4], strides = [1, 1, 1]} : vector<7x7x4xf32> to vector<1x1x4xf32>
    %310 = vector.shape_cast %309 : vector<1x1x4xf32> to vector<4xf32>
    %311 = vector.shape_cast %310 : vector<4xf32> to vector<1x1x4xf32>
    %312 = vector.broadcast %311 : vector<1x1x4xf32> to vector<16x16x4xf32>
    %313 = arith.mulf %308, %312 : vector<16x16x4xf32>
    %314 = arith.addf %306, %313 : vector<16x16x4xf32>
    %315 = vector.extract_strided_slice %307 {offsets = [1, 0, 0], sizes = [16, 16, 4], strides = [1, 1, 1]} : vector<22x16x4xf32> to vector<16x16x4xf32>
    %316 = vector.extract_strided_slice %5 {offsets = [1, 6, 0], sizes = [1, 1, 4], strides = [1, 1, 1]} : vector<7x7x4xf32> to vector<1x1x4xf32>
    %317 = vector.shape_cast %316 : vector<1x1x4xf32> to vector<4xf32>
    %318 = vector.shape_cast %317 : vector<4xf32> to vector<1x1x4xf32>
    %319 = vector.broadcast %318 : vector<1x1x4xf32> to vector<16x16x4xf32>
    %320 = arith.mulf %315, %319 : vector<16x16x4xf32>
    %321 = arith.addf %314, %320 : vector<16x16x4xf32>
    %322 = vector.extract_strided_slice %307 {offsets = [2, 0, 0], sizes = [16, 16, 4], strides = [1, 1, 1]} : vector<22x16x4xf32> to vector<16x16x4xf32>
    %323 = vector.extract_strided_slice %5 {offsets = [2, 6, 0], sizes = [1, 1, 4], strides = [1, 1, 1]} : vector<7x7x4xf32> to vector<1x1x4xf32>
    %324 = vector.shape_cast %323 : vector<1x1x4xf32> to vector<4xf32>
    %325 = vector.shape_cast %324 : vector<4xf32> to vector<1x1x4xf32>
    %326 = vector.broadcast %325 : vector<1x1x4xf32> to vector<16x16x4xf32>
    %327 = arith.mulf %322, %326 : vector<16x16x4xf32>
    %328 = arith.addf %321, %327 : vector<16x16x4xf32>
    %329 = vector.extract_strided_slice %307 {offsets = [3, 0, 0], sizes = [16, 16, 4], strides = [1, 1, 1]} : vector<22x16x4xf32> to vector<16x16x4xf32>
    %330 = vector.extract_strided_slice %5 {offsets = [3, 6, 0], sizes = [1, 1, 4], strides = [1, 1, 1]} : vector<7x7x4xf32> to vector<1x1x4xf32>
    %331 = vector.shape_cast %330 : vector<1x1x4xf32> to vector<4xf32>
    %332 = vector.shape_cast %331 : vector<4xf32> to vector<1x1x4xf32>
    %333 = vector.broadcast %332 : vector<1x1x4xf32> to vector<16x16x4xf32>
    %334 = arith.mulf %329, %333 : vector<16x16x4xf32>
    %335 = arith.addf %328, %334 : vector<16x16x4xf32>
    %336 = vector.extract_strided_slice %307 {offsets = [4, 0, 0], sizes = [16, 16, 4], strides = [1, 1, 1]} : vector<22x16x4xf32> to vector<16x16x4xf32>
    %337 = vector.extract_strided_slice %5 {offsets = [4, 6, 0], sizes = [1, 1, 4], strides = [1, 1, 1]} : vector<7x7x4xf32> to vector<1x1x4xf32>
    %338 = vector.shape_cast %337 : vector<1x1x4xf32> to vector<4xf32>
    %339 = vector.shape_cast %338 : vector<4xf32> to vector<1x1x4xf32>
    %340 = vector.broadcast %339 : vector<1x1x4xf32> to vector<16x16x4xf32>
    %341 = arith.mulf %336, %340 : vector<16x16x4xf32>
    %342 = arith.addf %335, %341 : vector<16x16x4xf32>
    %343 = vector.extract_strided_slice %307 {offsets = [5, 0, 0], sizes = [16, 16, 4], strides = [1, 1, 1]} : vector<22x16x4xf32> to vector<16x16x4xf32>
    %344 = vector.extract_strided_slice %5 {offsets = [5, 6, 0], sizes = [1, 1, 4], strides = [1, 1, 1]} : vector<7x7x4xf32> to vector<1x1x4xf32>
    %345 = vector.shape_cast %344 : vector<1x1x4xf32> to vector<4xf32>
    %346 = vector.shape_cast %345 : vector<4xf32> to vector<1x1x4xf32>
    %347 = vector.broadcast %346 : vector<1x1x4xf32> to vector<16x16x4xf32>
    %348 = arith.mulf %343, %347 : vector<16x16x4xf32>
    %349 = arith.addf %342, %348 : vector<16x16x4xf32>
    %350 = vector.extract_strided_slice %307 {offsets = [6, 0, 0], sizes = [16, 16, 4], strides = [1, 1, 1]} : vector<22x16x4xf32> to vector<16x16x4xf32>
    %351 = vector.extract_strided_slice %5 {offsets = [6, 6, 0], sizes = [1, 1, 4], strides = [1, 1, 1]} : vector<7x7x4xf32> to vector<1x1x4xf32>
    %352 = vector.shape_cast %351 : vector<1x1x4xf32> to vector<4xf32>
    %353 = vector.shape_cast %352 : vector<4xf32> to vector<1x1x4xf32>
    %354 = vector.broadcast %353 : vector<1x1x4xf32> to vector<16x16x4xf32>
    %355 = arith.mulf %350, %354 : vector<16x16x4xf32>
    %356 = arith.addf %349, %355 : vector<16x16x4xf32>
    %357 = vector.shape_cast %356 : vector<16x16x4xf32> to vector<256x4xf32>
    %cst_26 = arith.constant dense<0.000000e+00> : vector<4xf32>
    %358 = vector.multi_reduction <add>, %357, %cst_26 [0] : vector<256x4xf32> to vector<4xf32>
    %359 = vector.shape_cast %358 : vector<4xf32> to vector<1x4xf32>
    %cst_27 = arith.constant 2.560000e+02 : f32
    %360 = vector.broadcast %cst_27 : f32 to vector<1x4xf32>
    %361 = arith.divf %359, %360 : vector<1x4xf32>
    %362 = vector.broadcast %361 : vector<1x4xf32> to vector<256x4xf32>
    %363 = arith.subf %357, %362 : vector<256x4xf32>
    %364 = arith.mulf %363, %363 : vector<256x4xf32>
    %cst_28 = arith.constant dense<0.000000e+00> : vector<4xf32>
    %365 = vector.multi_reduction <add>, %364, %cst_28 [0] : vector<256x4xf32> to vector<4xf32>
    %366 = vector.shape_cast %365 : vector<4xf32> to vector<1x4xf32>
    %cst_29 = arith.constant 2.550000e+02 : f32
    %367 = vector.broadcast %cst_29 : f32 to vector<1x4xf32>
    %368 = arith.divf %366, %367 : vector<1x4xf32>
    %369 = math.sqrt %368 : vector<1x4xf32>
    %cst_30 = arith.constant 9.99999974E-6 : f32
    %370 = vector.broadcast %cst_30 : f32 to vector<1x4xf32>
    %371 = arith.addf %369, %370 : vector<1x4xf32>
    %372 = tpu.reciprocal %371 {approx = true} : vector<1x4xf32> -> vector<1x4xf32>
    %c0_31 = arith.constant 0 : index
    %c0_32 = arith.constant 0 : index
    %373 = vector.load %arg3[%c0_31, %c0_32] : memref<1x4xf32, #tpu.memory_space<vmem>>, vector<1x4xf32>
    %374 = arith.mulf %373, %372 : vector<1x4xf32>
    %c0_33 = arith.constant 0 : index
    %c0_34 = arith.constant 0 : index
    %375 = vector.load %arg4[%c0_33, %c0_34] : memref<1x4xf32, #tpu.memory_space<vmem>>, vector<1x4xf32>
    %376 = arith.mulf %361, %374 : vector<1x4xf32>
    %377 = arith.subf %375, %376 : vector<1x4xf32>
    %378 = vector.shape_cast %374 : vector<1x4xf32> to vector<1x1x4xf32>
    %379 = vector.broadcast %378 : vector<1x1x4xf32> to vector<16x16x4xf32>
    %380 = arith.mulf %356, %379 : vector<16x16x4xf32>
    %381 = vector.shape_cast %377 : vector<1x4xf32> to vector<1x1x4xf32>
    %382 = vector.broadcast %381 : vector<1x1x4xf32> to vector<16x16x4xf32>
    %383 = arith.addf %380, %382 : vector<16x16x4xf32>
    %384 = vector.shape_cast %383 : vector<16x16x4xf32> to vector<256x4xf32>
    %385 = arith.truncf %384 : vector<256x4xf32> to vector<256x4xbf16>
    %c0_35 = arith.constant 0 : index
    %c0_36 = arith.constant 0 : index
    %386 = vector.load %arg5[%c0_35, %c0_36] : memref<4x16xbf16, #tpu.memory_space<vmem>>, vector<4x16xbf16>
    %cst_37 = arith.constant dense<0.000000e+00> : vector<256x16xf32>
    %387 = tpu.matmul %385, %386, %cst_37 {dimension_numbers = #tpu.dot_dimension_numbers<[1], [0], [0], [1], [0, 0, 1, 1], [], []>} : vector<256x4xbf16>, vector<4x16xbf16>, vector<256x16xf32> -> vector<256x16xf32>
    %cst_38 = arith.constant 5.000000e-01 : f32
    %388 = vector.broadcast %cst_38 : f32 to vector<256x16xf32>
    %389 = arith.mulf %388, %387 : vector<256x16xf32>
    %cst_39 = arith.constant 0.707106769 : f32
    %390 = vector.broadcast %cst_39 : f32 to vector<256x16xf32>
    %391 = arith.mulf %387, %390 : vector<256x16xf32>
    %392 = math.erf %391 : vector<256x16xf32>
    %cst_40 = arith.constant 1.000000e+00 : f32
    %393 = vector.broadcast %cst_40 : f32 to vector<256x16xf32>
    %394 = arith.addf %393, %392 : vector<256x16xf32>
    %395 = arith.mulf %389, %394 : vector<256x16xf32>
    %396 = arith.truncf %395 : vector<256x16xf32> to vector<256x16xbf16>
    %c0_41 = arith.constant 0 : index
    %c0_42 = arith.constant 0 : index
    %397 = vector.load %arg6[%c0_41, %c0_42] : memref<16x4xbf16, #tpu.memory_space<vmem>>, vector<16x4xbf16>
    %cst_43 = arith.constant dense<0.000000e+00> : vector<256x4xf32>
    %398 = tpu.matmul %396, %397, %cst_43 {dimension_numbers = #tpu.dot_dimension_numbers<[1], [0], [0], [1], [0, 0, 1, 1], [], []>} : vector<256x16xbf16>, vector<16x4xbf16>, vector<256x4xf32> -> vector<256x4xf32>
    %c0_44 = arith.constant 0 : index
    %c0_45 = arith.constant 0 : index
    %c0_46 = arith.constant 0 : index
    %c0_47 = arith.constant 0 : index
    %399 = vector.load %arg1[%c0_44, %c0_45, %c0_46, %c0_47] : memref<1x16x16x4xf32, #tpu.memory_space<vmem>>, vector<1x16x16x4xf32>
    %400 = vector.shape_cast %399 : vector<1x16x16x4xf32> to vector<16x16x4xf32>
    %401 = vector.shape_cast %400 : vector<16x16x4xf32> to vector<256x4xf32>
    %402 = arith.addf %398, %401 : vector<256x4xf32>
    %403 = vector.shape_cast %402 : vector<256x4xf32> to vector<16x16x4xf32>
    %c0_48 = arith.constant 0 : index
    %c0_49 = arith.constant 0 : index
    %c0_50 = arith.constant 0 : index
    %c0_51 = arith.constant 0 : index
    %404 = vector.load %arg7[%c0_48, %c0_49, %c0_50, %c0_51] : memref<1x16x16x4xf32, #tpu.memory_space<vmem>>, vector<1x16x16x4xf32>
    %405 = vector.shape_cast %404 : vector<1x16x16x4xf32> to vector<16x16x4xf32>
    %406 = vector.shape_cast %403 : vector<16x16x4xf32> to vector<1x16x16x4xf32>
    tpu.vector_store %arg7[%c0_48, %c0_49, %c0_50, %c0_51], %406 {strides = array<i32>} : memref<1x16x16x4xf32, #tpu.memory_space<vmem>>, vector<1x16x16x4xf32>,
    return
  }
  func.func @transform_0(%arg0: i32) -> (i32, i32, i32, i32) {
    %c0_i32 = arith.constant 0 : i32
    %c0_i32_0 = arith.constant 0 : i32
    %c0_i32_1 = arith.constant 0 : i32
    %c0_i32_2 = arith.constant 0 : i32
    return %arg0, %c0_i32, %c0_i32_0, %c0_i32_1 : i32, i32, i32, i32
  }
  func.func @transform_1(%arg0: i32) -> (i32, i32, i32) {
    %c0_i32 = arith.constant 0 : i32
    %c0_i32_0 = arith.constant 0 : i32
    %c0_i32_1 = arith.constant 0 : i32
    %c0_i32_2 = arith.constant 0 : i32
    return %c0_i32, %c0_i32_0, %c0_i32_1 : i32, i32, i32
  }
  func.func @transform_2(%arg0: i32) -> (i32, i32) {
    %c0_i32 = arith.constant 0 : i32
    %c0_i32_0 = arith.constant 0 : i32
    %c0_i32_1 = arith.constant 0 : i32
    return %c0_i32, %c0_i32_0 : i32, i32
  }
  func.func @transform_3(%arg0: i32) -> (i32, i32) {
    %c0_i32 = arith.constant 0 : i32
    %c0_i32_0 = arith.constant 0 : i32
    %c0_i32_1 = arith.constant 0 : i32
    return %c0_i32, %c0_i32_0 : i32, i32
  }
  func.func @transform_4(%arg0: i32) -> (i32, i32) {
    %c0_i32 = arith.constant 0 : i32
    %c0_i32_0 = arith.constant 0 : i32
    %c0_i32_1 = arith.constant 0 : i32
    return %c0_i32, %c0_i32_0 : i32, i32
  }
  func.func @transform_5(%arg0: i32) -> (i32, i32) {
    %c0_i32 = arith.constant 0 : i32
    %c0_i32_0 = arith.constant 0 : i32
    %c0_i32_1 = arith.constant 0 : i32
    return %c0_i32, %c0_i32_0 : i32, i32
  }
  func.func @transform_6(%arg0: i32) -> (i32, i32, i32, i32) {
    %c0_i32 = arith.constant 0 : i32
    %c0_i32_0 = arith.constant 0 : i32
    %c0_i32_1 = arith.constant 0 : i32
    %c0_i32_2 = arith.constant 0 : i32
    return %arg0, %c0_i32, %c0_i32_0, %c0_i32_1 : i32, i32, i32, i32
  }
}

</mosaic_0001>

<llo_original>
// kernel: tpu_custom_call.1
$region0: #{tpu_custom_call.1}
  #allocation0 [shape = 'u32[]', space=smem, size = 0x4, offset = 0x4, fixed_abs, tag = 'smem constant byte address 0x4 - core index']
  #allocation1 [shape = 'u32[144,128]{1,0:T(1,128)}', space=vmem, size = 0x12000, scoped, tag = 'internal scratch']
  #allocation2 [shape = 'f32[22,27,4]{2,1,0:T(8,128)}', space=vmem, size = 0x58000, scoped, tag = 'scratch operand']
  %s0 = inlined_call_operand.vmem [shape: f32[2,16,16,4], index: 0, kind: input, shape index: {}]
  %s1 = inlined_call_operand.vmem [shape: f32[7,7,4], index: 1, kind: input, shape index: {}]
  %s2 = inlined_call_operand.vmem [shape: f32[1,4], index: 2, kind: input, shape index: {}]
  %s3 = inlined_call_operand.vmem [shape: f32[1,4], index: 3, kind: input, shape index: {}]
  %s4 = inlined_call_operand.vmem [shape: bf16[4,16], index: 4, kind: input, shape index: {}]
  %s5 = inlined_call_operand.vmem [shape: bf16[16,4], index: 5, kind: input, shape index: {}]
  %s6 = inlined_call_operand.vmem [shape: f32[2,16,16,4], index: 6, kind: output, shape index: {}]
  %s7 = sld [smem:[#allocation0]]
  $region57: #{tpu_custom_call.1} parent=0
    _
  %s9 = ssub.s32 1, %s7
  %s10 = scalar_select 0, %s9, %s7
  loop: start=0, step=1, limit=4
  $region2: #{tpu_custom_call.1} parent=0 // loop_pre_header
    _
  $region3: #{tpu_custom_call.1} parent=0 // loop_header
    %s12 = sphi 0, %s16
    %p13 = scmp.ge.s32.totalorder %s12, 4
    %s22 = sphi 0, %s24
    %s25 = sphi 0, %s22
    %s26 = sphi 0, %s25
    %s42 = sphi 0, %s26
    %s46 = sphi 0, %s46
    %s48 = sphi 0, %s46
    %s49 = sphi 0, %s48
    %s63 = sphi 0, %s49
    %s67 = sphi 0, %s67
    %s69 = sphi 0, %s67
    %s70 = sphi 0, %s69
    %s84 = sphi 0, %s70
    %s88 = sphi 0, %s88
    %s90 = sphi 0, %s88
    %s91 = sphi 0, %s90
    %s105 = sphi 0, %s91
    %s109 = sphi 0, %s109
    %s111 = sphi 0, %s109
    %s112 = sphi 0, %s111
    %s126 = sphi 0, %s112
    %s130 = sphi 0, %s130
    %s132 = sphi 0, %s130
    %s133 = sphi 0, %s132
    %s147 = sphi 0, %s133
    %s153 = sphi 0, %s155
    %s156 = sphi 0, %s153
    %s157 = sphi 0, %s156
    %s173 = sphi 0, %s157
  $region4: #{tpu_custom_call.1} parent=0 // loop_header_branch
    %15 = sbr.rel (%p13) target = $region8
  $region5: #{tpu_custom_call.1} parent=0 // loop_body
    %s17 = ssub.s32 %s12, 1
    %s18 = ssub.s32 %s12, 2
    %s19 = sadd.s32 %s12, 1
    %s20 = ssub.s32 %s12, %s19
    %p21 = scmp.eq.s32.totalorder %s20, 0
    %s23 = sadd.s32 %s22, 1
    %s24 = scalar_select %p21, %s22, %s23
    %p27 = pneg %p21
    %p28 = scmp.eq.s32.totalorder %s12, 1
    %p29 = por %p27, %p28
    %p30 = scmp.ne.s32.totalorder %s22, %s25
    %p31 = scmp.eq.s32.totalorder %s12, 0
    %p32 = por %p30, %p31
    %p33 = scmp.ne.s32.totalorder %s22, %s25
    %p34 = scmp.eq.s32.totalorder %s17, 1
    %p35 = por %p33, %p34
    %p36 = scmp.ne.s32.totalorder %s25, %s26
    %p37 = scmp.eq.s32.totalorder %s17, 0
    %p38 = por %p36, %p37
    %p39 = scmp.ne.s32.totalorder %s25, %s26
    %p40 = scmp.eq.s32.totalorder %s18, 1
    %p41 = por %p39, %p40
    %p43 = scmp.ne.s32.totalorder %s26, %s42
    %p44 = scmp.eq.s32.totalorder %s18, 0
    %p45 = por %p43, %p44
    %s47 = sadd.s32 %s46, 1
    %p50 = scmp.eq.s32.totalorder %s12, 1
    %p51 = scmp.ne.s32.totalorder %s46, %s48
    %p52 = scmp.eq.s32.totalorder %s12, 0
    %p53 = por %p51, %p52
    %p54 = scmp.ne.s32.totalorder %s46, %s48
    %p55 = scmp.eq.s32.totalorder %s17, 1
    %p56 = por %p54, %p55
    %p57 = scmp.ne.s32.totalorder %s48, %s49
    %p58 = scmp.eq.s32.totalorder %s17, 0
    %p59 = por %p57, %p58
    %p60 = scmp.ne.s32.totalorder %s48, %s49
    %p61 = scmp.eq.s32.totalorder %s18, 1
    %p62 = por %p60, %p61
    %p64 = scmp.ne.s32.totalorder %s49, %s63
    %p65 = scmp.eq.s32.totalorder %s18, 0
    %p66 = por %p64, %p65
    %s68 = sadd.s32 %s67, 1
    %p71 = scmp.eq.s32.totalorder %s12, 1
    %p72 = scmp.ne.s32.totalorder %s67, %s69
    %p73 = scmp.eq.s32.totalorder %s12, 0
    %p74 = por %p72, %p73
    %p75 = scmp.ne.s32.totalorder %s67, %s69
    %p76 = scmp.eq.s32.totalorder %s17, 1
    %p77 = por %p75, %p76
    %p78 = scmp.ne.s32.totalorder %s69, %s70
    %p79 = scmp.eq.s32.totalorder %s17, 0
    %p80 = por %p78, %p79
    %p81 = scmp.ne.s32.totalorder %s69, %s70
    %p82 = scmp.eq.s32.totalorder %s18, 1
    %p83 = por %p81, %p82
    %p85 = scmp.ne.s32.totalorder %s70, %s84
    %p86 = scmp.eq.s32.totalorder %s18, 0
    %p87 = por %p85, %p86
    %s89 = sadd.s32 %s88, 1
    %p92 = scmp.eq.s32.totalorder %s12, 1
    %p93 = scmp.ne.s32.totalorder %s88, %s90
    %p94 = scmp.eq.s32.totalorder %s12, 0
    %p95 = por %p93, %p94
    %p96 = scmp.ne.s32.totalorder %s88, %s90
    %p97 = scmp.eq.s32.totalorder %s17, 1
    %p98 = por %p96, %p97
    %p99 = scmp.ne.s32.totalorder %s90, %s91
    %p100 = scmp.eq.s32.totalorder %s17, 0
    %p101 = por %p99, %p100
    %p102 = scmp.ne.s32.totalorder %s90, %s91
    %p103 = scmp.eq.s32.totalorder %s18, 1
    %p104 = por %p102, %p103
    %p106 = scmp.ne.s32.totalorder %s91, %s105
    %p107 = scmp.eq.s32.totalorder %s18, 0
    %p108 = por %p106, %p107
    %s110 = sadd.s32 %s109, 1
    %p113 = scmp.eq.s32.totalorder %s12, 1
    %p114 = scmp.ne.s32.totalorder %s109, %s111
    %p115 = scmp.eq.s32.totalorder %s12, 0
    %p116 = por %p114, %p115
    %p117 = scmp.ne.s32.totalorder %s109, %s111
    %p118 = scmp.eq.s32.totalorder %s17, 1
    %p119 = por %p117, %p118
    %p120 = scmp.ne.s32.totalorder %s111, %s112
    %p121 = scmp.eq.s32.totalorder %s17, 0
    %p122 = por %p120, %p121
    %p123 = scmp.ne.s32.totalorder %s111, %s112
    %p124 = scmp.eq.s32.totalorder %s18, 1
    %p125 = por %p123, %p124
    %p127 = scmp.ne.s32.totalorder %s112, %s126
    %p128 = scmp.eq.s32.totalorder %s18, 0
    %p129 = por %p127, %p128
    %s131 = sadd.s32 %s130, 1
    %p134 = scmp.eq.s32.totalorder %s12, 1
    %p135 = scmp.ne.s32.totalorder %s130, %s132
    %p136 = scmp.eq.s32.totalorder %s12, 0
    %p137 = por %p135, %p136
    %p138 = scmp.ne.s32.totalorder %s130, %s132
    %p139 = scmp.eq.s32.totalorder %s17, 1
    %p140 = por %p138, %p139
    %p141 = scmp.ne.s32.totalorder %s132, %s133
    %p142 = scmp.eq.s32.totalorder %s17, 0
    %p143 = por %p141, %p142
    %p144 = scmp.ne.s32.totalorder %s132, %s133
    %p145 = scmp.eq.s32.totalorder %s18, 1
    %p146 = por %p144, %p145
    %p148 = scmp.ne.s32.totalorder %s133, %s147
    %p149 = scmp.eq.s32.totalorder %s18, 0
    %p150 = por %p148, %p149
    %s151 = ssub.s32 %s12, %s19
    %p152 = scmp.eq.s32.totalorder %s151, 0
    %s154 = sadd.s32 %s153, 1
    %s155 = scalar_select %p152, %s153, %s154
    %p158 = pneg %p152
    %p159 = scmp.eq.s32.totalorder %s12, 1
    %p160 = por %p158, %p159
    %p161 = scmp.ne.s32.totalorder %s153, %s156
    %p162 = scmp.eq.s32.totalorder %s12, 0
    %p163 = por %p161, %p162
    %p164 = scmp.ne.s32.totalorder %s153, %s156
    %p165 = scmp.eq.s32.totalorder %s17, 1
    %p166 = por %p164, %p165
    %p167 = scmp.ne.s32.totalorder %s156, %s157
    %p168 = scmp.eq.s32.totalorder %s17, 0
    %p169 = por %p167, %p168
    %p170 = scmp.ne.s32.totalorder %s156, %s157
    %p171 = scmp.eq.s32.totalorder %s18, 1
    %p172 = por %p170, %p171
    %p174 = scmp.ne.s32.totalorder %s157, %s173
    %p175 = scmp.eq.s32.totalorder %s18, 0
    %p176 = por %p174, %p175
    %p177 = scmp.le.s32.totalorder 1, %s12
    %p178 = scmp.lt.s32.totalorder %s12, 3
    %p179 = pnand %p177, %p178
    %p180 = pneg %p179
    // Predicated region
    $region9: #{tpu_custom_call.1} parent=5 // pred_check
      _
    $region10: #{tpu_custom_call.1} parent=5 // pred_check_branch
      %182 = sbr.rel (%p179) target = $region12
    $region11: #{tpu_custom_call.1} parent=5 // pred_region
      %s183 = ssub.s32 %s12, 1
      // Predicated region
      $region13: #{tpu_custom_call.1} parent=11 // pred_check
        %p184 = pneg %p59
      $region14: #{tpu_custom_call.1} parent=11 // pred_check_branch
        %186 = sbr.rel (%p184) target = $region16
      $region15: #{tpu_custom_call.1} parent=11 // pred_region
        _
      $region16: #{tpu_custom_call.1} parent=11 // pred_fallthru
        _
      // Predicated region
      $region17: #{tpu_custom_call.1} parent=11 // pred_check
        %p187 = pneg %p80
      $region18: #{tpu_custom_call.1} parent=11 // pred_check_branch
        %189 = sbr.rel (%p187) target = $region20
      $region19: #{tpu_custom_call.1} parent=11 // pred_region
        _
      $region20: #{tpu_custom_call.1} parent=11 // pred_fallthru
        _
      // Predicated region
      $region21: #{tpu_custom_call.1} parent=11 // pred_check
        %p190 = pneg %p101
      $region22: #{tpu_custom_call.1} parent=11 // pred_check_branch
        %192 = sbr.rel (%p190) target = $region24
      $region23: #{tpu_custom_call.1} parent=11 // pred_region
        _
      $region24: #{tpu_custom_call.1} parent=11 // pred_fallthru
        _
      // Predicated region
      $region25: #{tpu_custom_call.1} parent=11 // pred_check
        %p193 = pneg %p122
      $region26: #{tpu_custom_call.1} parent=11 // pred_check_branch
        %195 = sbr.rel (%p193) target = $region28
      $region27: #{tpu_custom_call.1} parent=11 // pred_region
        _
      $region28: #{tpu_custom_call.1} parent=11 // pred_fallthru
        _
      // Predicated region
      $region29: #{tpu_custom_call.1} parent=11 // pred_check
        %p196 = pneg %p143
      $region30: #{tpu_custom_call.1} parent=11 // pred_check_branch
        %198 = sbr.rel (%p196) target = $region32
      $region31: #{tpu_custom_call.1} parent=11 // pred_region
        _
      $region32: #{tpu_custom_call.1} parent=11 // pred_fallthru
        _
    $region12: #{tpu_custom_call.1} parent=5 // pred_fallthru
      _
    %p199 = scmp.lt.s32.totalorder %s12, 2
    // Predicated region
    $region33: #{tpu_custom_call.1} parent=5 // pred_check
      %p200 = pneg %p199
    $region34: #{tpu_custom_call.1} parent=5 // pred_check_branch
      %202 = sbr.rel (%p200) target = $region36
    $region35: #{tpu_custom_call.1} parent=5 // pred_region
      // Predicated region
      $region37: #{tpu_custom_call.1} parent=35 // pred_check
        %p203 = pneg %p32
      $region38: #{tpu_custom_call.1} parent=35 // pred_check_branch
        %205 = sbr.rel (%p203) target = $region40
      $region39: #{tpu_custom_call.1} parent=35 // pred_region
        %p206 = scmp.lt.s32.totalorder %s12, 1
        %s207 = scalar_select %p206, %s12, 1
        %s208 = smul.addr %s207, 32
        %s209 = smul.addr %s208, 8
        %s210 = scalar_lea.vmem %s0, %s209
      $region40: #{tpu_custom_call.1} parent=35 // pred_fallthru
        _
    $region36: #{tpu_custom_call.1} parent=5 // pred_fallthru
      _
    %p211 = scmp.le.s32.totalorder 1, %s12
    %p212 = scmp.lt.s32.totalorder %s12, 3
    %p213 = pnand %p211, %p212
    %p214 = pneg %p213
    // Predicated region
    $region41: #{tpu_custom_call.1} parent=5 // pred_check
      _
    $region42: #{tpu_custom_call.1} parent=5 // pred_check_branch
      %216 = sbr.rel (%p213) target = $region44
    $region43: #{tpu_custom_call.1} parent=5 // pred_region
      %s217 = ssub.s32 %s12, 1
      %p218 = scmp.lt.s32.totalorder %s17, 1
      %s219 = scalar_select %p218, %s17, 1
      %s220 = smul.addr %s219, 32
      %s221 = smul.addr %s220, 8
      %s222 = scalar_lea.vmem %s0, %s221
      %p223 = pneg %p38
      %p224 = pneg %p35
      %p225 = pneg %p59
      %p226 = pneg %p56
      %p227 = pneg %p80
      %p228 = pneg %p77
      %p229 = pneg %p101
      %p230 = pneg %p98
      %p231 = pneg %p122
      %p232 = pneg %p119
      %p233 = pneg %p143
      %p234 = pneg %p140
      %p235 = pneg %p169
      %p236 = pneg %p166
      %p237 = scmp.lt.s32.totalorder %s17, 1
      %s238 = scalar_select %p237, %s17, 1
      %s239 = smul.addr %s238, 32
      %s240 = smul.addr %s239, 8
      %s241 = scalar_lea.vmem %s6, %s240
      %p242 = scmp.lt.s32.totalorder %s17, 1
      %s243 = scalar_select %p242, %s17, 1
      %s244 = smul.addr %s243, 32
      %s245 = smul.addr %s244, 8
      %s246 = scalar_lea.vmem %s0, %s245
      %p247 = scmp.lt.s32.totalorder %s17, 1
      %s248 = scalar_select %p247, %s17, 1
      %s249 = smul.addr %s248, 32
      %s250 = smul.addr %s249, 8
      %s251 = scalar_lea.vmem %s6, %s250
      %vm253 = vcmask 31744
      %254 = vst.msk [vmem:[#allocation2] sm:$0xff] %vm253, 0.0
      %255 = vst.msk [vmem:[#allocation2 + $0x8] sm:$0xff] %vm253, 0.0
      %256 = vst.msk [vmem:[#allocation2 + $0x10] sm:$0xff] %vm253, 0.0
      %vm257 = vcmask 26624
      %258 = vst.msk [vmem:[#allocation2 + $0x18] sm:$0x7] %vm257, 0.0
      %259 = vst.msk [vmem:[#allocation2 + $0x20] sm:$0xff] %vm253, 0.0
      %260 = vst.msk [vmem:[#allocation2 + $0x28] sm:$0xff] %vm253, 0.0
      %261 = vst.msk [vmem:[#allocation2 + $0x30] sm:$0xff] %vm253, 0.0
      %262 = vst.msk [vmem:[#allocation2 + $0x38] sm:$0x7] %vm257, 0.0
      %263 = vst.msk [vmem:[#allocation2 + $0x40] sm:$0xff] %vm253, 0.0
      %264 = vst.msk [vmem:[#allocation2 + $0x48] sm:$0xff] %vm253, 0.0
      %265 = vst.msk [vmem:[#allocation2 + $0x50] sm:$0xff] %vm253, 0.0
      %266 = vst.msk [vmem:[#allocation2 + $0x58] sm:$0x7] %vm257, 0.0
      %267 = vst.msk [vmem:[#allocation2 + $0x60] sm:$0xff] %vm253, 0.0
      %268 = vst.msk [vmem:[#allocation2 + $0x68] sm:$0xff] %vm253, 0.0
      %269 = vst.msk [vmem:[#allocation2 + $0x70] sm:$0xff] %vm253, 0.0
      %270 = vst.msk [vmem:[#allocation2 + $0x78] sm:$0x7] %vm257, 0.0
      %271 = vst.msk [vmem:[#allocation2 + $0x80] sm:$0xff] %vm253, 0.0
      %272 = vst.msk [vmem:[#allocation2 + $0x88] sm:$0xff] %vm253, 0.0
      %273 = vst.msk [vmem:[#allocation2 + $0x90] sm:$0xff] %vm253, 0.0
      %274 = vst.msk [vmem:[#allocation2 + $0x98] sm:$0x7] %vm257, 0.0
      %275 = vst.msk [vmem:[#allocation2 + $0xa0] sm:$0xff] %vm253, 0.0
      %276 = vst.msk [vmem:[#allocation2 + $0xa8] sm:$0xff] %vm253, 0.0
      %277 = vst.msk [vmem:[#allocation2 + $0xb0] sm:$0xff] %vm253, 0.0
      %278 = vst.msk [vmem:[#allocation2 + $0xb8] sm:$0x7] %vm257, 0.0
      %279 = vst.msk [vmem:[#allocation2 + $0xc0] sm:$0xff] %vm253, 0.0
      %280 = vst.msk [vmem:[#allocation2 + $0xc8] sm:$0xff] %vm253, 0.0
      %281 = vst.msk [vmem:[#allocation2 + $0xd0] sm:$0xff] %vm253, 0.0
      %282 = vst.msk [vmem:[#allocation2 + $0xd8] sm:$0x7] %vm257, 0.0
      %283 = vst.msk [vmem:[#allocation2 + $0xe0] sm:$0xff] %vm253, 0.0
      %284 = vst.msk [vmem:[#allocation2 + $0xe8] sm:$0xff] %vm253, 0.0
      %285 = vst.msk [vmem:[#allocation2 + $0xf0] sm:$0xff] %vm253, 0.0
      %286 = vst.msk [vmem:[#allocation2 + $0xf8] sm:$0x7] %vm257, 0.0
      %287 = vst.msk [vmem:[#allocation2 + $0x100] sm:$0xff] %vm253, 0.0
      %288 = vst.msk [vmem:[#allocation2 + $0x108] sm:$0xff] %vm253, 0.0
      %289 = vst.msk [vmem:[#allocation2 + $0x110] sm:$0xff] %vm253, 0.0
      %290 = vst.msk [vmem:[#allocation2 + $0x118] sm:$0x7] %vm257, 0.0
      %291 = vst.msk [vmem:[#allocation2 + $0x120] sm:$0xff] %vm253, 0.0
      %292 = vst.msk [vmem:[#allocation2 + $0x128] sm:$0xff] %vm253, 0.0
      %293 = vst.msk [vmem:[#allocation2 + $0x130] sm:$0xff] %vm253, 0.0
      %294 = vst.msk [vmem:[#allocation2 + $0x138] sm:$0x7] %vm257, 0.0
      %295 = vst.msk [vmem:[#allocation2 + $0x140] sm:$0xff] %vm253, 0.0
      %296 = vst.msk [vmem:[#allocation2 + $0x148] sm:$0xff] %vm253, 0.0
      %297 = vst.msk [vmem:[#allocation2 + $0x150] sm:$0xff] %vm253, 0.0
      %298 = vst.msk [vmem:[#allocation2 + $0x158] sm:$0x7] %vm257, 0.0
      %299 = vst.msk [vmem:[#allocation2 + $0x160] sm:$0xff] %vm253, 0.0
      %300 = vst.msk [vmem:[#allocation2 + $0x168] sm:$0xff] %vm253, 0.0
      %301 = vst.msk [vmem:[#allocation2 + $0x170] sm:$0xff] %vm253, 0.0
      %302 = vst.msk [vmem:[#allocation2 + $0x178] sm:$0x7] %vm257, 0.0
      %303 = vst.msk [vmem:[#allocation2 + $0x180] sm:$0xff] %vm253, 0.0
      %304 = vst.msk [vmem:[#allocation2 + $0x188] sm:$0xff] %vm253, 0.0
      %305 = vst.msk [vmem:[#allocation2 + $0x190] sm:$0xff] %vm253, 0.0
      %306 = vst.msk [vmem:[#allocation2 + $0x198] sm:$0x7] %vm257, 0.0
      %307 = vst.msk [vmem:[#allocation2 + $0x1a0] sm:$0xff] %vm253, 0.0
      %308 = vst.msk [vmem:[#allocation2 + $0x1a8] sm:$0xff] %vm253, 0.0
      %309 = vst.msk [vmem:[#allocation2 + $0x1b0] sm:$0xff] %vm253, 0.0
      %310 = vst.msk [vmem:[#allocation2 + $0x1b8] sm:$0x7] %vm257, 0.0
      %311 = vst.msk [vmem:[#allocation2 + $0x1c0] sm:$0xff] %vm253, 0.0
      %312 = vst.msk [vmem:[#allocation2 + $0x1c8] sm:$0xff] %vm253, 0.0
      %313 = vst.msk [vmem:[#allocation2 + $0x1d0] sm:$0xff] %vm253, 0.0
      %314 = vst.msk [vmem:[#allocation2 + $0x1d8] sm:$0x7] %vm257, 0.0
      %315 = vst.msk [vmem:[#allocation2 + $0x1e0] sm:$0xff] %vm253, 0.0
      %316 = vst.msk [vmem:[#allocation2 + $0x1e8] sm:$0xff] %vm253, 0.0
      %317 = vst.msk [vmem:[#allocation2 + $0x1f0] sm:$0xff] %vm253, 0.0
      %318 = vst.msk [vmem:[#allocation2 + $0x1f8] sm:$0x7] %vm257, 0.0
      %319 = vst.msk [vmem:[#allocation2 + $0x200] sm:$0xff] %vm253, 0.0
      %320 = vst.msk [vmem:[#allocation2 + $0x208] sm:$0xff] %vm253, 0.0
      %321 = vst.msk [vmem:[#allocation2 + $0x210] sm:$0xff] %vm253, 0.0
      %322 = vst.msk [vmem:[#allocation2 + $0x218] sm:$0x7] %vm257, 0.0
      %323 = vst.msk [vmem:[#allocation2 + $0x220] sm:$0xff] %vm253, 0.0
      %324 = vst.msk [vmem:[#allocation2 + $0x228] sm:$0xff] %vm253, 0.0
      %325 = vst.msk [vmem:[#allocation2 + $0x230] sm:$0xff] %vm253, 0.0
      %326 = vst.msk [vmem:[#allocation2 + $0x238] sm:$0x7] %vm257, 0.0
      %327 = vst.msk [vmem:[#allocation2 + $0x240] sm:$0xff] %vm253, 0.0
      %328 = vst.msk [vmem:[#allocation2 + $0x248] sm:$0xff] %vm253, 0.0
      %329 = vst.msk [vmem:[#allocation2 + $0x250] sm:$0xff] %vm253, 0.0
      %330 = vst.msk [vmem:[#allocation2 + $0x258] sm:$0x7] %vm257, 0.0
      %331 = vst.msk [vmem:[#allocation2 + $0x260] sm:$0xff] %vm253, 0.0
      %332 = vst.msk [vmem:[#allocation2 + $0x268] sm:$0xff] %vm253, 0.0
      %333 = vst.msk [vmem:[#allocation2 + $0x270] sm:$0xff] %vm253, 0.0
      %334 = vst.msk [vmem:[#allocation2 + $0x278] sm:$0x7] %vm257, 0.0
      %335 = vst.msk [vmem:[#allocation2 + $0x280] sm:$0xff] %vm253, 0.0
      %336 = vst.msk [vmem:[#allocation2 + $0x288] sm:$0xff] %vm253, 0.0
      %337 = vst.msk [vmem:[#allocation2 + $0x290] sm:$0xff] %vm253, 0.0
      %338 = vst.msk [vmem:[#allocation2 + $0x298] sm:$0x7] %vm257, 0.0
      %339 = vst.msk [vmem:[#allocation2 + $0x2a0] sm:$0xff] %vm253, 0.0
      %340 = vst.msk [vmem:[#allocation2 + $0x2a8] sm:$0xff] %vm253, 0.0
      %341 = vst.msk [vmem:[#allocation2 + $0x2b0] sm:$0xff] %vm253, 0.0
      %342 = vst.msk [vmem:[#allocation2 + $0x2b8] sm:$0x7] %vm257, 0.0
      %v343 = vld [vmem:[%s246] sm:$0xff]
      %v344 = vld [vmem:[%s246 + $0x8] sm:$0xff]
      %v345 = vld [vmem:[%s246 + $0x10] sm:$0xff]
      %v346 = vld [vmem:[%s246 + $0x18] sm:$0xff]
      %v347 = vld [vmem:[%s246 + $0x20] sm:$0xff]
      %v348 = vld [vmem:[%s246 + $0x28] sm:$0xff]
      %v349 = vld [vmem:[%s246 + $0x30] sm:$0xff]
      %v350 = vld [vmem:[%s246 + $0x38] sm:$0xff]
      %v351 = vld [vmem:[%s246 + $0x40] sm:$0xff]
      %v352 = vld [vmem:[%s246 + $0x48] sm:$0xff]
      %v353 = vld [vmem:[%s246 + $0x50] sm:$0xff]
      %v354 = vld [vmem:[%s246 + $0x58] sm:$0xff]
      %v355 = vld [vmem:[%s246 + $0x60] sm:$0xff]
      %v356 = vld [vmem:[%s246 + $0x68] sm:$0xff]
      %v357 = vld [vmem:[%s246 + $0x70] sm:$0xff]
      %v358 = vld [vmem:[%s246 + $0x78] sm:$0xff]
      %v359 = vld [vmem:[%s246 + $0x80] sm:$0xff]
      %v360 = vld [vmem:[%s246 + $0x88] sm:$0xff]
      %v361 = vld [vmem:[%s246 + $0x90] sm:$0xff]
      %v362 = vld [vmem:[%s246 + $0x98] sm:$0xff]
      %v363 = vld [vmem:[%s246 + $0xa0] sm:$0xff]
      %v364 = vld [vmem:[%s246 + $0xa8] sm:$0xff]
      %v365 = vld [vmem:[%s246 + $0xb0] sm:$0xff]
      %v366 = vld [vmem:[%s246 + $0xb8] sm:$0xff]
      %v367 = vld [vmem:[%s246 + $0xc0] sm:$0xff]
      %v368 = vld [vmem:[%s246 + $0xc8] sm:$0xff]
      %v369 = vld [vmem:[%s246 + $0xd0] sm:$0xff]
      %v370 = vld [vmem:[%s246 + $0xd8] sm:$0xff]
      %v371 = vld [vmem:[%s246 + $0xe0] sm:$0xff]
      %v372 = vld [vmem:[%s246 + $0xe8] sm:$0xff]
      %v373 = vld [vmem:[%s246 + $0xf0] sm:$0xff]
      %v374 = vld [vmem:[%s246 + $0xf8] sm:$0xff]
      %s375 = scalar_lea.vmem [#allocation2], 96
      %376 = vst.msk [vmem:[%s375 + $0x8] sm:$0xff] %vm253, %v343
      %377 = vst.msk [vmem:[%s375 + $0x10] sm:$0xff] %vm253, %v344
      %378 = vst.msk [vmem:[%s375 + $0x28] sm:$0xff] %vm253, %v345
      %379 = vst.msk [vmem:[%s375 + $0x30] sm:$0xff] %vm253, %v346
      %380 = vst.msk [vmem:[%s375 + $0x48] sm:$0xff] %vm253, %v347
      %381 = vst.msk [vmem:[%s375 + $0x50] sm:$0xff] %vm253, %v348
      %382 = vst.msk [vmem:[%s375 + $0x68] sm:$0xff] %vm253, %v349
      %383 = vst.msk [vmem:[%s375 + $0x70] sm:$0xff] %vm253, %v350
      %384 = vst.msk [vmem:[%s375 + $0x88] sm:$0xff] %vm253, %v351
      %385 = vst.msk [vmem:[%s375 + $0x90] sm:$0xff] %vm253, %v352
      %386 = vst.msk [vmem:[%s375 + $0xa8] sm:$0xff] %vm253, %v353
      %387 = vst.msk [vmem:[%s375 + $0xb0] sm:$0xff] %vm253, %v354
      %388 = vst.msk [vmem:[%s375 + $0xc8] sm:$0xff] %vm253, %v355
      %389 = vst.msk [vmem:[%s375 + $0xd0] sm:$0xff] %vm253, %v356
      %390 = vst.msk [vmem:[%s375 + $0xe8] sm:$0xff] %vm253, %v357
      %391 = vst.msk [vmem:[%s375 + $0xf0] sm:$0xff] %vm253, %v358
      %392 = vst.msk [vmem:[%s375 + $0x108] sm:$0xff] %vm253, %v359
      %393 = vst.msk [vmem:[%s375 + $0x110] sm:$0xff] %vm253, %v360
      %394 = vst.msk [vmem:[%s375 + $0x128] sm:$0xff] %vm253, %v361
      %395 = vst.msk [vmem:[%s375 + $0x130] sm:$0xff] %vm253, %v362
      %396 = vst.msk [vmem:[%s375 + $0x148] sm:$0xff] %vm253, %v363
      %397 = vst.msk [vmem:[%s375 + $0x150] sm:$0xff] %vm253, %v364
      %398 = vst.msk [vmem:[%s375 + $0x168] sm:$0xff] %vm253, %v365
      %399 = vst.msk [vmem:[%s375 + $0x170] sm:$0xff] %vm253, %v366
      %400 = vst.msk [vmem:[%s375 + $0x188] sm:$0xff] %vm253, %v367
      %401 = vst.msk [vmem:[%s375 + $0x190] sm:$0xff] %vm253, %v368
      %402 = vst.msk [vmem:[%s375 + $0x1a8] sm:$0xff] %vm253, %v369
      %403 = vst.msk [vmem:[%s375 + $0x1b0] sm:$0xff] %vm253, %v370
      %404 = vst.msk [vmem:[%s375 + $0x1c8] sm:$0xff] %vm253, %v371
      %405 = vst.msk [vmem:[%s375 + $0x1d0] sm:$0xff] %vm253, %v372
      %406 = vst.msk [vmem:[%s375 + $0x1e8] sm:$0xff] %vm253, %v373
      %407 = vst.msk [vmem:[%s375 + $0x1f0] sm:$0xff] %vm253, %v374
      %v408 = vld [vmem:[%s1] sm:$0x7f]
      %v409 = vld [vmem:[%s1 + $0x8] sm:$0x7f]
      %v410 = vld [vmem:[%s1 + $0x10] sm:$0x7f]
      %v411 = vld [vmem:[%s1 + $0x18] sm:$0x7f]
      %v412 = vld [vmem:[%s1 + $0x20] sm:$0x7f]
      %v413 = vld [vmem:[%s1 + $0x28] sm:$0x7f]
      %v414 = vld [vmem:[%s1 + $0x30] sm:$0x7f]
      %v415 = vld [vmem:[#allocation2 + $0x5] sm:$0xff]
      %v416 = vld [vmem:[#allocation2 + $0xd] sm:$0xff]
      %v417 = vld [vmem:[#allocation2 + $0x25] sm:$0xff]
      %v418 = vld [vmem:[#allocation2 + $0x2d] sm:$0xff]
      %v419 = vld [vmem:[#allocation2 + $0x45] sm:$0xff]
      %v420 = vld [vmem:[#allocation2 + $0x4d] sm:$0xff]
      %v421 = vld [vmem:[#allocation2 + $0x65] sm:$0xff]
      %v422 = vld [vmem:[#allocation2 + $0x6d] sm:$0xff]
      %v423 = vld [vmem:[#allocation2 + $0x85] sm:$0xff]
      %v424 = vld [vmem:[#allocation2 + $0x8d] sm:$0xff]
      %v425 = vld [vmem:[#allocation2 + $0xa5] sm:$0xff]
      %v426 = vld [vmem:[#allocation2 + $0xad] sm:$0xff]
      %v427 = vld [vmem:[#allocation2 + $0xc5] sm:$0xff]
      %v428 = vld [vmem:[#allocation2 + $0xcd] sm:$0xff]
      %v429 = vld [vmem:[#allocation2 + $0xe5] sm:$0xff]
      %v430 = vld [vmem:[#allocation2 + $0xed] sm:$0xff]
      %v431 = vld [vmem:[#allocation2 + $0x105] sm:$0xff]
      %v432 = vld [vmem:[#allocation2 + $0x10d] sm:$0xff]
      %v433 = vld [vmem:[#allocation2 + $0x125] sm:$0xff]
      %v434 = vld [vmem:[#allocation2 + $0x12d] sm:$0xff]
      %v435 = vld [vmem:[#allocation2 + $0x145] sm:$0xff]
      %v436 = vld [vmem:[#allocation2 + $0x14d] sm:$0xff]
      %v437 = vld [vmem:[#allocation2 + $0x165] sm:$0xff]
      %v438 = vld [vmem:[#allocation2 + $0x16d] sm:$0xff]
      %v439 = vld [vmem:[#allocation2 + $0x185] sm:$0xff]
      %v440 = vld [vmem:[#allocation2 + $0x18d] sm:$0xff]
      %v441 = vld [vmem:[#allocation2 + $0x1a5] sm:$0xff]
      %v442 = vld [vmem:[#allocation2 + $0x1ad] sm:$0xff]
      %v443 = vld [vmem:[#allocation2 + $0x1c5] sm:$0xff]
      %v444 = vld [vmem:[#allocation2 + $0x1cd] sm:$0xff]
      %v445 = vld [vmem:[#allocation2 + $0x1e5] sm:$0xff]
      %v446 = vld [vmem:[#allocation2 + $0x1ed] sm:$0xff]
      %v447 = vld [vmem:[#allocation2 + $0x205] sm:$0xff]
      %v448 = vld [vmem:[#allocation2 + $0x20d] sm:$0xff]
      %v449 = vld [vmem:[#allocation2 + $0x225] sm:$0xff]
      %v450 = vld [vmem:[#allocation2 + $0x22d] sm:$0xff]
      %v451 = vld [vmem:[#allocation2 + $0x245] sm:$0xff]
      %v452 = vld [vmem:[#allocation2 + $0x24d] sm:$0xff]
      %v453 = vld [vmem:[#allocation2 + $0x265] sm:$0xff]
      %v454 = vld [vmem:[#allocation2 + $0x26d] sm:$0xff]
      %v455 = vld [vmem:[#allocation2 + $0x285] sm:$0xff]
      %v456 = vld [vmem:[#allocation2 + $0x28d] sm:$0xff]
      %v457 = vld [vmem:[#allocation2 + $0x2a5] sm:$0xff]
      %v458 = vld [vmem:[#allocation2 + $0x2ad] sm:$0xff]
      %v459 = vlaneseq
      %v460 = vshrl.u32 %v459, 7
      %v461 = vsub.s32 0, %v460
      %v462 = vrot.slane %v408, %v461
      %v463 = vmul.f32 %v415, %v462
      %v464 = vmul.f32 %v416, %v462
      %v465 = vmul.f32 %v417, %v462
      %v466 = vmul.f32 %v418, %v462
      %v467 = vmul.f32 %v419, %v462
      %v468 = vmul.f32 %v420, %v462
      %v469 = vmul.f32 %v421, %v462
      %v470 = vmul.f32 %v422, %v462
      %v471 = vmul.f32 %v423, %v462
      %v472 = vmul.f32 %v424, %v462
      %v473 = vmul.f32 %v425, %v462
      %v474 = vmul.f32 %v426, %v462
      %v475 = vmul.f32 %v427, %v462
      %v476 = vmul.f32 %v428, %v462
      %v477 = vmul.f32 %v429, %v462
      %v478 = vmul.f32 %v430, %v462
      %v479 = vmul.f32 %v431, %v462
      %v480 = vmul.f32 %v432, %v462
      %v481 = vmul.f32 %v433, %v462
      %v482 = vmul.f32 %v434, %v462
      %v483 = vmul.f32 %v435, %v462
      %v484 = vmul.f32 %v436, %v462
      %v485 = vmul.f32 %v437, %v462
      %v486 = vmul.f32 %v438, %v462
      %v487 = vmul.f32 %v439, %v462
      %v488 = vmul.f32 %v440, %v462
      %v489 = vmul.f32 %v441, %v462
      %v490 = vmul.f32 %v442, %v462
      %v491 = vmul.f32 %v443, %v462
      %v492 = vmul.f32 %v444, %v462
      %v493 = vmul.f32 %v445, %v462
      %v494 = vmul.f32 %v446, %v462
      %v495 = vadd.f32 %v463, 0.0
      %v496 = vadd.f32 %v464, 0.0
      %v497 = vadd.f32 %v465, 0.0
      %v498 = vadd.f32 %v466, 0.0
      %v499 = vadd.f32 %v467, 0.0
      %v500 = vadd.f32 %v468, 0.0
      %v501 = vadd.f32 %v469, 0.0
      %v502 = vadd.f32 %v470, 0.0
      %v503 = vadd.f32 %v471, 0.0
      %v504 = vadd.f32 %v472, 0.0
      %v505 = vadd.f32 %v473, 0.0
      %v506 = vadd.f32 %v474, 0.0
      %v507 = vadd.f32 %v475, 0.0
      %v508 = vadd.f32 %v476, 0.0
      %v509 = vadd.f32 %v477, 0.0
      %v510 = vadd.f32 %v478, 0.0
      %v511 = vadd.f32 %v479, 0.0
      %v512 = vadd.f32 %v480, 0.0
      %v513 = vadd.f32 %v481, 0.0
      %v514 = vadd.f32 %v482, 0.0
      %v515 = vadd.f32 %v483, 0.0
      %v516 = vadd.f32 %v484, 0.0
      %v517 = vadd.f32 %v485, 0.0
      %v518 = vadd.f32 %v486, 0.0
      %v519 = vadd.f32 %v487, 0.0
      %v520 = vadd.f32 %v488, 0.0
      %v521 = vadd.f32 %v489, 0.0
      %v522 = vadd.f32 %v490, 0.0
      %v523 = vadd.f32 %v491, 0.0
      %v524 = vadd.f32 %v492, 0.0
      %v525 = vadd.f32 %v493, 0.0
      %v526 = vadd.f32 %v494, 0.0
      %v527 = vlaneseq
      %v528 = vshrl.u32 %v527, 7
      %v529 = vsub.s32 0, %v528
      %v530 = vrot.slane %v409, %v529
      %v531 = vmul.f32 %v417, %v530
      %v532 = vmul.f32 %v418, %v530
      %v533 = vmul.f32 %v419, %v530
      %v534 = vmul.f32 %v420, %v530
      %v535 = vmul.f32 %v421, %v530
      %v536 = vmul.f32 %v422, %v530
      %v537 = vmul.f32 %v423, %v530
      %v538 = vmul.f32 %v424, %v530
      %v539 = vmul.f32 %v425, %v530
      %v540 = vmul.f32 %v426, %v530
      %v541 = vmul.f32 %v427, %v530
      %v542 = vmul.f32 %v428, %v530
      %v543 = vmul.f32 %v429, %v530
      %v544 = vmul.f32 %v430, %v530
      %v545 = vmul.f32 %v431, %v530
      %v546 = vmul.f32 %v432, %v530
      %v547 = vmul.f32 %v433, %v530
      %v548 = vmul.f32 %v434, %v530
      %v549 = vmul.f32 %v435, %v530
      %v550 = vmul.f32 %v436, %v530
      %v551 = vmul.f32 %v437, %v530
      %v552 = vmul.f32 %v438, %v530
      %v553 = vmul.f32 %v439, %v530
      %v554 = vmul.f32 %v440, %v530
      %v555 = vmul.f32 %v441, %v530
      %v556 = vmul.f32 %v442, %v530
      %v557 = vmul.f32 %v443, %v530
      %v558 = vmul.f32 %v444, %v530
      %v559 = vmul.f32 %v445, %v530
      %v560 = vmul.f32 %v446, %v530
      %v561 = vmul.f32 %v447, %v530
      %v562 = vmul.f32 %v448, %v530
      %v563 = vadd.f32 %v495, %v531
      %v564 = vadd.f32 %v496, %v532
      %v565 = vadd.f32 %v497, %v533
      %v566 = vadd.f32 %v498, %v534
      %v567 = vadd.f32 %v499, %v535
      %v568 = vadd.f32 %v500, %v536
      %v569 = vadd.f32 %v501, %v537
      %v570 = vadd.f32 %v502, %v538
      %v571 = vadd.f32 %v503, %v539
      %v572 = vadd.f32 %v504, %v540
      %v573 = vadd.f32 %v505, %v541
      %v574 = vadd.f32 %v506, %v542
      %v575 = vadd.f32 %v507, %v543
      %v576 = vadd.f32 %v508, %v544
      %v577 = vadd.f32 %v509, %v545
      %v578 = vadd.f32 %v510, %v546
      %v579 = vadd.f32 %v511, %v547
      %v580 = vadd.f32 %v512, %v548
      %v581 = vadd.f32 %v513, %v549
      %v582 = vadd.f32 %v514, %v550
      %v583 = vadd.f32 %v515, %v551
      %v584 = vadd.f32 %v516, %v552
      %v585 = vadd.f32 %v517, %v553
      %v586 = vadd.f32 %v518, %v554
      %v587 = vadd.f32 %v519, %v555
      %v588 = vadd.f32 %v520, %v556
      %v589 = vadd.f32 %v521, %v557
      %v590 = vadd.f32 %v522, %v558
      %v591 = vadd.f32 %v523, %v559
      %v592 = vadd.f32 %v524, %v560
      %v593 = vadd.f32 %v525, %v561
      %v594 = vadd.f32 %v526, %v562
      %v595 = vlaneseq
      %v596 = vshrl.u32 %v595, 7
      %v597 = vsub.s32 0, %v596
      %v598 = vrot.slane %v410, %v597
      %v599 = vmul.f32 %v419, %v598
      %v600 = vmul.f32 %v420, %v598
      %v601 = vmul.f32 %v421, %v598
      %v602 = vmul.f32 %v422, %v598
      %v603 = vmul.f32 %v423, %v598
      %v604 = vmul.f32 %v424, %v598
      %v605 = vmul.f32 %v425, %v598
      %v606 = vmul.f32 %v426, %v598
      %v607 = vmul.f32 %v427, %v598
      %v608 = vmul.f32 %v428, %v598
      %v609 = vmul.f32 %v429, %v598
      %v610 = vmul.f32 %v430, %v598
      %v611 = vmul.f32 %v431, %v598
      %v612 = vmul.f32 %v432, %v598
      %v613 = vmul.f32 %v433, %v598
      %v614 = vmul.f32 %v434, %v598
      %v615 = vmul.f32 %v435, %v598
      %v616 = vmul.f32 %v436, %v598
      %v617 = vmul.f32 %v437, %v598
      %v618 = vmul.f32 %v438, %v598
      %v619 = vmul.f32 %v439, %v598
      %v620 = vmul.f32 %v440, %v598
      %v621 = vmul.f32 %v441, %v598
      %v622 = vmul.f32 %v442, %v598
      %v623 = vmul.f32 %v443, %v598
      %v624 = vmul.f32 %v444, %v598
      %v625 = vmul.f32 %v445, %v598
      %v626 = vmul.f32 %v446, %v598
      %v627 = vmul.f32 %v447, %v598
      %v628 = vmul.f32 %v448, %v598
      %v629 = vmul.f32 %v449, %v598
      %v630 = vmul.f32 %v450, %v598
      %v631 = vadd.f32 %v563, %v599
      %v632 = vadd.f32 %v564, %v600
      %v633 = vadd.f32 %v565, %v601
      %v634 = vadd.f32 %v566, %v602
      %v635 = vadd.f32 %v567, %v603
      %v636 = vadd.f32 %v568, %v604
      %v637 = vadd.f32 %v569, %v605
      %v638 = vadd.f32 %v570, %v606
      %v639 = vadd.f32 %v571, %v607
      %v640 = vadd.f32 %v572, %v608
      %v641 = vadd.f32 %v573, %v609
      %v642 = vadd.f32 %v574, %v610
      %v643 = vadd.f32 %v575, %v611
      %v644 = vadd.f32 %v576, %v612
      %v645 = vadd.f32 %v577, %v613
      %v646 = vadd.f32 %v578, %v614
      %v647 = vadd.f32 %v579, %v615
      %v648 = vadd.f32 %v580, %v616
      %v649 = vadd.f32 %v581, %v617
      %v650 = vadd.f32 %v582, %v618
      %v651 = vadd.f32 %v583, %v619
      %v652 = vadd.f32 %v584, %v620
      %v653 = vadd.f32 %v585, %v621
      %v654 = vadd.f32 %v586, %v622
      %v655 = vadd.f32 %v587, %v623
      %v656 = vadd.f32 %v588, %v624
      %v657 = vadd.f32 %v589, %v625
      %v658 = vadd.f32 %v590, %v626
      %v659 = vadd.f32 %v591, %v627
      %v660 = vadd.f32 %v592, %v628
      %v661 = vadd.f32 %v593, %v629
      %v662 = vadd.f32 %v594, %v630
      %v663 = vlaneseq
      %v664 = vshrl.u32 %v663, 7
      %v665 = vsub.s32 0, %v664
      %v666 = vrot.slane %v411, %v665
      %v667 = vmul.f32 %v421, %v666
      %v668 = vmul.f32 %v422, %v666
      %v669 = vmul.f32 %v423, %v666
      %v670 = vmul.f32 %v424, %v666
      %v671 = vmul.f32 %v425, %v666
      %v672 = vmul.f32 %v426, %v666
      %v673 = vmul.f32 %v427, %v666
      %v674 = vmul.f32 %v428, %v666
      %v675 = vmul.f32 %v429, %v666
      %v676 = vmul.f32 %v430, %v666
      %v677 = vmul.f32 %v431, %v666
      %v678 = vmul.f32 %v432, %v666
      %v679 = vmul.f32 %v433, %v666
      %v680 = vmul.f32 %v434, %v666
      %v681 = vmul.f32 %v435, %v666
      %v682 = vmul.f32 %v436, %v666
      %v683 = vmul.f32 %v437, %v666
      %v684 = vmul.f32 %v438, %v666
      %v685 = vmul.f32 %v439, %v666
      %v686 = vmul.f32 %v440, %v666
      %v687 = vmul.f32 %v441, %v666
      %v688 = vmul.f32 %v442, %v666
      %v689 = vmul.f32 %v443, %v666
      %v690 = vmul.f32 %v444, %v666
      %v691 = vmul.f32 %v445, %v666
      %v692 = vmul.f32 %v446, %v666
      %v693 = vmul.f32 %v447, %v666
      %v694 = vmul.f32 %v448, %v666
      %v695 = vmul.f32 %v449, %v666
      %v696 = vmul.f32 %v450, %v666
      %v697 = vmul.f32 %v451, %v666
      %v698 = vmul.f32 %v452, %v666
      %v699 = vadd.f32 %v631, %v667
      %v700 = vadd.f32 %v632, %v668
      %v701 = vadd.f32 %v633, %v669
      %v702 = vadd.f32 %v634, %v670
      %v703 = vadd.f32 %v635, %v671
      %v704 = vadd.f32 %v636, %v672
      %v705 = vadd.f32 %v637, %v673
      %v706 = vadd.f32 %v638, %v674
      %v707 = vadd.f32 %v639, %v675
      %v708 = vadd.f32 %v640, %v676
      %v709 = vadd.f32 %v641, %v677
      %v710 = vadd.f32 %v642, %v678
      %v711 = vadd.f32 %v643, %v679
      %v712 = vadd.f32 %v644, %v680
      %v713 = vadd.f32 %v645, %v681
      %v714 = vadd.f32 %v646, %v682
      %v715 = vadd.f32 %v647, %v683
      %v716 = vadd.f32 %v648, %v684
      %v717 = vadd.f32 %v649, %v685
      %v718 = vadd.f32 %v650, %v686
      %v719 = vadd.f32 %v651, %v687
      %v720 = vadd.f32 %v652, %v688
      %v721 = vadd.f32 %v653, %v689
      %v722 = vadd.f32 %v654, %v690
      %v723 = vadd.f32 %v655, %v691
      %v724 = vadd.f32 %v656, %v692
      %v725 = vadd.f32 %v657, %v693
      %v726 = vadd.f32 %v658, %v694
      %v727 = vadd.f32 %v659, %v695
      %v728 = vadd.f32 %v660, %v696
      %v729 = vadd.f32 %v661, %v697
      %v730 = vadd.f32 %v662, %v698
      %v731 = vlaneseq
      %v732 = vshrl.u32 %v731, 7
      %v733 = vsub.s32 0, %v732
      %v734 = vrot.slane %v412, %v733
      %v735 = vmul.f32 %v423, %v734
      %v736 = vmul.f32 %v424, %v734
      %v737 = vmul.f32 %v425, %v734
      %v738 = vmul.f32 %v426, %v734
      %v739 = vmul.f32 %v427, %v734
      %v740 = vmul.f32 %v428, %v734
      %v741 = vmul.f32 %v429, %v734
      %v742 = vmul.f32 %v430, %v734
      %v743 = vmul.f32 %v431, %v734
      %v744 = vmul.f32 %v432, %v734
      %v745 = vmul.f32 %v433, %v734
      %v746 = vmul.f32 %v434, %v734
      %v747 = vmul.f32 %v435, %v734
      %v748 = vmul.f32 %v436, %v734
      %v749 = vmul.f32 %v437, %v734
      %v750 = vmul.f32 %v438, %v734
      %v751 = vmul.f32 %v439, %v734
      %v752 = vmul.f32 %v440, %v734
      %v753 = vmul.f32 %v441, %v734
      %v754 = vmul.f32 %v442, %v734
      %v755 = vmul.f32 %v443, %v734
      %v756 = vmul.f32 %v444, %v734
      %v757 = vmul.f32 %v445, %v734
      %v758 = vmul.f32 %v446, %v734
      %v759 = vmul.f32 %v447, %v734
      %v760 = vmul.f32 %v448, %v734
      %v761 = vmul.f32 %v449, %v734
      %v762 = vmul.f32 %v450, %v734
      %v763 = vmul.f32 %v451, %v734
      %v764 = vmul.f32 %v452, %v734
      %v765 = vmul.f32 %v453, %v734
      %v766 = vmul.f32 %v454, %v734
      %v767 = vadd.f32 %v699, %v735
      %v768 = vadd.f32 %v700, %v736
      %v769 = vadd.f32 %v701, %v737
      %v770 = vadd.f32 %v702, %v738
      %v771 = vadd.f32 %v703, %v739
      %v772 = vadd.f32 %v704, %v740
      %v773 = vadd.f32 %v705, %v741
      %v774 = vadd.f32 %v706, %v742
      %v775 = vadd.f32 %v707, %v743
      %v776 = vadd.f32 %v708, %v744
      %v777 = vadd.f32 %v709, %v745
      %v778 = vadd.f32 %v710, %v746
      %v779 = vadd.f32 %v711, %v747
      %v780 = vadd.f32 %v712, %v748
      %v781 = vadd.f32 %v713, %v749
      %v782 = vadd.f32 %v714, %v750
      %v783 = vadd.f32 %v715, %v751
      %v784 = vadd.f32 %v716, %v752
      %v785 = vadd.f32 %v717, %v753
      %v786 = vadd.f32 %v718, %v754
      %v787 = vadd.f32 %v719, %v755
      %v788 = vadd.f32 %v720, %v756
      %v789 = vadd.f32 %v721, %v757
      %v790 = vadd.f32 %v722, %v758
      %v791 = vadd.f32 %v723, %v759
      %v792 = vadd.f32 %v724, %v760
      %v793 = vadd.f32 %v725, %v761
      %v794 = vadd.f32 %v726, %v762
      %v795 = vadd.f32 %v727, %v763
      %v796 = vadd.f32 %v728, %v764
      %v797 = vadd.f32 %v729, %v765
      %v798 = vadd.f32 %v730, %v766
      %v799 = vlaneseq
      %v800 = vshrl.u32 %v799, 7
      %v801 = vsub.s32 0, %v800
      %v802 = vrot.slane %v413, %v801
      %v803 = vmul.f32 %v425, %v802
      %v804 = vmul.f32 %v426, %v802
      %v805 = vmul.f32 %v427, %v802
      %v806 = vmul.f32 %v428, %v802
      %v807 = vmul.f32 %v429, %v802
      %v808 = vmul.f32 %v430, %v802
      %v809 = vmul.f32 %v431, %v802
      %v810 = vmul.f32 %v432, %v802
      %v811 = vmul.f32 %v433, %v802
      %v812 = vmul.f32 %v434, %v802
      %v813 = vmul.f32 %v435, %v802
      %v814 = vmul.f32 %v436, %v802
      %v815 = vmul.f32 %v437, %v802
      %v816 = vmul.f32 %v438, %v802
      %v817 = vmul.f32 %v439, %v802
      %v818 = vmul.f32 %v440, %v802
      %v819 = vmul.f32 %v441, %v802
      %v820 = vmul.f32 %v442, %v802
      %v821 = vmul.f32 %v443, %v802
      %v822 = vmul.f32 %v444, %v802
      %v823 = vmul.f32 %v445, %v802
      %v824 = vmul.f32 %v446, %v802
      %v825 = vmul.f32 %v447, %v802
      %v826 = vmul.f32 %v448, %v802
      %v827 = vmul.f32 %v449, %v802
      %v828 = vmul.f32 %v450, %v802
      %v829 = vmul.f32 %v451, %v802
      %v830 = vmul.f32 %v452, %v802
      %v831 = vmul.f32 %v453, %v802
      %v832 = vmul.f32 %v454, %v802
      %v833 = vmul.f32 %v455, %v802
      %v834 = vmul.f32 %v456, %v802
      %v835 = vadd.f32 %v767, %v803
      %v836 = vadd.f32 %v768, %v804
      %v837 = vadd.f32 %v769, %v805
      %v838 = vadd.f32 %v770, %v806
      %v839 = vadd.f32 %v771, %v807
      %v840 = vadd.f32 %v772, %v808
      %v841 = vadd.f32 %v773, %v809
      %v842 = vadd.f32 %v774, %v810
      %v843 = vadd.f32 %v775, %v811
      %v844 = vadd.f32 %v776, %v812
      %v845 = vadd.f32 %v777, %v813
      %v846 = vadd.f32 %v778, %v814
      %v847 = vadd.f32 %v779, %v815
      %v848 = vadd.f32 %v780, %v816
      %v849 = vadd.f32 %v781, %v817
      %v850 = vadd.f32 %v782, %v818
      %v851 = vadd.f32 %v783, %v819
      %v852 = vadd.f32 %v784, %v820
      %v853 = vadd.f32 %v785, %v821
      %v854 = vadd.f32 %v786, %v822
      %v855 = vadd.f32 %v787, %v823
      %v856 = vadd.f32 %v788, %v824
      %v857 = vadd.f32 %v789, %v825
      %v858 = vadd.f32 %v790, %v826
      %v859 = vadd.f32 %v791, %v827
      %v860 = vadd.f32 %v792, %v828
      %v861 = vadd.f32 %v793, %v829
      %v862 = vadd.f32 %v794, %v830
      %v863 = vadd.f32 %v795, %v831
      %v864 = vadd.f32 %v796, %v832
      %v865 = vadd.f32 %v797, %v833
      %v866 = vadd.f32 %v798, %v834
      %v867 = vlaneseq
      %v868 = vshrl.u32 %v867, 7
      %v869 = vsub.s32 0, %v868
      %v870 = vrot.slane %v414, %v869
      %v871 = vmul.f32 %v427, %v870
      %v872 = vmul.f32 %v428, %v870
      %v873 = vmul.f32 %v429, %v870
      %v874 = vmul.f32 %v430, %v870
      %v875 = vmul.f32 %v431, %v870
      %v876 = vmul.f32 %v432, %v870
      %v877 = vmul.f32 %v433, %v870
      %v878 = vmul.f32 %v434, %v870
      %v879 = vmul.f32 %v435, %v870
      %v880 = vmul.f32 %v436, %v870
      %v881 = vmul.f32 %v437, %v870
      %v882 = vmul.f32 %v438, %v870
      %v883 = vmul.f32 %v439, %v870
      %v884 = vmul.f32 %v440, %v870
      %v885 = vmul.f32 %v441, %v870
      %v886 = vmul.f32 %v442, %v870
      %v887 = vmul.f32 %v443, %v870
      %v888 = vmul.f32 %v444, %v870
      %v889 = vmul.f32 %v445, %v870
      %v890 = vmul.f32 %v446, %v870
      %v891 = vmul.f32 %v447, %v870
      %v892 = vmul.f32 %v448, %v870
      %v893 = vmul.f32 %v449, %v870
      %v894 = vmul.f32 %v450, %v870
      %v895 = vmul.f32 %v451, %v870
      %v896 = vmul.f32 %v452, %v870
      %v897 = vmul.f32 %v453, %v870
      %v898 = vmul.f32 %v454, %v870
      %v899 = vmul.f32 %v455, %v870
      %v900 = vmul.f32 %v456, %v870
      %v901 = vmul.f32 %v457, %v870
      %v902 = vmul.f32 %v458, %v870
      %v903 = vadd.f32 %v835, %v871
      %v904 = vadd.f32 %v836, %v872
      %v905 = vadd.f32 %v837, %v873
      %v906 = vadd.f32 %v838, %v874
      %v907 = vadd.f32 %v839, %v875
      %v908 = vadd.f32 %v840, %v876
      %v909 = vadd.f32 %v841, %v877
      %v910 = vadd.f32 %v842, %v878
      %v911 = vadd.f32 %v843, %v879
      %v912 = vadd.f32 %v844, %v880
      %v913 = vadd.f32 %v845, %v881
      %v914 = vadd.f32 %v846, %v882
      %v915 = vadd.f32 %v847, %v883
      %v916 = vadd.f32 %v848, %v884
      %v917 = vadd.f32 %v849, %v885
      %v918 = vadd.f32 %v850, %v886
      %v919 = vadd.f32 %v851, %v887
      %v920 = vadd.f32 %v852, %v888
      %v921 = vadd.f32 %v853, %v889
      %v922 = vadd.f32 %v854, %v890
      %v923 = vadd.f32 %v855, %v891
      %v924 = vadd.f32 %v856, %v892
      %v925 = vadd.f32 %v857, %v893
      %v926 = vadd.f32 %v858, %v894
      %v927 = vadd.f32 %v859, %v895
      %v928 = vadd.f32 %v860, %v896
      %v929 = vadd.f32 %v861, %v897
      %v930 = vadd.f32 %v862, %v898
      %v931 = vadd.f32 %v863, %v899
      %v932 = vadd.f32 %v864, %v900
      %v933 = vadd.f32 %v865, %v901
      %v934 = vadd.f32 %v866, %v902
      %v935 = vld [vmem:[#allocation2 + $0x6] sm:$0xff]
      %v936 = vld [vmem:[#allocation2 + $0xe] sm:$0xff]
      %v937 = vld [vmem:[#allocation2 + $0x26] sm:$0xff]
      %v938 = vld [vmem:[#allocation2 + $0x2e] sm:$0xff]
      %v939 = vld [vmem:[#allocation2 + $0x46] sm:$0xff]
      %v940 = vld [vmem:[#allocation2 + $0x4e] sm:$0xff]
      %v941 = vld [vmem:[#allocation2 + $0x66] sm:$0xff]
      %v942 = vld [vmem:[#allocation2 + $0x6e] sm:$0xff]
      %v943 = vld [vmem:[#allocation2 + $0x86] sm:$0xff]
      %v944 = vld [vmem:[#allocation2 + $0x8e] sm:$0xff]
      %v945 = vld [vmem:[#allocation2 + $0xa6] sm:$0xff]
      %v946 = vld [vmem:[#allocation2 + $0xae] sm:$0xff]
      %v947 = vld [vmem:[#allocation2 + $0xc6] sm:$0xff]
      %v948 = vld [vmem:[#allocation2 + $0xce] sm:$0xff]
      %v949 = vld [vmem:[#allocation2 + $0xe6] sm:$0xff]
      %v950 = vld [vmem:[#allocation2 + $0xee] sm:$0xff]
      %v951 = vld [vmem:[#allocation2 + $0x106] sm:$0xff]
      %v952 = vld [vmem:[#allocation2 + $0x10e] sm:$0xff]
      %v953 = vld [vmem:[#allocation2 + $0x126] sm:$0xff]
      %v954 = vld [vmem:[#allocation2 + $0x12e] sm:$0xff]
      %v955 = vld [vmem:[#allocation2 + $0x146] sm:$0xff]
      %v956 = vld [vmem:[#allocation2 + $0x14e] sm:$0xff]
      %v957 = vld [vmem:[#allocation2 + $0x166] sm:$0xff]
      %v958 = vld [vmem:[#allocation2 + $0x16e] sm:$0xff]
      %v959 = vld [vmem:[#allocation2 + $0x186] sm:$0xff]
      %v960 = vld [vmem:[#allocation2 + $0x18e] sm:$0xff]
      %v961 = vld [vmem:[#allocation2 + $0x1a6] sm:$0xff]
      %v962 = vld [vmem:[#allocation2 + $0x1ae] sm:$0xff]
      %v963 = vld [vmem:[#allocation2 + $0x1c6] sm:$0xff]
      %v964 = vld [vmem:[#allocation2 + $0x1ce] sm:$0xff]
      %v965 = vld [vmem:[#allocation2 + $0x1e6] sm:$0xff]
      %v966 = vld [vmem:[#allocation2 + $0x1ee] sm:$0xff]
      %v967 = vld [vmem:[#allocation2 + $0x206] sm:$0xff]
      %v968 = vld [vmem:[#allocation2 + $0x20e] sm:$0xff]
      %v969 = vld [vmem:[#allocation2 + $0x226] sm:$0xff]
      %v970 = vld [vmem:[#allocation2 + $0x22e] sm:$0xff]
      %v971 = vld [vmem:[#allocation2 + $0x246] sm:$0xff]
      %v972 = vld [vmem:[#allocation2 + $0x24e] sm:$0xff]
      %v973 = vld [vmem:[#allocation2 + $0x266] sm:$0xff]
      %v974 = vld [vmem:[#allocation2 + $0x26e] sm:$0xff]
      %v975 = vld [vmem:[#allocation2 + $0x286] sm:$0xff]
      %v976 = vld [vmem:[#allocation2 + $0x28e] sm:$0xff]
      %v977 = vld [vmem:[#allocation2 + $0x2a6] sm:$0xff]
      %v978 = vld [vmem:[#allocation2 + $0x2ae] sm:$0xff]
      %v979 = vlaneseq
      %v980 = vshrl.u32 %v979, 7
      %v981 = vsub.s32 1, %v980
      %v982 = vrot.slane %v408, %v981
      %v983 = vmul.f32 %v935, %v982
      %v984 = vmul.f32 %v936, %v982
      %v985 = vmul.f32 %v937, %v982
      %v986 = vmul.f32 %v938, %v982
      %v987 = vmul.f32 %v939, %v982
      %v988 = vmul.f32 %v940, %v982
      %v989 = vmul.f32 %v941, %v982
      %v990 = vmul.f32 %v942, %v982
      %v991 = vmul.f32 %v943, %v982
      %v992 = vmul.f32 %v944, %v982
      %v993 = vmul.f32 %v945, %v982
      %v994 = vmul.f32 %v946, %v982
      %v995 = vmul.f32 %v947, %v982
      %v996 = vmul.f32 %v948, %v982
      %v997 = vmul.f32 %v949, %v982
      %v998 = vmul.f32 %v950, %v982
      %v999 = vmul.f32 %v951, %v982
      %v1000 = vmul.f32 %v952, %v982
      %v1001 = vmul.f32 %v953, %v982
      %v1002 = vmul.f32 %v954, %v982
      %v1003 = vmul.f32 %v955, %v982
      %v1004 = vmul.f32 %v956, %v982
      %v1005 = vmul.f32 %v957, %v982
      %v1006 = vmul.f32 %v958, %v982
      %v1007 = vmul.f32 %v959, %v982
      %v1008 = vmul.f32 %v960, %v982
      %v1009 = vmul.f32 %v961, %v982
      %v1010 = vmul.f32 %v962, %v982
      %v1011 = vmul.f32 %v963, %v982
      %v1012 = vmul.f32 %v964, %v982
      %v1013 = vmul.f32 %v965, %v982
      %v1014 = vmul.f32 %v966, %v982
      %v1015 = vadd.f32 %v903, %v983
      %v1016 = vadd.f32 %v904, %v984
      %v1017 = vadd.f32 %v905, %v985
      %v1018 = vadd.f32 %v906, %v986
      %v1019 = vadd.f32 %v907, %v987
      %v1020 = vadd.f32 %v908, %v988
      %v1021 = vadd.f32 %v909, %v989
      %v1022 = vadd.f32 %v910, %v990
      %v1023 = vadd.f32 %v911, %v991
      %v1024 = vadd.f32 %v912, %v992
      %v1025 = vadd.f32 %v913, %v993
      %v1026 = vadd.f32 %v914, %v994
      %v1027 = vadd.f32 %v915, %v995
      %v1028 = vadd.f32 %v916, %v996
      %v1029 = vadd.f32 %v917, %v997
      %v1030 = vadd.f32 %v918, %v998
      %v1031 = vadd.f32 %v919, %v999
      %v1032 = vadd.f32 %v920, %v1000
      %v1033 = vadd.f32 %v921, %v1001
      %v1034 = vadd.f32 %v922, %v1002
      %v1035 = vadd.f32 %v923, %v1003
      %v1036 = vadd.f32 %v924, %v1004
      %v1037 = vadd.f32 %v925, %v1005
      %v1038 = vadd.f32 %v926, %v1006
      %v1039 = vadd.f32 %v927, %v1007
      %v1040 = vadd.f32 %v928, %v1008
      %v1041 = vadd.f32 %v929, %v1009
      %v1042 = vadd.f32 %v930, %v1010
      %v1043 = vadd.f32 %v931, %v1011
      %v1044 = vadd.f32 %v932, %v1012
      %v1045 = vadd.f32 %v933, %v1013
      %v1046 = vadd.f32 %v934, %v1014
      %v1047 = vlaneseq
      %v1048 = vshrl.u32 %v1047, 7
      %v1049 = vsub.s32 1, %v1048
      %v1050 = vrot.slane %v409, %v1049
      %v1051 = vmul.f32 %v937, %v1050
      %v1052 = vmul.f32 %v938, %v1050
      %v1053 = vmul.f32 %v939, %v1050
      %v1054 = vmul.f32 %v940, %v1050
      %v1055 = vmul.f32 %v941, %v1050
      %v1056 = vmul.f32 %v942, %v1050
      %v1057 = vmul.f32 %v943, %v1050
      %v1058 = vmul.f32 %v944, %v1050
      %v1059 = vmul.f32 %v945, %v1050
      %v1060 = vmul.f32 %v946, %v1050
      %v1061 = vmul.f32 %v947, %v1050
      %v1062 = vmul.f32 %v948, %v1050
      %v1063 = vmul.f32 %v949, %v1050
      %v1064 = vmul.f32 %v950, %v1050
      %v1065 = vmul.f32 %v951, %v1050
      %v1066 = vmul.f32 %v952, %v1050
      %v1067 = vmul.f32 %v953, %v1050
      %v1068 = vmul.f32 %v954, %v1050
      %v1069 = vmul.f32 %v955, %v1050
      %v1070 = vmul.f32 %v956, %v1050
      %v1071 = vmul.f32 %v957, %v1050
      %v1072 = vmul.f32 %v958, %v1050
      %v1073 = vmul.f32 %v959, %v1050
      %v1074 = vmul.f32 %v960, %v1050
      %v1075 = vmul.f32 %v961, %v1050
      %v1076 = vmul.f32 %v962, %v1050
      %v1077 = vmul.f32 %v963, %v1050
      %v1078 = vmul.f32 %v964, %v1050
      %v1079 = vmul.f32 %v965, %v1050
      %v1080 = vmul.f32 %v966, %v1050
      %v1081 = vmul.f32 %v967, %v1050
      %v1082 = vmul.f32 %v968, %v1050
      %v1083 = vadd.f32 %v1015, %v1051
      %v1084 = vadd.f32 %v1016, %v1052
      %v1085 = vadd.f32 %v1017, %v1053
      %v1086 = vadd.f32 %v1018, %v1054
      %v1087 = vadd.f32 %v1019, %v1055
      %v1088 = vadd.f32 %v1020, %v1056
      %v1089 = vadd.f32 %v1021, %v1057
      %v1090 = vadd.f32 %v1022, %v1058
      %v1091 = vadd.f32 %v1023, %v1059
      %v1092 = vadd.f32 %v1024, %v1060
      %v1093 = vadd.f32 %v1025, %v1061
      %v1094 = vadd.f32 %v1026, %v1062
      %v1095 = vadd.f32 %v1027, %v1063
      %v1096 = vadd.f32 %v1028, %v1064
      %v1097 = vadd.f32 %v1029, %v1065
      %v1098 = vadd.f32 %v1030, %v1066
      %v1099 = vadd.f32 %v1031, %v1067
      %v1100 = vadd.f32 %v1032, %v1068
      %v1101 = vadd.f32 %v1033, %v1069
      %v1102 = vadd.f32 %v1034, %v1070
      %v1103 = vadd.f32 %v1035, %v1071
      %v1104 = vadd.f32 %v1036, %v1072
      %v1105 = vadd.f32 %v1037, %v1073
      %v1106 = vadd.f32 %v1038, %v1074
      %v1107 = vadd.f32 %v1039, %v1075
      %v1108 = vadd.f32 %v1040, %v1076
      %v1109 = vadd.f32 %v1041, %v1077
      %v1110 = vadd.f32 %v1042, %v1078
      %v1111 = vadd.f32 %v1043, %v1079
      %v1112 = vadd.f32 %v1044, %v1080
      %v1113 = vadd.f32 %v1045, %v1081
      %v1114 = vadd.f32 %v1046, %v1082
      %v1115 = vlaneseq
      %v1116 = vshrl.u32 %v1115, 7
      %v1117 = vsub.s32 1, %v1116
      %v1118 = vrot.slane %v410, %v1117
      %v1119 = vmul.f32 %v939, %v1118
      %v1120 = vmul.f32 %v940, %v1118
      %v1121 = vmul.f32 %v941, %v1118
      %v1122 = vmul.f32 %v942, %v1118
      %v1123 = vmul.f32 %v943, %v1118
      %v1124 = vmul.f32 %v944, %v1118
      %v1125 = vmul.f32 %v945, %v1118
      %v1126 = vmul.f32 %v946, %v1118
      %v1127 = vmul.f32 %v947, %v1118
      %v1128 = vmul.f32 %v948, %v1118
      %v1129 = vmul.f32 %v949, %v1118
      %v1130 = vmul.f32 %v950, %v1118
      %v1131 = vmul.f32 %v951, %v1118
      %v1132 = vmul.f32 %v952, %v1118
      %v1133 = vmul.f32 %v953, %v1118
      %v1134 = vmul.f32 %v954, %v1118
      %v1135 = vmul.f32 %v955, %v1118
      %v1136 = vmul.f32 %v956, %v1118
      %v1137 = vmul.f32 %v957, %v1118
      %v1138 = vmul.f32 %v958, %v1118
      %v1139 = vmul.f32 %v959, %v1118
      %v1140 = vmul.f32 %v960, %v1118
      %v1141 = vmul.f32 %v961, %v1118
      %v1142 = vmul.f32 %v962, %v1118
      %v1143 = vmul.f32 %v963, %v1118
      %v1144 = vmul.f32 %v964, %v1118
      %v1145 = vmul.f32 %v965, %v1118
      %v1146 = vmul.f32 %v966, %v1118
      %v1147 = vmul.f32 %v967, %v1118
      %v1148 = vmul.f32 %v968, %v1118
      %v1149 = vmul.f32 %v969, %v1118
      %v1150 = vmul.f32 %v970, %v1118
      %v1151 = vadd.f32 %v1083, %v1119
      %v1152 = vadd.f32 %v1084, %v1120
      %v1153 = vadd.f32 %v1085, %v1121
      %v1154 = vadd.f32 %v1086, %v1122
      %v1155 = vadd.f32 %v1087, %v1123
      %v1156 = vadd.f32 %v1088, %v1124
      %v1157 = vadd.f32 %v1089, %v1125
      %v1158 = vadd.f32 %v1090, %v1126
      %v1159 = vadd.f32 %v1091, %v1127
      %v1160 = vadd.f32 %v1092, %v1128
      %v1161 = vadd.f32 %v1093, %v1129
      %v1162 = vadd.f32 %v1094, %v1130
      %v1163 = vadd.f32 %v1095, %v1131
      %v1164 = vadd.f32 %v1096, %v1132
      %v1165 = vadd.f32 %v1097, %v1133
      %v1166 = vadd.f32 %v1098, %v1134
      %v1167 = vadd.f32 %v1099, %v1135
      %v1168 = vadd.f32 %v1100, %v1136
      %v1169 = vadd.f32 %v1101, %v1137
      %v1170 = vadd.f32 %v1102, %v1138
      %v1171 = vadd.f32 %v1103, %v1139
      %v1172 = vadd.f32 %v1104, %v1140
      %v1173 = vadd.f32 %v1105, %v1141
      %v1174 = vadd.f32 %v1106, %v1142
      %v1175 = vadd.f32 %v1107, %v1143
      %v1176 = vadd.f32 %v1108, %v1144
      %v1177 = vadd.f32 %v1109, %v1145
      %v1178 = vadd.f32 %v1110, %v1146
      %v1179 = vadd.f32 %v1111, %v1147
      %v1180 = vadd.f32 %v1112, %v1148
      %v1181 = vadd.f32 %v1113, %v1149
      %v1182 = vadd.f32 %v1114, %v1150
      %v1183 = vlaneseq
      %v1184 = vshrl.u32 %v1183, 7
      %v1185 = vsub.s32 1, %v1184
      %v1186 = vrot.slane %v411, %v1185
      %v1187 = vmul.f32 %v941, %v1186
      %v1188 = vmul.f32 %v942, %v1186
      %v1189 = vmul.f32 %v943, %v1186
      %v1190 = vmul.f32 %v944, %v1186
      %v1191 = vmul.f32 %v945, %v1186
      %v1192 = vmul.f32 %v946, %v1186
      %v1193 = vmul.f32 %v947, %v1186
      %v1194 = vmul.f32 %v948, %v1186
      %v1195 = vmul.f32 %v949, %v1186
      %v1196 = vmul.f32 %v950, %v1186
      %v1197 = vmul.f32 %v951, %v1186
      %v1198 = vmul.f32 %v952, %v1186
      %v1199 = vmul.f32 %v953, %v1186
      %v1200 = vmul.f32 %v954, %v1186
      %v1201 = vmul.f32 %v955, %v1186
      %v1202 = vmul.f32 %v956, %v1186
      %v1203 = vmul.f32 %v957, %v1186
      %v1204 = vmul.f32 %v958, %v1186
      %v1205 = vmul.f32 %v959, %v1186
      %v1206 = vmul.f32 %v960, %v1186
      %v1207 = vmul.f32 %v961, %v1186
      %v1208 = vmul.f32 %v962, %v1186
      %v1209 = vmul.f32 %v963, %v1186
      %v1210 = vmul.f32 %v964, %v1186
      %v1211 = vmul.f32 %v965, %v1186
      %v1212 = vmul.f32 %v966, %v1186
      %v1213 = vmul.f32 %v967, %v1186
      %v1214 = vmul.f32 %v968, %v1186
      %v1215 = vmul.f32 %v969, %v1186
      %v1216 = vmul.f32 %v970, %v1186
      %v1217 = vmul.f32 %v971, %v1186
      %v1218 = vmul.f32 %v972, %v1186
      %v1219 = vadd.f32 %v1151, %v1187
      %v1220 = vadd.f32 %v1152, %v1188
      %v1221 = vadd.f32 %v1153, %v1189
      %v1222 = vadd.f32 %v1154, %v1190
      %v1223 = vadd.f32 %v1155, %v1191
      %v1224 = vadd.f32 %v1156, %v1192
      %v1225 = vadd.f32 %v1157, %v1193
      %v1226 = vadd.f32 %v1158, %v1194
      %v1227 = vadd.f32 %v1159, %v1195
      %v1228 = vadd.f32 %v1160, %v1196
      %v1229 = vadd.f32 %v1161, %v1197
      %v1230 = vadd.f32 %v1162, %v1198
      %v1231 = vadd.f32 %v1163, %v1199
      %v1232 = vadd.f32 %v1164, %v1200
      %v1233 = vadd.f32 %v1165, %v1201
      %v1234 = vadd.f32 %v1166, %v1202
      %v1235 = vadd.f32 %v1167, %v1203
      %v1236 = vadd.f32 %v1168, %v1204
      %v1237 = vadd.f32 %v1169, %v1205
      %v1238 = vadd.f32 %v1170, %v1206
      %v1239 = vadd.f32 %v1171, %v1207
      %v1240 = vadd.f32 %v1172, %v1208
      %v1241 = vadd.f32 %v1173, %v1209
      %v1242 = vadd.f32 %v1174, %v1210
      %v1243 = vadd.f32 %v1175, %v1211
      %v1244 = vadd.f32 %v1176, %v1212
      %v1245 = vadd.f32 %v1177, %v1213
      %v1246 = vadd.f32 %v1178, %v1214
      %v1247 = vadd.f32 %v1179, %v1215
      %v1248 = vadd.f32 %v1180, %v1216
      %v1249 = vadd.f32 %v1181, %v1217
      %v1250 = vadd.f32 %v1182, %v1218
      %v1251 = vlaneseq
      %v1252 = vshrl.u32 %v1251, 7
      %v1253 = vsub.s32 1, %v1252
      %v1254 = vrot.slane %v412, %v1253
      %v1255 = vmul.f32 %v943, %v1254
      %v1256 = vmul.f32 %v944, %v1254
      %v1257 = vmul.f32 %v945, %v1254
      %v1258 = vmul.f32 %v946, %v1254
      %v1259 = vmul.f32 %v947, %v1254
      %v1260 = vmul.f32 %v948, %v1254
      %v1261 = vmul.f32 %v949, %v1254
      %v1262 = vmul.f32 %v950, %v1254
      %v1263 = vmul.f32 %v951, %v1254
      %v1264 = vmul.f32 %v952, %v1254
      %v1265 = vmul.f32 %v953, %v1254
      %v1266 = vmul.f32 %v954, %v1254
      %v1267 = vmul.f32 %v955, %v1254
      %v1268 = vmul.f32 %v956, %v1254
      %v1269 = vmul.f32 %v957, %v1254
      %v1270 = vmul.f32 %v958, %v1254
      %v1271 = vmul.f32 %v959, %v1254
      %v1272 = vmul.f32 %v960, %v1254
      %v1273 = vmul.f32 %v961, %v1254
      %v1274 = vmul.f32 %v962, %v1254
      %v1275 = vmul.f32 %v963, %v1254
      %v1276 = vmul.f32 %v964, %v1254
      %v1277 = vmul.f32 %v965, %v1254
      %v1278 = vmul.f32 %v966, %v1254
      %v1279 = vmul.f32 %v967, %v1254
      %v1280 = vmul.f32 %v968, %v1254
      %v1281 = vmul.f32 %v969, %v1254
      %v1282 = vmul.f32 %v970, %v1254
      %v1283 = vmul.f32 %v971, %v1254
      %v1284 = vmul.f32 %v972, %v1254
      %v1285 = vmul.f32 %v973, %v1254
      %v1286 = vmul.f32 %v974, %v1254
      %v1287 = vadd.f32 %v1219, %v1255
      %v1288 = vadd.f32 %v1220, %v1256
      %v1289 = vadd.f32 %v1221, %v1257
      %v1290 = vadd.f32 %v1222, %v1258
      %v1291 = vadd.f32 %v1223, %v1259
      %v1292 = vadd.f32 %v1224, %v1260
      %v1293 = vadd.f32 %v1225, %v1261
      %v1294 = vadd.f32 %v1226, %v1262
      %v1295 = vadd.f32 %v1227, %v1263
      %v1296 = vadd.f32 %v1228, %v1264
      %v1297 = vadd.f32 %v1229, %v1265
      %v1298 = vadd.f32 %v1230, %v1266
      %v1299 = vadd.f32 %v1231, %v1267
      %v1300 = vadd.f32 %v1232, %v1268
      %v1301 = vadd.f32 %v1233, %v1269
      %v1302 = vadd.f32 %v1234, %v1270
      %v1303 = vadd.f32 %v1235, %v1271
      %v1304 = vadd.f32 %v1236, %v1272
      %v1305 = vadd.f32 %v1237, %v1273
      %v1306 = vadd.f32 %v1238, %v1274
      %v1307 = vadd.f32 %v1239, %v1275
      %v1308 = vadd.f32 %v1240, %v1276
      %v1309 = vadd.f32 %v1241, %v1277
      %v1310 = vadd.f32 %v1242, %v1278
      %v1311 = vadd.f32 %v1243, %v1279
      %v1312 = vadd.f32 %v1244, %v1280
      %v1313 = vadd.f32 %v1245, %v1281
      %v1314 = vadd.f32 %v1246, %v1282
      %v1315 = vadd.f32 %v1247, %v1283
      %v1316 = vadd.f32 %v1248, %v1284
      %v1317 = vadd.f32 %v1249, %v1285
      %v1318 = vadd.f32 %v1250, %v1286
      %v1319 = vlaneseq
      %v1320 = vshrl.u32 %v1319, 7
      %v1321 = vsub.s32 1, %v1320
      %v1322 = vrot.slane %v413, %v1321
      %v1323 = vmul.f32 %v945, %v1322
      %v1324 = vmul.f32 %v946, %v1322
      %v1325 = vmul.f32 %v947, %v1322
      %v1326 = vmul.f32 %v948, %v1322
      %v1327 = vmul.f32 %v949, %v1322
      %v1328 = vmul.f32 %v950, %v1322
      %v1329 = vmul.f32 %v951, %v1322
      %v1330 = vmul.f32 %v952, %v1322
      %v1331 = vmul.f32 %v953, %v1322
      %v1332 = vmul.f32 %v954, %v1322
      %v1333 = vmul.f32 %v955, %v1322
      %v1334 = vmul.f32 %v956, %v1322
      %v1335 = vmul.f32 %v957, %v1322
      %v1336 = vmul.f32 %v958, %v1322
      %v1337 = vmul.f32 %v959, %v1322
      %v1338 = vmul.f32 %v960, %v1322
      %v1339 = vmul.f32 %v961, %v1322
      %v1340 = vmul.f32 %v962, %v1322
      %v1341 = vmul.f32 %v963, %v1322
      %v1342 = vmul.f32 %v964, %v1322
      %v1343 = vmul.f32 %v965, %v1322
      %v1344 = vmul.f32 %v966, %v1322
      %v1345 = vmul.f32 %v967, %v1322
      %v1346 = vmul.f32 %v968, %v1322
      %v1347 = vmul.f32 %v969, %v1322
      %v1348 = vmul.f32 %v970, %v1322
      %v1349 = vmul.f32 %v971, %v1322
      %v1350 = vmul.f32 %v972, %v1322
      %v1351 = vmul.f32 %v973, %v1322
      %v1352 = vmul.f32 %v974, %v1322
      %v1353 = vmul.f32 %v975, %v1322
      %v1354 = vmul.f32 %v976, %v1322
      %v1355 = vadd.f32 %v1287, %v1323
      %v1356 = vadd.f32 %v1288, %v1324
      %v1357 = vadd.f32 %v1289, %v1325
      %v1358 = vadd.f32 %v1290, %v1326
      %v1359 = vadd.f32 %v1291, %v1327
      %v1360 = vadd.f32 %v1292, %v1328
      %v1361 = vadd.f32 %v1293, %v1329
      %v1362 = vadd.f32 %v1294, %v1330
      %v1363 = vadd.f32 %v1295, %v1331
      %v1364 = vadd.f32 %v1296, %v1332
      %v1365 = vadd.f32 %v1297, %v1333
      %v1366 = vadd.f32 %v1298, %v1334
      %v1367 = vadd.f32 %v1299, %v1335
      %v1368 = vadd.f32 %v1300, %v1336
      %v1369 = vadd.f32 %v1301, %v1337
      %v1370 = vadd.f32 %v1302, %v1338
      %v1371 = vadd.f32 %v1303, %v1339
      %v1372 = vadd.f32 %v1304, %v1340
      %v1373 = vadd.f32 %v1305, %v1341
      %v1374 = vadd.f32 %v1306, %v1342
      %v1375 = vadd.f32 %v1307, %v1343
      %v1376 = vadd.f32 %v1308, %v1344
      %v1377 = vadd.f32 %v1309, %v1345
      %v1378 = vadd.f32 %v1310, %v1346
      %v1379 = vadd.f32 %v1311, %v1347
      %v1380 = vadd.f32 %v1312, %v1348
      %v1381 = vadd.f32 %v1313, %v1349
      %v1382 = vadd.f32 %v1314, %v1350
      %v1383 = vadd.f32 %v1315, %v1351
      %v1384 = vadd.f32 %v1316, %v1352
      %v1385 = vadd.f32 %v1317, %v1353
      %v1386 = vadd.f32 %v1318, %v1354
      %v1387 = vlaneseq
      %v1388 = vshrl.u32 %v1387, 7
      %v1389 = vsub.s32 1, %v1388
      %v1390 = vrot.slane %v414, %v1389
      %v1391 = vmul.f32 %v947, %v1390
      %v1392 = vmul.f32 %v948, %v1390
      %v1393 = vmul.f32 %v949, %v1390
      %v1394 = vmul.f32 %v950, %v1390
      %v1395 = vmul.f32 %v951, %v1390
      %v1396 = vmul.f32 %v952, %v1390
      %v1397 = vmul.f32 %v953, %v1390
      %v1398 = vmul.f32 %v954, %v1390
      %v1399 = vmul.f32 %v955, %v1390
      %v1400 = vmul.f32 %v956, %v1390
      %v1401 = vmul.f32 %v957, %v1390
      %v1402 = vmul.f32 %v958, %v1390
      %v1403 = vmul.f32 %v959, %v1390
      %v1404 = vmul.f32 %v960, %v1390
      %v1405 = vmul.f32 %v961, %v1390
      %v1406 = vmul.f32 %v962, %v1390
      %v1407 = vmul.f32 %v963, %v1390
      %v1408 = vmul.f32 %v964, %v1390
      %v1409 = vmul.f32 %v965, %v1390
      %v1410 = vmul.f32 %v966, %v1390
      %v1411 = vmul.f32 %v967, %v1390
      %v1412 = vmul.f32 %v968, %v1390
      %v1413 = vmul.f32 %v969, %v1390
      %v1414 = vmul.f32 %v970, %v1390
      %v1415 = vmul.f32 %v971, %v1390
      %v1416 = vmul.f32 %v972, %v1390
      %v1417 = vmul.f32 %v973, %v1390
      %v1418 = vmul.f32 %v974, %v1390
      %v1419 = vmul.f32 %v975, %v1390
      %v1420 = vmul.f32 %v976, %v1390
      %v1421 = vmul.f32 %v977, %v1390
      %v1422 = vmul.f32 %v978, %v1390
      %v1423 = vadd.f32 %v1355, %v1391
      %v1424 = vadd.f32 %v1356, %v1392
      %v1425 = vadd.f32 %v1357, %v1393
      %v1426 = vadd.f32 %v1358, %v1394
      %v1427 = vadd.f32 %v1359, %v1395
      %v1428 = vadd.f32 %v1360, %v1396
      %v1429 = vadd.f32 %v1361, %v1397
      %v1430 = vadd.f32 %v1362, %v1398
      %v1431 = vadd.f32 %v1363, %v1399
      %v1432 = vadd.f32 %v1364, %v1400
      %v1433 = vadd.f32 %v1365, %v1401
      %v1434 = vadd.f32 %v1366, %v1402
      %v1435 = vadd.f32 %v1367, %v1403
      %v1436 = vadd.f32 %v1368, %v1404
      %v1437 = vadd.f32 %v1369, %v1405
      %v1438 = vadd.f32 %v1370, %v1406
      %v1439 = vadd.f32 %v1371, %v1407
      %v1440 = vadd.f32 %v1372, %v1408
      %v1441 = vadd.f32 %v1373, %v1409
      %v1442 = vadd.f32 %v1374, %v1410
      %v1443 = vadd.f32 %v1375, %v1411
      %v1444 = vadd.f32 %v1376, %v1412
      %v1445 = vadd.f32 %v1377, %v1413
      %v1446 = vadd.f32 %v1378, %v1414
      %v1447 = vadd.f32 %v1379, %v1415
      %v1448 = vadd.f32 %v1380, %v1416
      %v1449 = vadd.f32 %v1381, %v1417
      %v1450 = vadd.f32 %v1382, %v1418
      %v1451 = vadd.f32 %v1383, %v1419
      %v1452 = vadd.f32 %v1384, %v1420
      %v1453 = vadd.f32 %v1385, %v1421
      %v1454 = vadd.f32 %v1386, %v1422
      %v1455 = vld [vmem:[#allocation2 + $0x7] sm:$0xff]
      %v1456 = vld [vmem:[#allocation2 + $0xf] sm:$0xff]
      %v1457 = vld [vmem:[#allocation2 + $0x27] sm:$0xff]
      %v1458 = vld [vmem:[#allocation2 + $0x2f] sm:$0xff]
      %v1459 = vld [vmem:[#allocation2 + $0x47] sm:$0xff]
      %v1460 = vld [vmem:[#allocation2 + $0x4f] sm:$0xff]
      %v1461 = vld [vmem:[#allocation2 + $0x67] sm:$0xff]
      %v1462 = vld [vmem:[#allocation2 + $0x6f] sm:$0xff]
      %v1463 = vld [vmem:[#allocation2 + $0x87] sm:$0xff]
      %v1464 = vld [vmem:[#allocation2 + $0x8f] sm:$0xff]
      %v1465 = vld [vmem:[#allocation2 + $0xa7] sm:$0xff]
      %v1466 = vld [vmem:[#allocation2 + $0xaf] sm:$0xff]
      %v1467 = vld [vmem:[#allocation2 + $0xc7] sm:$0xff]
      %v1468 = vld [vmem:[#allocation2 + $0xcf] sm:$0xff]
      %v1469 = vld [vmem:[#allocation2 + $0xe7] sm:$0xff]
      %v1470 = vld [vmem:[#allocation2 + $0xef] sm:$0xff]
      %v1471 = vld [vmem:[#allocation2 + $0x107] sm:$0xff]
      %v1472 = vld [vmem:[#allocation2 + $0x10f] sm:$0xff]
      %v1473 = vld [vmem:[#allocation2 + $0x127] sm:$0xff]
      %v1474 = vld [vmem:[#allocation2 + $0x12f] sm:$0xff]
      %v1475 = vld [vmem:[#allocation2 + $0x147] sm:$0xff]
      %v1476 = vld [vmem:[#allocation2 + $0x14f] sm:$0xff]
      %v1477 = vld [vmem:[#allocation2 + $0x167] sm:$0xff]
      %v1478 = vld [vmem:[#allocation2 + $0x16f] sm:$0xff]
      %v1479 = vld [vmem:[#allocation2 + $0x187] sm:$0xff]
      %v1480 = vld [vmem:[#allocation2 + $0x18f] sm:$0xff]
      %v1481 = vld [vmem:[#allocation2 + $0x1a7] sm:$0xff]
      %v1482 = vld [vmem:[#allocation2 + $0x1af] sm:$0xff]
      %v1483 = vld [vmem:[#allocation2 + $0x1c7] sm:$0xff]
      %v1484 = vld [vmem:[#allocation2 + $0x1cf] sm:$0xff]
      %v1485 = vld [vmem:[#allocation2 + $0x1e7] sm:$0xff]
      %v1486 = vld [vmem:[#allocation2 + $0x1ef] sm:$0xff]
      %v1487 = vld [vmem:[#allocation2 + $0x207] sm:$0xff]
      %v1488 = vld [vmem:[#allocation2 + $0x20f] sm:$0xff]
      %v1489 = vld [vmem:[#allocation2 + $0x227] sm:$0xff]
      %v1490 = vld [vmem:[#allocation2 + $0x22f] sm:$0xff]
      %v1491 = vld [vmem:[#allocation2 + $0x247] sm:$0xff]
      %v1492 = vld [vmem:[#allocation2 + $0x24f] sm:$0xff]
      %v1493 = vld [vmem:[#allocation2 + $0x267] sm:$0xff]
      %v1494 = vld [vmem:[#allocation2 + $0x26f] sm:$0xff]
      %v1495 = vld [vmem:[#allocation2 + $0x287] sm:$0xff]
      %v1496 = vld [vmem:[#allocation2 + $0x28f] sm:$0xff]
      %v1497 = vld [vmem:[#allocation2 + $0x2a7] sm:$0xff]
      %v1498 = vld [vmem:[#allocation2 + $0x2af] sm:$0xff]
      %v1499 = vlaneseq
      %v1500 = vshrl.u32 %v1499, 7
      %v1501 = vsub.s32 2, %v1500
      %v1502 = vrot.slane %v408, %v1501
      %v1503 = vmul.f32 %v1455, %v1502
      %v1504 = vmul.f32 %v1456, %v1502
      %v1505 = vmul.f32 %v1457, %v1502
      %v1506 = vmul.f32 %v1458, %v1502
      %v1507 = vmul.f32 %v1459, %v1502
      %v1508 = vmul.f32 %v1460, %v1502
      %v1509 = vmul.f32 %v1461, %v1502
      %v1510 = vmul.f32 %v1462, %v1502
      %v1511 = vmul.f32 %v1463, %v1502
      %v1512 = vmul.f32 %v1464, %v1502
      %v1513 = vmul.f32 %v1465, %v1502
      %v1514 = vmul.f32 %v1466, %v1502
      %v1515 = vmul.f32 %v1467, %v1502
      %v1516 = vmul.f32 %v1468, %v1502
      %v1517 = vmul.f32 %v1469, %v1502
      %v1518 = vmul.f32 %v1470, %v1502
      %v1519 = vmul.f32 %v1471, %v1502
      %v1520 = vmul.f32 %v1472, %v1502
      %v1521 = vmul.f32 %v1473, %v1502
      %v1522 = vmul.f32 %v1474, %v1502
      %v1523 = vmul.f32 %v1475, %v1502
      %v1524 = vmul.f32 %v1476, %v1502
      %v1525 = vmul.f32 %v1477, %v1502
      %v1526 = vmul.f32 %v1478, %v1502
      %v1527 = vmul.f32 %v1479, %v1502
      %v1528 = vmul.f32 %v1480, %v1502
      %v1529 = vmul.f32 %v1481, %v1502
      %v1530 = vmul.f32 %v1482, %v1502
      %v1531 = vmul.f32 %v1483, %v1502
      %v1532 = vmul.f32 %v1484, %v1502
      %v1533 = vmul.f32 %v1485, %v1502
      %v1534 = vmul.f32 %v1486, %v1502
      %v1535 = vadd.f32 %v1423, %v1503
      %v1536 = vadd.f32 %v1424, %v1504
      %v1537 = vadd.f32 %v1425, %v1505
      %v1538 = vadd.f32 %v1426, %v1506
      %v1539 = vadd.f32 %v1427, %v1507
      %v1540 = vadd.f32 %v1428, %v1508
      %v1541 = vadd.f32 %v1429, %v1509
      %v1542 = vadd.f32 %v1430, %v1510
      %v1543 = vadd.f32 %v1431, %v1511
      %v1544 = vadd.f32 %v1432, %v1512
      %v1545 = vadd.f32 %v1433, %v1513
      %v1546 = vadd.f32 %v1434, %v1514
      %v1547 = vadd.f32 %v1435, %v1515
      %v1548 = vadd.f32 %v1436, %v1516
      %v1549 = vadd.f32 %v1437, %v1517
      %v1550 = vadd.f32 %v1438, %v1518
      %v1551 = vadd.f32 %v1439, %v1519
      %v1552 = vadd.f32 %v1440, %v1520
      %v1553 = vadd.f32 %v1441, %v1521
      %v1554 = vadd.f32 %v1442, %v1522
      %v1555 = vadd.f32 %v1443, %v1523
      %v1556 = vadd.f32 %v1444, %v1524
      %v1557 = vadd.f32 %v1445, %v1525
      %v1558 = vadd.f32 %v1446, %v1526
      %v1559 = vadd.f32 %v1447, %v1527
      %v1560 = vadd.f32 %v1448, %v1528
      %v1561 = vadd.f32 %v1449, %v1529
      %v1562 = vadd.f32 %v1450, %v1530
      %v1563 = vadd.f32 %v1451, %v1531
      %v1564 = vadd.f32 %v1452, %v1532
      %v1565 = vadd.f32 %v1453, %v1533
      %v1566 = vadd.f32 %v1454, %v1534
      %v1567 = vlaneseq
      %v1568 = vshrl.u32 %v1567, 7
      %v1569 = vsub.s32 2, %v1568
      %v1570 = vrot.slane %v409, %v1569
      %v1571 = vmul.f32 %v1457, %v1570
      %v1572 = vmul.f32 %v1458, %v1570
      %v1573 = vmul.f32 %v1459, %v1570
      %v1574 = vmul.f32 %v1460, %v1570
      %v1575 = vmul.f32 %v1461, %v1570
      %v1576 = vmul.f32 %v1462, %v1570
      %v1577 = vmul.f32 %v1463, %v1570
      %v1578 = vmul.f32 %v1464, %v1570
      %v1579 = vmul.f32 %v1465, %v1570
      %v1580 = vmul.f32 %v1466, %v1570
      %v1581 = vmul.f32 %v1467, %v1570
      %v1582 = vmul.f32 %v1468, %v1570
      %v1583 = vmul.f32 %v1469, %v1570
      %v1584 = vmul.f32 %v1470, %v1570
      %v1585 = vmul.f32 %v1471, %v1570
      %v1586 = vmul.f32 %v1472, %v1570
      %v1587 = vmul.f32 %v1473, %v1570
      %v1588 = vmul.f32 %v1474, %v1570
      %v1589 = vmul.f32 %v1475, %v1570
      %v1590 = vmul.f32 %v1476, %v1570
      %v1591 = vmul.f32 %v1477, %v1570
      %v1592 = vmul.f32 %v1478, %v1570
      %v1593 = vmul.f32 %v1479, %v1570
      %v1594 = vmul.f32 %v1480, %v1570
      %v1595 = vmul.f32 %v1481, %v1570
      %v1596 = vmul.f32 %v1482, %v1570
      %v1597 = vmul.f32 %v1483, %v1570
      %v1598 = vmul.f32 %v1484, %v1570
      %v1599 = vmul.f32 %v1485, %v1570
      %v1600 = vmul.f32 %v1486, %v1570
      %v1601 = vmul.f32 %v1487, %v1570
      %v1602 = vmul.f32 %v1488, %v1570
      %v1603 = vadd.f32 %v1535, %v1571
      %v1604 = vadd.f32 %v1536, %v1572
      %v1605 = vadd.f32 %v1537, %v1573
      %v1606 = vadd.f32 %v1538, %v1574
      %v1607 = vadd.f32 %v1539, %v1575
      %v1608 = vadd.f32 %v1540, %v1576
      %v1609 = vadd.f32 %v1541, %v1577
      %v1610 = vadd.f32 %v1542, %v1578
      %v1611 = vadd.f32 %v1543, %v1579
      %v1612 = vadd.f32 %v1544, %v1580
      %v1613 = vadd.f32 %v1545, %v1581
      %v1614 = vadd.f32 %v1546, %v1582
      %v1615 = vadd.f32 %v1547, %v1583
      %v1616 = vadd.f32 %v1548, %v1584
      %v1617 = vadd.f32 %v1549, %v1585
      %v1618 = vadd.f32 %v1550, %v1586
      %v1619 = vadd.f32 %v1551, %v1587
      %v1620 = vadd.f32 %v1552, %v1588
      %v1621 = vadd.f32 %v1553, %v1589
      %v1622 = vadd.f32 %v1554, %v1590
      %v1623 = vadd.f32 %v1555, %v1591
      %v1624 = vadd.f32 %v1556, %v1592
      %v1625 = vadd.f32 %v1557, %v1593
      %v1626 = vadd.f32 %v1558, %v1594
      %v1627 = vadd.f32 %v1559, %v1595
      %v1628 = vadd.f32 %v1560, %v1596
      %v1629 = vadd.f32 %v1561, %v1597
      %v1630 = vadd.f32 %v1562, %v1598
      %v1631 = vadd.f32 %v1563, %v1599
      %v1632 = vadd.f32 %v1564, %v1600
      %v1633 = vadd.f32 %v1565, %v1601
      %v1634 = vadd.f32 %v1566, %v1602
      %v1635 = vlaneseq
      %v1636 = vshrl.u32 %v1635, 7
      %v1637 = vsub.s32 2, %v1636
      %v1638 = vrot.slane %v410, %v1637
      %v1639 = vmul.f32 %v1459, %v1638
      %v1640 = vmul.f32 %v1460, %v1638
      %v1641 = vmul.f32 %v1461, %v1638
      %v1642 = vmul.f32 %v1462, %v1638
      %v1643 = vmul.f32 %v1463, %v1638
      %v1644 = vmul.f32 %v1464, %v1638
      %v1645 = vmul.f32 %v1465, %v1638
      %v1646 = vmul.f32 %v1466, %v1638
      %v1647 = vmul.f32 %v1467, %v1638
      %v1648 = vmul.f32 %v1468, %v1638
      %v1649 = vmul.f32 %v1469, %v1638
      %v1650 = vmul.f32 %v1470, %v1638
      %v1651 = vmul.f32 %v1471, %v1638
      %v1652 = vmul.f32 %v1472, %v1638
      %v1653 = vmul.f32 %v1473, %v1638
      %v1654 = vmul.f32 %v1474, %v1638
      %v1655 = vmul.f32 %v1475, %v1638
      %v1656 = vmul.f32 %v1476, %v1638
      %v1657 = vmul.f32 %v1477, %v1638
      %v1658 = vmul.f32 %v1478, %v1638
      %v1659 = vmul.f32 %v1479, %v1638
      %v1660 = vmul.f32 %v1480, %v1638
      %v1661 = vmul.f32 %v1481, %v1638
      %v1662 = vmul.f32 %v1482, %v1638
      %v1663 = vmul.f32 %v1483, %v1638
      %v1664 = vmul.f32 %v1484, %v1638
      %v1665 = vmul.f32 %v1485, %v1638
      %v1666 = vmul.f32 %v1486, %v1638
      %v1667 = vmul.f32 %v1487, %v1638
      %v1668 = vmul.f32 %v1488, %v1638
      %v1669 = vmul.f32 %v1489, %v1638
      %v1670 = vmul.f32 %v1490, %v1638
      %v1671 = vadd.f32 %v1603, %v1639
      %v1672 = vadd.f32 %v1604, %v1640
      %v1673 = vadd.f32 %v1605, %v1641
      %v1674 = vadd.f32 %v1606, %v1642
      %v1675 = vadd.f32 %v1607, %v1643
      %v1676 = vadd.f32 %v1608, %v1644
      %v1677 = vadd.f32 %v1609, %v1645
      %v1678 = vadd.f32 %v1610, %v1646
      %v1679 = vadd.f32 %v1611, %v1647
      %v1680 = vadd.f32 %v1612, %v1648
      %v1681 = vadd.f32 %v1613, %v1649
      %v1682 = vadd.f32 %v1614, %v1650
      %v1683 = vadd.f32 %v1615, %v1651
      %v1684 = vadd.f32 %v1616, %v1652
      %v1685 = vadd.f32 %v1617, %v1653
      %v1686 = vadd.f32 %v1618, %v1654
      %v1687 = vadd.f32 %v1619, %v1655
      %v1688 = vadd.f32 %v1620, %v1656
      %v1689 = vadd.f32 %v1621, %v1657
      %v1690 = vadd.f32 %v1622, %v1658
      %v1691 = vadd.f32 %v1623, %v1659
      %v1692 = vadd.f32 %v1624, %v1660
      %v1693 = vadd.f32 %v1625, %v1661
      %v1694 = vadd.f32 %v1626, %v1662
      %v1695 = vadd.f32 %v1627, %v1663
      %v1696 = vadd.f32 %v1628, %v1664
      %v1697 = vadd.f32 %v1629, %v1665
      %v1698 = vadd.f32 %v1630, %v1666
      %v1699 = vadd.f32 %v1631, %v1667
      %v1700 = vadd.f32 %v1632, %v1668
      %v1701 = vadd.f32 %v1633, %v1669
      %v1702 = vadd.f32 %v1634, %v1670
      %v1703 = vlaneseq
      %v1704 = vshrl.u32 %v1703, 7
      %v1705 = vsub.s32 2, %v1704
      %v1706 = vrot.slane %v411, %v1705
      %v1707 = vmul.f32 %v1461, %v1706
      %v1708 = vmul.f32 %v1462, %v1706
      %v1709 = vmul.f32 %v1463, %v1706
      %v1710 = vmul.f32 %v1464, %v1706
      %v1711 = vmul.f32 %v1465, %v1706
      %v1712 = vmul.f32 %v1466, %v1706
      %v1713 = vmul.f32 %v1467, %v1706
      %v1714 = vmul.f32 %v1468, %v1706
      %v1715 = vmul.f32 %v1469, %v1706
      %v1716 = vmul.f32 %v1470, %v1706
      %v1717 = vmul.f32 %v1471, %v1706
      %v1718 = vmul.f32 %v1472, %v1706
      %v1719 = vmul.f32 %v1473, %v1706
      %v1720 = vmul.f32 %v1474, %v1706
      %v1721 = vmul.f32 %v1475, %v1706
      %v1722 = vmul.f32 %v1476, %v1706
      %v1723 = vmul.f32 %v1477, %v1706
      %v1724 = vmul.f32 %v1478, %v1706
      %v1725 = vmul.f32 %v1479, %v1706
      %v1726 = vmul.f32 %v1480, %v1706
      %v1727 = vmul.f32 %v1481, %v1706
      %v1728 = vmul.f32 %v1482, %v1706
      %v1729 = vmul.f32 %v1483, %v1706
      %v1730 = vmul.f32 %v1484, %v1706
      %v1731 = vmul.f32 %v1485, %v1706
      %v1732 = vmul.f32 %v1486, %v1706
      %v1733 = vmul.f32 %v1487, %v1706
      %v1734 = vmul.f32 %v1488, %v1706
      %v1735 = vmul.f32 %v1489, %v1706
      %v1736 = vmul.f32 %v1490, %v1706
      %v1737 = vmul.f32 %v1491, %v1706
      %v1738 = vmul.f32 %v1492, %v1706
      %v1739 = vadd.f32 %v1671, %v1707
      %v1740 = vadd.f32 %v1672, %v1708
      %v1741 = vadd.f32 %v1673, %v1709
      %v1742 = vadd.f32 %v1674, %v1710
      %v1743 = vadd.f32 %v1675, %v1711
      %v1744 = vadd.f32 %v1676, %v1712
      %v1745 = vadd.f32 %v1677, %v1713
      %v1746 = vadd.f32 %v1678, %v1714
      %v1747 = vadd.f32 %v1679, %v1715
      %v1748 = vadd.f32 %v1680, %v1716
      %v1749 = vadd.f32 %v1681, %v1717
      %v1750 = vadd.f32 %v1682, %v1718
      %v1751 = vadd.f32 %v1683, %v1719
      %v1752 = vadd.f32 %v1684, %v1720
      %v1753 = vadd.f32 %v1685, %v1721
      %v1754 = vadd.f32 %v1686, %v1722
      %v1755 = vadd.f32 %v1687, %v1723
      %v1756 = vadd.f32 %v1688, %v1724
      %v1757 = vadd.f32 %v1689, %v1725
      %v1758 = vadd.f32 %v1690, %v1726
      %v1759 = vadd.f32 %v1691, %v1727
      %v1760 = vadd.f32 %v1692, %v1728
      %v1761 = vadd.f32 %v1693, %v1729
      %v1762 = vadd.f32 %v1694, %v1730
      %v1763 = vadd.f32 %v1695, %v1731
      %v1764 = vadd.f32 %v1696, %v1732
      %v1765 = vadd.f32 %v1697, %v1733
      %v1766 = vadd.f32 %v1698, %v1734
      %v1767 = vadd.f32 %v1699, %v1735
      %v1768 = vadd.f32 %v1700, %v1736
      %v1769 = vadd.f32 %v1701, %v1737
      %v1770 = vadd.f32 %v1702, %v1738
      %v1771 = vlaneseq
      %v1772 = vshrl.u32 %v1771, 7
      %v1773 = vsub.s32 2, %v1772
      %v1774 = vrot.slane %v412, %v1773
      %v1775 = vmul.f32 %v1463, %v1774
      %v1776 = vmul.f32 %v1464, %v1774
      %v1777 = vmul.f32 %v1465, %v1774
      %v1778 = vmul.f32 %v1466, %v1774
      %v1779 = vmul.f32 %v1467, %v1774
      %v1780 = vmul.f32 %v1468, %v1774
      %v1781 = vmul.f32 %v1469, %v1774
      %v1782 = vmul.f32 %v1470, %v1774
      %v1783 = vmul.f32 %v1471, %v1774
      %v1784 = vmul.f32 %v1472, %v1774
      %v1785 = vmul.f32 %v1473, %v1774
      %v1786 = vmul.f32 %v1474, %v1774
      %v1787 = vmul.f32 %v1475, %v1774
      %v1788 = vmul.f32 %v1476, %v1774
      %v1789 = vmul.f32 %v1477, %v1774
      %v1790 = vmul.f32 %v1478, %v1774
      %v1791 = vmul.f32 %v1479, %v1774
      %v1792 = vmul.f32 %v1480, %v1774
      %v1793 = vmul.f32 %v1481, %v1774
      %v1794 = vmul.f32 %v1482, %v1774
      %v1795 = vmul.f32 %v1483, %v1774
      %v1796 = vmul.f32 %v1484, %v1774
      %v1797 = vmul.f32 %v1485, %v1774
      %v1798 = vmul.f32 %v1486, %v1774
      %v1799 = vmul.f32 %v1487, %v1774
      %v1800 = vmul.f32 %v1488, %v1774
      %v1801 = vmul.f32 %v1489, %v1774
      %v1802 = vmul.f32 %v1490, %v1774
      %v1803 = vmul.f32 %v1491, %v1774
      %v1804 = vmul.f32 %v1492, %v1774
      %v1805 = vmul.f32 %v1493, %v1774
      %v1806 = vmul.f32 %v1494, %v1774
      %v1807 = vadd.f32 %v1739, %v1775
      %v1808 = vadd.f32 %v1740, %v1776
      %v1809 = vadd.f32 %v1741, %v1777
      %v1810 = vadd.f32 %v1742, %v1778
      %v1811 = vadd.f32 %v1743, %v1779
      %v1812 = vadd.f32 %v1744, %v1780
      %v1813 = vadd.f32 %v1745, %v1781
      %v1814 = vadd.f32 %v1746, %v1782
      %v1815 = vadd.f32 %v1747, %v1783
      %v1816 = vadd.f32 %v1748, %v1784
      %v1817 = vadd.f32 %v1749, %v1785
      %v1818 = vadd.f32 %v1750, %v1786
      %v1819 = vadd.f32 %v1751, %v1787
      %v1820 = vadd.f32 %v1752, %v1788
      %v1821 = vadd.f32 %v1753, %v1789
      %v1822 = vadd.f32 %v1754, %v1790
      %v1823 = vadd.f32 %v1755, %v1791
      %v1824 = vadd.f32 %v1756, %v1792
      %v1825 = vadd.f32 %v1757, %v1793
      %v1826 = vadd.f32 %v1758, %v1794
      %v1827 = vadd.f32 %v1759, %v1795
      %v1828 = vadd.f32 %v1760, %v1796
      %v1829 = vadd.f32 %v1761, %v1797
      %v1830 = vadd.f32 %v1762, %v1798
      %v1831 = vadd.f32 %v1763, %v1799
      %v1832 = vadd.f32 %v1764, %v1800
      %v1833 = vadd.f32 %v1765, %v1801
      %v1834 = vadd.f32 %v1766, %v1802
      %v1835 = vadd.f32 %v1767, %v1803
      %v1836 = vadd.f32 %v1768, %v1804
      %v1837 = vadd.f32 %v1769, %v1805
      %v1838 = vadd.f32 %v1770, %v1806
      %v1839 = vlaneseq
      %v1840 = vshrl.u32 %v1839, 7
      %v1841 = vsub.s32 2, %v1840
      %v1842 = vrot.slane %v413, %v1841
      %v1843 = vmul.f32 %v1465, %v1842
      %v1844 = vmul.f32 %v1466, %v1842
      %v1845 = vmul.f32 %v1467, %v1842
      %v1846 = vmul.f32 %v1468, %v1842
      %v1847 = vmul.f32 %v1469, %v1842
      %v1848 = vmul.f32 %v1470, %v1842
      %v1849 = vmul.f32 %v1471, %v1842
      %v1850 = vmul.f32 %v1472, %v1842
      %v1851 = vmul.f32 %v1473, %v1842
      %v1852 = vmul.f32 %v1474, %v1842
      %v1853 = vmul.f32 %v1475, %v1842
      %v1854 = vmul.f32 %v1476, %v1842
      %v1855 = vmul.f32 %v1477, %v1842
      %v1856 = vmul.f32 %v1478, %v1842
      %v1857 = vmul.f32 %v1479, %v1842
      %v1858 = vmul.f32 %v1480, %v1842
      %v1859 = vmul.f32 %v1481, %v1842
      %v1860 = vmul.f32 %v1482, %v1842
      %v1861 = vmul.f32 %v1483, %v1842
      %v1862 = vmul.f32 %v1484, %v1842
      %v1863 = vmul.f32 %v1485, %v1842
      %v1864 = vmul.f32 %v1486, %v1842
      %v1865 = vmul.f32 %v1487, %v1842
      %v1866 = vmul.f32 %v1488, %v1842
      %v1867 = vmul.f32 %v1489, %v1842
      %v1868 = vmul.f32 %v1490, %v1842
      %v1869 = vmul.f32 %v1491, %v1842
      %v1870 = vmul.f32 %v1492, %v1842
      %v1871 = vmul.f32 %v1493, %v1842
      %v1872 = vmul.f32 %v1494, %v1842
      %v1873 = vmul.f32 %v1495, %v1842
      %v1874 = vmul.f32 %v1496, %v1842
      %v1875 = vadd.f32 %v1807, %v1843
      %v1876 = vadd.f32 %v1808, %v1844
      %v1877 = vadd.f32 %v1809, %v1845
      %v1878 = vadd.f32 %v1810, %v1846
      %v1879 = vadd.f32 %v1811, %v1847
      %v1880 = vadd.f32 %v1812, %v1848
      %v1881 = vadd.f32 %v1813, %v1849
      %v1882 = vadd.f32 %v1814, %v1850
      %v1883 = vadd.f32 %v1815, %v1851
      %v1884 = vadd.f32 %v1816, %v1852
      %v1885 = vadd.f32 %v1817, %v1853
      %v1886 = vadd.f32 %v1818, %v1854
      %v1887 = vadd.f32 %v1819, %v1855
      %v1888 = vadd.f32 %v1820, %v1856
      %v1889 = vadd.f32 %v1821, %v1857
      %v1890 = vadd.f32 %v1822, %v1858
      %v1891 = vadd.f32 %v1823, %v1859
      %v1892 = vadd.f32 %v1824, %v1860
      %v1893 = vadd.f32 %v1825, %v1861
      %v1894 = vadd.f32 %v1826, %v1862
      %v1895 = vadd.f32 %v1827, %v1863
      %v1896 = vadd.f32 %v1828, %v1864
      %v1897 = vadd.f32 %v1829, %v1865
      %v1898 = vadd.f32 %v1830, %v1866
      %v1899 = vadd.f32 %v1831, %v1867
      %v1900 = vadd.f32 %v1832, %v1868
      %v1901 = vadd.f32 %v1833, %v1869
      %v1902 = vadd.f32 %v1834, %v1870
      %v1903 = vadd.f32 %v1835, %v1871
      %v1904 = vadd.f32 %v1836, %v1872
      %v1905 = vadd.f32 %v1837, %v1873
      %v1906 = vadd.f32 %v1838, %v1874
      %v1907 = vlaneseq
      %v1908 = vshrl.u32 %v1907, 7
      %v1909 = vsub.s32 2, %v1908
      %v1910 = vrot.slane %v414, %v1909
      %v1911 = vmul.f32 %v1467, %v1910
      %v1912 = vmul.f32 %v1468, %v1910
      %v1913 = vmul.f32 %v1469, %v1910
      %v1914 = vmul.f32 %v1470, %v1910
      %v1915 = vmul.f32 %v1471, %v1910
      %v1916 = vmul.f32 %v1472, %v1910
      %v1917 = vmul.f32 %v1473, %v1910
      %v1918 = vmul.f32 %v1474, %v1910
      %v1919 = vmul.f32 %v1475, %v1910
      %v1920 = vmul.f32 %v1476, %v1910
      %v1921 = vmul.f32 %v1477, %v1910
      %v1922 = vmul.f32 %v1478, %v1910
      %v1923 = vmul.f32 %v1479, %v1910
      %v1924 = vmul.f32 %v1480, %v1910
      %v1925 = vmul.f32 %v1481, %v1910
      %v1926 = vmul.f32 %v1482, %v1910
      %v1927 = vmul.f32 %v1483, %v1910
      %v1928 = vmul.f32 %v1484, %v1910
      %v1929 = vmul.f32 %v1485, %v1910
      %v1930 = vmul.f32 %v1486, %v1910
      %v1931 = vmul.f32 %v1487, %v1910
      %v1932 = vmul.f32 %v1488, %v1910
      %v1933 = vmul.f32 %v1489, %v1910
      %v1934 = vmul.f32 %v1490, %v1910
      %v1935 = vmul.f32 %v1491, %v1910
      %v1936 = vmul.f32 %v1492, %v1910
      %v1937 = vmul.f32 %v1493, %v1910
      %v1938 = vmul.f32 %v1494, %v1910
      %v1939 = vmul.f32 %v1495, %v1910
      %v1940 = vmul.f32 %v1496, %v1910
      %v1941 = vmul.f32 %v1497, %v1910
      %v1942 = vmul.f32 %v1498, %v1910
      %v1943 = vadd.f32 %v1875, %v1911
      %v1944 = vadd.f32 %v1876, %v1912
      %v1945 = vadd.f32 %v1877, %v1913
      %v1946 = vadd.f32 %v1878, %v1914
      %v1947 = vadd.f32 %v1879, %v1915
      %v1948 = vadd.f32 %v1880, %v1916
      %v1949 = vadd.f32 %v1881, %v1917
      %v1950 = vadd.f32 %v1882, %v1918
      %v1951 = vadd.f32 %v1883, %v1919
      %v1952 = vadd.f32 %v1884, %v1920
      %v1953 = vadd.f32 %v1885, %v1921
      %v1954 = vadd.f32 %v1886, %v1922
      %v1955 = vadd.f32 %v1887, %v1923
      %v1956 = vadd.f32 %v1888, %v1924
      %v1957 = vadd.f32 %v1889, %v1925
      %v1958 = vadd.f32 %v1890, %v1926
      %v1959 = vadd.f32 %v1891, %v1927
      %v1960 = vadd.f32 %v1892, %v1928
      %v1961 = vadd.f32 %v1893, %v1929
      %v1962 = vadd.f32 %v1894, %v1930
      %v1963 = vadd.f32 %v1895, %v1931
      %v1964 = vadd.f32 %v1896, %v1932
      %v1965 = vadd.f32 %v1897, %v1933
      %v1966 = vadd.f32 %v1898, %v1934
      %v1967 = vadd.f32 %v1899, %v1935
      %v1968 = vadd.f32 %v1900, %v1936
      %v1969 = vadd.f32 %v1901, %v1937
      %v1970 = vadd.f32 %v1902, %v1938
      %v1971 = vadd.f32 %v1903, %v1939
      %v1972 = vadd.f32 %v1904, %v1940
      %v1973 = vadd.f32 %v1905, %v1941
      %v1974 = vadd.f32 %v1906, %v1942
      %v1975 = vld [vmem:[#allocation2 + $0x8] sm:$0xff]
      %v1976 = vld [vmem:[#allocation2 + $0x10] sm:$0xff]
      %v1977 = vld [vmem:[#allocation2 + $0x28] sm:$0xff]
      %v1978 = vld [vmem:[#allocation2 + $0x30] sm:$0xff]
      %v1979 = vld [vmem:[#allocation2 + $0x48] sm:$0xff]
      %v1980 = vld [vmem:[#allocation2 + $0x50] sm:$0xff]
      %v1981 = vld [vmem:[#allocation2 + $0x68] sm:$0xff]
      %v1982 = vld [vmem:[#allocation2 + $0x70] sm:$0xff]
      %v1983 = vld [vmem:[#allocation2 + $0x88] sm:$0xff]
      %v1984 = vld [vmem:[#allocation2 + $0x90] sm:$0xff]
      %v1985 = vld [vmem:[#allocation2 + $0xa8] sm:$0xff]
      %v1986 = vld [vmem:[#allocation2 + $0xb0] sm:$0xff]
      %v1987 = vld [vmem:[#allocation2 + $0xc8] sm:$0xff]
      %v1988 = vld [vmem:[#allocation2 + $0xd0] sm:$0xff]
      %v1989 = vld [vmem:[#allocation2 + $0xe8] sm:$0xff]
      %v1990 = vld [vmem:[#allocation2 + $0xf0] sm:$0xff]
      %v1991 = vld [vmem:[#allocation2 + $0x108] sm:$0xff]
      %v1992 = vld [vmem:[#allocation2 + $0x110] sm:$0xff]
      %v1993 = vld [vmem:[#allocation2 + $0x128] sm:$0xff]
      %v1994 = vld [vmem:[#allocation2 + $0x130] sm:$0xff]
      %v1995 = vld [vmem:[#allocation2 + $0x148] sm:$0xff]
      %v1996 = vld [vmem:[#allocation2 + $0x150] sm:$0xff]
      %v1997 = vld [vmem:[#allocation2 + $0x168] sm:$0xff]
      %v1998 = vld [vmem:[#allocation2 + $0x170] sm:$0xff]
      %v1999 = vld [vmem:[#allocation2 + $0x188] sm:$0xff]
      %v2000 = vld [vmem:[#allocation2 + $0x190] sm:$0xff]
      %v2001 = vld [vmem:[#allocation2 + $0x1a8] sm:$0xff]
      %v2002 = vld [vmem:[#allocation2 + $0x1b0] sm:$0xff]
      %v2003 = vld [vmem:[#allocation2 + $0x1c8] sm:$0xff]
      %v2004 = vld [vmem:[#allocation2 + $0x1d0] sm:$0xff]
      %v2005 = vld [vmem:[#allocation2 + $0x1e8] sm:$0xff]
      %v2006 = vld [vmem:[#allocation2 + $0x1f0] sm:$0xff]
      %v2007 = vld [vmem:[#allocation2 + $0x208] sm:$0xff]
      %v2008 = vld [vmem:[#allocation2 + $0x210] sm:$0xff]
      %v2009 = vld [vmem:[#allocation2 + $0x228] sm:$0xff]
      %v2010 = vld [vmem:[#allocation2 + $0x230] sm:$0xff]
      %v2011 = vld [vmem:[#allocation2 + $0x248] sm:$0xff]
      %v2012 = vld [vmem:[#allocation2 + $0x250] sm:$0xff]
      %v2013 = vld [vmem:[#allocation2 + $0x268] sm:$0xff]
      %v2014 = vld [vmem:[#allocation2 + $0x270] sm:$0xff]
      %v2015 = vld [vmem:[#allocation2 + $0x288] sm:$0xff]
      %v2016 = vld [vmem:[#allocation2 + $0x290] sm:$0xff]
      %v2017 = vld [vmem:[#allocation2 + $0x2a8] sm:$0xff]
      %v2018 = vld [vmem:[#allocation2 + $0x2b0] sm:$0xff]
      %v2019 = vlaneseq
      %v2020 = vshrl.u32 %v2019, 7
      %v2021 = vsub.s32 3, %v2020
      %v2022 = vrot.slane %v408, %v2021
      %v2023 = vmul.f32 %v1975, %v2022
      %v2024 = vmul.f32 %v1976, %v2022
      %v2025 = vmul.f32 %v1977, %v2022
      %v2026 = vmul.f32 %v1978, %v2022
      %v2027 = vmul.f32 %v1979, %v2022
      %v2028 = vmul.f32 %v1980, %v2022
      %v2029 = vmul.f32 %v1981, %v2022
      %v2030 = vmul.f32 %v1982, %v2022
      %v2031 = vmul.f32 %v1983, %v2022
      %v2032 = vmul.f32 %v1984, %v2022
      %v2033 = vmul.f32 %v1985, %v2022
      %v2034 = vmul.f32 %v1986, %v2022
      %v2035 = vmul.f32 %v1987, %v2022
      %v2036 = vmul.f32 %v1988, %v2022
      %v2037 = vmul.f32 %v1989, %v2022
      %v2038 = vmul.f32 %v1990, %v2022
      %v2039 = vmul.f32 %v1991, %v2022
      %v2040 = vmul.f32 %v1992, %v2022
      %v2041 = vmul.f32 %v1993, %v2022
      %v2042 = vmul.f32 %v1994, %v2022
      %v2043 = vmul.f32 %v1995, %v2022
      %v2044 = vmul.f32 %v1996, %v2022
      %v2045 = vmul.f32 %v1997, %v2022
      %v2046 = vmul.f32 %v1998, %v2022
      %v2047 = vmul.f32 %v1999, %v2022
      %v2048 = vmul.f32 %v2000, %v2022
      %v2049 = vmul.f32 %v2001, %v2022
      %v2050 = vmul.f32 %v2002, %v2022
      %v2051 = vmul.f32 %v2003, %v2022
      %v2052 = vmul.f32 %v2004, %v2022
      %v2053 = vmul.f32 %v2005, %v2022
      %v2054 = vmul.f32 %v2006, %v2022
      %v2055 = vadd.f32 %v1943, %v2023
      %v2056 = vadd.f32 %v1944, %v2024
      %v2057 = vadd.f32 %v1945, %v2025
      %v2058 = vadd.f32 %v1946, %v2026
      %v2059 = vadd.f32 %v1947, %v2027
      %v2060 = vadd.f32 %v1948, %v2028
      %v2061 = vadd.f32 %v1949, %v2029
      %v2062 = vadd.f32 %v1950, %v2030
      %v2063 = vadd.f32 %v1951, %v2031
      %v2064 = vadd.f32 %v1952, %v2032
      %v2065 = vadd.f32 %v1953, %v2033
      %v2066 = vadd.f32 %v1954, %v2034
      %v2067 = vadd.f32 %v1955, %v2035
      %v2068 = vadd.f32 %v1956, %v2036
      %v2069 = vadd.f32 %v1957, %v2037
      %v2070 = vadd.f32 %v1958, %v2038
      %v2071 = vadd.f32 %v1959, %v2039
      %v2072 = vadd.f32 %v1960, %v2040
      %v2073 = vadd.f32 %v1961, %v2041
      %v2074 = vadd.f32 %v1962, %v2042
      %v2075 = vadd.f32 %v1963, %v2043
      %v2076 = vadd.f32 %v1964, %v2044
      %v2077 = vadd.f32 %v1965, %v2045
      %v2078 = vadd.f32 %v1966, %v2046
      %v2079 = vadd.f32 %v1967, %v2047
      %v2080 = vadd.f32 %v1968, %v2048
      %v2081 = vadd.f32 %v1969, %v2049
      %v2082 = vadd.f32 %v1970, %v2050
      %v2083 = vadd.f32 %v1971, %v2051
      %v2084 = vadd.f32 %v1972, %v2052
      %v2085 = vadd.f32 %v1973, %v2053
      %v2086 = vadd.f32 %v1974, %v2054
      %v2087 = vlaneseq
      %v2088 = vshrl.u32 %v2087, 7
      %v2089 = vsub.s32 3, %v2088
      %v2090 = vrot.slane %v409, %v2089
      %v2091 = vmul.f32 %v1977, %v2090
      %v2092 = vmul.f32 %v1978, %v2090
      %v2093 = vmul.f32 %v1979, %v2090
      %v2094 = vmul.f32 %v1980, %v2090
      %v2095 = vmul.f32 %v1981, %v2090
      %v2096 = vmul.f32 %v1982, %v2090
      %v2097 = vmul.f32 %v1983, %v2090
      %v2098 = vmul.f32 %v1984, %v2090
      %v2099 = vmul.f32 %v1985, %v2090
      %v2100 = vmul.f32 %v1986, %v2090
      %v2101 = vmul.f32 %v1987, %v2090
      %v2102 = vmul.f32 %v1988, %v2090
      %v2103 = vmul.f32 %v1989, %v2090
      %v2104 = vmul.f32 %v1990, %v2090
      %v2105 = vmul.f32 %v1991, %v2090
      %v2106 = vmul.f32 %v1992, %v2090
      %v2107 = vmul.f32 %v1993, %v2090
      %v2108 = vmul.f32 %v1994, %v2090
      %v2109 = vmul.f32 %v1995, %v2090
      %v2110 = vmul.f32 %v1996, %v2090
      %v2111 = vmul.f32 %v1997, %v2090
      %v2112 = vmul.f32 %v1998, %v2090
      %v2113 = vmul.f32 %v1999, %v2090
      %v2114 = vmul.f32 %v2000, %v2090
      %v2115 = vmul.f32 %v2001, %v2090
      %v2116 = vmul.f32 %v2002, %v2090
      %v2117 = vmul.f32 %v2003, %v2090
      %v2118 = vmul.f32 %v2004, %v2090
      %v2119 = vmul.f32 %v2005, %v2090
      %v2120 = vmul.f32 %v2006, %v2090
      %v2121 = vmul.f32 %v2007, %v2090
      %v2122 = vmul.f32 %v2008, %v2090
      %v2123 = vadd.f32 %v2055, %v2091
      %v2124 = vadd.f32 %v2056, %v2092
      %v2125 = vadd.f32 %v2057, %v2093
      %v2126 = vadd.f32 %v2058, %v2094
      %v2127 = vadd.f32 %v2059, %v2095
      %v2128 = vadd.f32 %v2060, %v2096
      %v2129 = vadd.f32 %v2061, %v2097
      %v2130 = vadd.f32 %v2062, %v2098
      %v2131 = vadd.f32 %v2063, %v2099
      %v2132 = vadd.f32 %v2064, %v2100
      %v2133 = vadd.f32 %v2065, %v2101
      %v2134 = vadd.f32 %v2066, %v2102
      %v2135 = vadd.f32 %v2067, %v2103
      %v2136 = vadd.f32 %v2068, %v2104
      %v2137 = vadd.f32 %v2069, %v2105
      %v2138 = vadd.f32 %v2070, %v2106
      %v2139 = vadd.f32 %v2071, %v2107
      %v2140 = vadd.f32 %v2072, %v2108
      %v2141 = vadd.f32 %v2073, %v2109
      %v2142 = vadd.f32 %v2074, %v2110
      %v2143 = vadd.f32 %v2075, %v2111
      %v2144 = vadd.f32 %v2076, %v2112
      %v2145 = vadd.f32 %v2077, %v2113
      %v2146 = vadd.f32 %v2078, %v2114
      %v2147 = vadd.f32 %v2079, %v2115
      %v2148 = vadd.f32 %v2080, %v2116
      %v2149 = vadd.f32 %v2081, %v2117
      %v2150 = vadd.f32 %v2082, %v2118
      %v2151 = vadd.f32 %v2083, %v2119
      %v2152 = vadd.f32 %v2084, %v2120
      %v2153 = vadd.f32 %v2085, %v2121
      %v2154 = vadd.f32 %v2086, %v2122
      %v2155 = vlaneseq
      %v2156 = vshrl.u32 %v2155, 7
      %v2157 = vsub.s32 3, %v2156
      %v2158 = vrot.slane %v410, %v2157
      %v2159 = vmul.f32 %v1979, %v2158
      %v2160 = vmul.f32 %v1980, %v2158
      %v2161 = vmul.f32 %v1981, %v2158
      %v2162 = vmul.f32 %v1982, %v2158
      %v2163 = vmul.f32 %v1983, %v2158
      %v2164 = vmul.f32 %v1984, %v2158
      %v2165 = vmul.f32 %v1985, %v2158
      %v2166 = vmul.f32 %v1986, %v2158
      %v2167 = vmul.f32 %v1987, %v2158
      %v2168 = vmul.f32 %v1988, %v2158
      %v2169 = vmul.f32 %v1989, %v2158
      %v2170 = vmul.f32 %v1990, %v2158
      %v2171 = vmul.f32 %v1991, %v2158
      %v2172 = vmul.f32 %v1992, %v2158
      %v2173 = vmul.f32 %v1993, %v2158
      %v2174 = vmul.f32 %v1994, %v2158
      %v2175 = vmul.f32 %v1995, %v2158
      %v2176 = vmul.f32 %v1996, %v2158
      %v2177 = vmul.f32 %v1997, %v2158
      %v2178 = vmul.f32 %v1998, %v2158
      %v2179 = vmul.f32 %v1999, %v2158
      %v2180 = vmul.f32 %v2000, %v2158
      %v2181 = vmul.f32 %v2001, %v2158
      %v2182 = vmul.f32 %v2002, %v2158
      %v2183 = vmul.f32 %v2003, %v2158
      %v2184 = vmul.f32 %v2004, %v2158
      %v2185 = vmul.f32 %v2005, %v2158
      %v2186 = vmul.f32 %v2006, %v2158
      %v2187 = vmul.f32 %v2007, %v2158
      %v2188 = vmul.f32 %v2008, %v2158
      %v2189 = vmul.f32 %v2009, %v2158
      %v2190 = vmul.f32 %v2010, %v2158
      %v2191 = vadd.f32 %v2123, %v2159
      %v2192 = vadd.f32 %v2124, %v2160
      %v2193 = vadd.f32 %v2125, %v2161
      %v2194 = vadd.f32 %v2126, %v2162
      %v2195 = vadd.f32 %v2127, %v2163
      %v2196 = vadd.f32 %v2128, %v2164
      %v2197 = vadd.f32 %v2129, %v2165
      %v2198 = vadd.f32 %v2130, %v2166
      %v2199 = vadd.f32 %v2131, %v2167
      %v2200 = vadd.f32 %v2132, %v2168
      %v2201 = vadd.f32 %v2133, %v2169
      %v2202 = vadd.f32 %v2134, %v2170
      %v2203 = vadd.f32 %v2135, %v2171
      %v2204 = vadd.f32 %v2136, %v2172
      %v2205 = vadd.f32 %v2137, %v2173
      %v2206 = vadd.f32 %v2138, %v2174
      %v2207 = vadd.f32 %v2139, %v2175
      %v2208 = vadd.f32 %v2140, %v2176
      %v2209 = vadd.f32 %v2141, %v2177
      %v2210 = vadd.f32 %v2142, %v2178
      %v2211 = vadd.f32 %v2143, %v2179
      %v2212 = vadd.f32 %v2144, %v2180
      %v2213 = vadd.f32 %v2145, %v2181
      %v2214 = vadd.f32 %v2146, %v2182
      %v2215 = vadd.f32 %v2147, %v2183
      %v2216 = vadd.f32 %v2148, %v2184
      %v2217 = vadd.f32 %v2149, %v2185
      %v2218 = vadd.f32 %v2150, %v2186
      %v2219 = vadd.f32 %v2151, %v2187
      %v2220 = vadd.f32 %v2152, %v2188
      %v2221 = vadd.f32 %v2153, %v2189
      %v2222 = vadd.f32 %v2154, %v2190
      %v2223 = vlaneseq
      %v2224 = vshrl.u32 %v2223, 7
      %v2225 = vsub.s32 3, %v2224
      %v2226 = vrot.slane %v411, %v2225
      %v2227 = vmul.f32 %v1981, %v2226
      %v2228 = vmul.f32 %v1982, %v2226
      %v2229 = vmul.f32 %v1983, %v2226
      %v2230 = vmul.f32 %v1984, %v2226
      %v2231 = vmul.f32 %v1985, %v2226
      %v2232 = vmul.f32 %v1986, %v2226
      %v2233 = vmul.f32 %v1987, %v2226
      %v2234 = vmul.f32 %v1988, %v2226
      %v2235 = vmul.f32 %v1989, %v2226
      %v2236 = vmul.f32 %v1990, %v2226
      %v2237 = vmul.f32 %v1991, %v2226
      %v2238 = vmul.f32 %v1992, %v2226
      %v2239 = vmul.f32 %v1993, %v2226
      %v2240 = vmul.f32 %v1994, %v2226
      %v2241 = vmul.f32 %v1995, %v2226
      %v2242 = vmul.f32 %v1996, %v2226
      %v2243 = vmul.f32 %v1997, %v2226
      %v2244 = vmul.f32 %v1998, %v2226
      %v2245 = vmul.f32 %v1999, %v2226
      %v2246 = vmul.f32 %v2000, %v2226
      %v2247 = vmul.f32 %v2001, %v2226
      %v2248 = vmul.f32 %v2002, %v2226
      %v2249 = vmul.f32 %v2003, %v2226
      %v2250 = vmul.f32 %v2004, %v2226
      %v2251 = vmul.f32 %v2005, %v2226
      %v2252 = vmul.f32 %v2006, %v2226
      %v2253 = vmul.f32 %v2007, %v2226
      %v2254 = vmul.f32 %v2008, %v2226
      %v2255 = vmul.f32 %v2009, %v2226
      %v2256 = vmul.f32 %v2010, %v2226
      %v2257 = vmul.f32 %v2011, %v2226
      %v2258 = vmul.f32 %v2012, %v2226
      %v2259 = vadd.f32 %v2191, %v2227
      %v2260 = vadd.f32 %v2192, %v2228
      %v2261 = vadd.f32 %v2193, %v2229
      %v2262 = vadd.f32 %v2194, %v2230
      %v2263 = vadd.f32 %v2195, %v2231
      %v2264 = vadd.f32 %v2196, %v2232
      %v2265 = vadd.f32 %v2197, %v2233
      %v2266 = vadd.f32 %v2198, %v2234
      %v2267 = vadd.f32 %v2199, %v2235
      %v2268 = vadd.f32 %v2200, %v2236
      %v2269 = vadd.f32 %v2201, %v2237
      %v2270 = vadd.f32 %v2202, %v2238
      %v2271 = vadd.f32 %v2203, %v2239
      %v2272 = vadd.f32 %v2204, %v2240
      %v2273 = vadd.f32 %v2205, %v2241
      %v2274 = vadd.f32 %v2206, %v2242
      %v2275 = vadd.f32 %v2207, %v2243
      %v2276 = vadd.f32 %v2208, %v2244
      %v2277 = vadd.f32 %v2209, %v2245
      %v2278 = vadd.f32 %v2210, %v2246
      %v2279 = vadd.f32 %v2211, %v2247
      %v2280 = vadd.f32 %v2212, %v2248
      %v2281 = vadd.f32 %v2213, %v2249
      %v2282 = vadd.f32 %v2214, %v2250
      %v2283 = vadd.f32 %v2215, %v2251
      %v2284 = vadd.f32 %v2216, %v2252
      %v2285 = vadd.f32 %v2217, %v2253
      %v2286 = vadd.f32 %v2218, %v2254
      %v2287 = vadd.f32 %v2219, %v2255
      %v2288 = vadd.f32 %v2220, %v2256
      %v2289 = vadd.f32 %v2221, %v2257
      %v2290 = vadd.f32 %v2222, %v2258
      %v2291 = vlaneseq
      %v2292 = vshrl.u32 %v2291, 7
      %v2293 = vsub.s32 3, %v2292
      %v2294 = vrot.slane %v412, %v2293
      %v2295 = vmul.f32 %v1983, %v2294
      %v2296 = vmul.f32 %v1984, %v2294
      %v2297 = vmul.f32 %v1985, %v2294
      %v2298 = vmul.f32 %v1986, %v2294
      %v2299 = vmul.f32 %v1987, %v2294
      %v2300 = vmul.f32 %v1988, %v2294
      %v2301 = vmul.f32 %v1989, %v2294
      %v2302 = vmul.f32 %v1990, %v2294
      %v2303 = vmul.f32 %v1991, %v2294
      %v2304 = vmul.f32 %v1992, %v2294
      %v2305 = vmul.f32 %v1993, %v2294
      %v2306 = vmul.f32 %v1994, %v2294
      %v2307 = vmul.f32 %v1995, %v2294
      %v2308 = vmul.f32 %v1996, %v2294
      %v2309 = vmul.f32 %v1997, %v2294
      %v2310 = vmul.f32 %v1998, %v2294
      %v2311 = vmul.f32 %v1999, %v2294
      %v2312 = vmul.f32 %v2000, %v2294
      %v2313 = vmul.f32 %v2001, %v2294
      %v2314 = vmul.f32 %v2002, %v2294
      %v2315 = vmul.f32 %v2003, %v2294
      %v2316 = vmul.f32 %v2004, %v2294
      %v2317 = vmul.f32 %v2005, %v2294
      %v2318 = vmul.f32 %v2006, %v2294
      %v2319 = vmul.f32 %v2007, %v2294
      %v2320 = vmul.f32 %v2008, %v2294
      %v2321 = vmul.f32 %v2009, %v2294
      %v2322 = vmul.f32 %v2010, %v2294
      %v2323 = vmul.f32 %v2011, %v2294
      %v2324 = vmul.f32 %v2012, %v2294
      %v2325 = vmul.f32 %v2013, %v2294
      %v2326 = vmul.f32 %v2014, %v2294
      %v2327 = vadd.f32 %v2259, %v2295
      %v2328 = vadd.f32 %v2260, %v2296
      %v2329 = vadd.f32 %v2261, %v2297
      %v2330 = vadd.f32 %v2262, %v2298
      %v2331 = vadd.f32 %v2263, %v2299
      %v2332 = vadd.f32 %v2264, %v2300
      %v2333 = vadd.f32 %v2265, %v2301
      %v2334 = vadd.f32 %v2266, %v2302
      %v2335 = vadd.f32 %v2267, %v2303
      %v2336 = vadd.f32 %v2268, %v2304
      %v2337 = vadd.f32 %v2269, %v2305
      %v2338 = vadd.f32 %v2270, %v2306
      %v2339 = vadd.f32 %v2271, %v2307
      %v2340 = vadd.f32 %v2272, %v2308
      %v2341 = vadd.f32 %v2273, %v2309
      %v2342 = vadd.f32 %v2274, %v2310
      %v2343 = vadd.f32 %v2275, %v2311
      %v2344 = vadd.f32 %v2276, %v2312
      %v2345 = vadd.f32 %v2277, %v2313
      %v2346 = vadd.f32 %v2278, %v2314
      %v2347 = vadd.f32 %v2279, %v2315
      %v2348 = vadd.f32 %v2280, %v2316
      %v2349 = vadd.f32 %v2281, %v2317
      %v2350 = vadd.f32 %v2282, %v2318
      %v2351 = vadd.f32 %v2283, %v2319
      %v2352 = vadd.f32 %v2284, %v2320
      %v2353 = vadd.f32 %v2285, %v2321
      %v2354 = vadd.f32 %v2286, %v2322
      %v2355 = vadd.f32 %v2287, %v2323
      %v2356 = vadd.f32 %v2288, %v2324
      %v2357 = vadd.f32 %v2289, %v2325
      %v2358 = vadd.f32 %v2290, %v2326
      %v2359 = vlaneseq
      %v2360 = vshrl.u32 %v2359, 7
      %v2361 = vsub.s32 3, %v2360
      %v2362 = vrot.slane %v413, %v2361
      %v2363 = vmul.f32 %v1985, %v2362
      %v2364 = vmul.f32 %v1986, %v2362
      %v2365 = vmul.f32 %v1987, %v2362
      %v2366 = vmul.f32 %v1988, %v2362
      %v2367 = vmul.f32 %v1989, %v2362
      %v2368 = vmul.f32 %v1990, %v2362
      %v2369 = vmul.f32 %v1991, %v2362
      %v2370 = vmul.f32 %v1992, %v2362
      %v2371 = vmul.f32 %v1993, %v2362
      %v2372 = vmul.f32 %v1994, %v2362
      %v2373 = vmul.f32 %v1995, %v2362
      %v2374 = vmul.f32 %v1996, %v2362
      %v2375 = vmul.f32 %v1997, %v2362
      %v2376 = vmul.f32 %v1998, %v2362
      %v2377 = vmul.f32 %v1999, %v2362
      %v2378 = vmul.f32 %v2000, %v2362
      %v2379 = vmul.f32 %v2001, %v2362
      %v2380 = vmul.f32 %v2002, %v2362
      %v2381 = vmul.f32 %v2003, %v2362
      %v2382 = vmul.f32 %v2004, %v2362
      %v2383 = vmul.f32 %v2005, %v2362
      %v2384 = vmul.f32 %v2006, %v2362
      %v2385 = vmul.f32 %v2007, %v2362
      %v2386 = vmul.f32 %v2008, %v2362
      %v2387 = vmul.f32 %v2009, %v2362
      %v2388 = vmul.f32 %v2010, %v2362
      %v2389 = vmul.f32 %v2011, %v2362
      %v2390 = vmul.f32 %v2012, %v2362
      %v2391 = vmul.f32 %v2013, %v2362
      %v2392 = vmul.f32 %v2014, %v2362
      %v2393 = vmul.f32 %v2015, %v2362
      %v2394 = vmul.f32 %v2016, %v2362
      %v2395 = vadd.f32 %v2327, %v2363
      %v2396 = vadd.f32 %v2328, %v2364
      %v2397 = vadd.f32 %v2329, %v2365
      %v2398 = vadd.f32 %v2330, %v2366
      %v2399 = vadd.f32 %v2331, %v2367
      %v2400 = vadd.f32 %v2332, %v2368
      %v2401 = vadd.f32 %v2333, %v2369
      %v2402 = vadd.f32 %v2334, %v2370
      %v2403 = vadd.f32 %v2335, %v2371
      %v2404 = vadd.f32 %v2336, %v2372
      %v2405 = vadd.f32 %v2337, %v2373
      %v2406 = vadd.f32 %v2338, %v2374
      %v2407 = vadd.f32 %v2339, %v2375
      %v2408 = vadd.f32 %v2340, %v2376
      %v2409 = vadd.f32 %v2341, %v2377
      %v2410 = vadd.f32 %v2342, %v2378
      %v2411 = vadd.f32 %v2343, %v2379
      %v2412 = vadd.f32 %v2344, %v2380
      %v2413 = vadd.f32 %v2345, %v2381
      %v2414 = vadd.f32 %v2346, %v2382
      %v2415 = vadd.f32 %v2347, %v2383
      %v2416 = vadd.f32 %v2348, %v2384
      %v2417 = vadd.f32 %v2349, %v2385
      %v2418 = vadd.f32 %v2350, %v2386
      %v2419 = vadd.f32 %v2351, %v2387
      %v2420 = vadd.f32 %v2352, %v2388
      %v2421 = vadd.f32 %v2353, %v2389
      %v2422 = vadd.f32 %v2354, %v2390
      %v2423 = vadd.f32 %v2355, %v2391
      %v2424 = vadd.f32 %v2356, %v2392
      %v2425 = vadd.f32 %v2357, %v2393
      %v2426 = vadd.f32 %v2358, %v2394
      %v2427 = vlaneseq
      %v2428 = vshrl.u32 %v2427, 7
      %v2429 = vsub.s32 3, %v2428
      %v2430 = vrot.slane %v414, %v2429
      %v2431 = vmul.f32 %v1987, %v2430
      %v2432 = vmul.f32 %v1988, %v2430
      %v2433 = vmul.f32 %v1989, %v2430
      %v2434 = vmul.f32 %v1990, %v2430
      %v2435 = vmul.f32 %v1991, %v2430
      %v2436 = vmul.f32 %v1992, %v2430
      %v2437 = vmul.f32 %v1993, %v2430
      %v2438 = vmul.f32 %v1994, %v2430
      %v2439 = vmul.f32 %v1995, %v2430
      %v2440 = vmul.f32 %v1996, %v2430
      %v2441 = vmul.f32 %v1997, %v2430
      %v2442 = vmul.f32 %v1998, %v2430
      %v2443 = vmul.f32 %v1999, %v2430
      %v2444 = vmul.f32 %v2000, %v2430
      %v2445 = vmul.f32 %v2001, %v2430
      %v2446 = vmul.f32 %v2002, %v2430
      %v2447 = vmul.f32 %v2003, %v2430
      %v2448 = vmul.f32 %v2004, %v2430
      %v2449 = vmul.f32 %v2005, %v2430
      %v2450 = vmul.f32 %v2006, %v2430
      %v2451 = vmul.f32 %v2007, %v2430
      %v2452 = vmul.f32 %v2008, %v2430
      %v2453 = vmul.f32 %v2009, %v2430
      %v2454 = vmul.f32 %v2010, %v2430
      %v2455 = vmul.f32 %v2011, %v2430
      %v2456 = vmul.f32 %v2012, %v2430
      %v2457 = vmul.f32 %v2013, %v2430
      %v2458 = vmul.f32 %v2014, %v2430
      %v2459 = vmul.f32 %v2015, %v2430
      %v2460 = vmul.f32 %v2016, %v2430
      %v2461 = vmul.f32 %v2017, %v2430
      %v2462 = vmul.f32 %v2018, %v2430
      %v2463 = vadd.f32 %v2395, %v2431
      %v2464 = vadd.f32 %v2396, %v2432
      %v2465 = vadd.f32 %v2397, %v2433
      %v2466 = vadd.f32 %v2398, %v2434
      %v2467 = vadd.f32 %v2399, %v2435
      %v2468 = vadd.f32 %v2400, %v2436
      %v2469 = vadd.f32 %v2401, %v2437
      %v2470 = vadd.f32 %v2402, %v2438
      %v2471 = vadd.f32 %v2403, %v2439
      %v2472 = vadd.f32 %v2404, %v2440
      %v2473 = vadd.f32 %v2405, %v2441
      %v2474 = vadd.f32 %v2406, %v2442
      %v2475 = vadd.f32 %v2407, %v2443
      %v2476 = vadd.f32 %v2408, %v2444
      %v2477 = vadd.f32 %v2409, %v2445
      %v2478 = vadd.f32 %v2410, %v2446
      %v2479 = vadd.f32 %v2411, %v2447
      %v2480 = vadd.f32 %v2412, %v2448
      %v2481 = vadd.f32 %v2413, %v2449
      %v2482 = vadd.f32 %v2414, %v2450
      %v2483 = vadd.f32 %v2415, %v2451
      %v2484 = vadd.f32 %v2416, %v2452
      %v2485 = vadd.f32 %v2417, %v2453
      %v2486 = vadd.f32 %v2418, %v2454
      %v2487 = vadd.f32 %v2419, %v2455
      %v2488 = vadd.f32 %v2420, %v2456
      %v2489 = vadd.f32 %v2421, %v2457
      %v2490 = vadd.f32 %v2422, %v2458
      %v2491 = vadd.f32 %v2423, %v2459
      %v2492 = vadd.f32 %v2424, %v2460
      %v2493 = vadd.f32 %v2425, %v2461
      %v2494 = vadd.f32 %v2426, %v2462
      %v2495 = vld [vmem:[#allocation2 + $0x9] sm:$0xff]
      %v2496 = vld [vmem:[#allocation2 + $0x11] sm:$0xff]
      %v2497 = vld [vmem:[#allocation2 + $0x29] sm:$0xff]
      %v2498 = vld [vmem:[#allocation2 + $0x31] sm:$0xff]
      %v2499 = vld [vmem:[#allocation2 + $0x49] sm:$0xff]
      %v2500 = vld [vmem:[#allocation2 + $0x51] sm:$0xff]
      %v2501 = vld [vmem:[#allocation2 + $0x69] sm:$0xff]
      %v2502 = vld [vmem:[#allocation2 + $0x71] sm:$0xff]
      %v2503 = vld [vmem:[#allocation2 + $0x89] sm:$0xff]
      %v2504 = vld [vmem:[#allocation2 + $0x91] sm:$0xff]
      %v2505 = vld [vmem:[#allocation2 + $0xa9] sm:$0xff]
      %v2506 = vld [vmem:[#allocation2 + $0xb1] sm:$0xff]
      %v2507 = vld [vmem:[#allocation2 + $0xc9] sm:$0xff]
      %v2508 = vld [vmem:[#allocation2 + $0xd1] sm:$0xff]
      %v2509 = vld [vmem:[#allocation2 + $0xe9] sm:$0xff]
      %v2510 = vld [vmem:[#allocation2 + $0xf1] sm:$0xff]
      %v2511 = vld [vmem:[#allocation2 + $0x109] sm:$0xff]
      %v2512 = vld [vmem:[#allocation2 + $0x111] sm:$0xff]
      %v2513 = vld [vmem:[#allocation2 + $0x129] sm:$0xff]
      %v2514 = vld [vmem:[#allocation2 + $0x131] sm:$0xff]
      %v2515 = vld [vmem:[#allocation2 + $0x149] sm:$0xff]
      %v2516 = vld [vmem:[#allocation2 + $0x151] sm:$0xff]
      %v2517 = vld [vmem:[#allocation2 + $0x169] sm:$0xff]
      %v2518 = vld [vmem:[#allocation2 + $0x171] sm:$0xff]
      %v2519 = vld [vmem:[#allocation2 + $0x189] sm:$0xff]
      %v2520 = vld [vmem:[#allocation2 + $0x191] sm:$0xff]
      %v2521 = vld [vmem:[#allocation2 + $0x1a9] sm:$0xff]
      %v2522 = vld [vmem:[#allocation2 + $0x1b1] sm:$0xff]
      %v2523 = vld [vmem:[#allocation2 + $0x1c9] sm:$0xff]
      %v2524 = vld [vmem:[#allocation2 + $0x1d1] sm:$0xff]
      %v2525 = vld [vmem:[#allocation2 + $0x1e9] sm:$0xff]
      %v2526 = vld [vmem:[#allocation2 + $0x1f1] sm:$0xff]
      %v2527 = vld [vmem:[#allocation2 + $0x209] sm:$0xff]
      %v2528 = vld [vmem:[#allocation2 + $0x211] sm:$0xff]
      %v2529 = vld [vmem:[#allocation2 + $0x229] sm:$0xff]
      %v2530 = vld [vmem:[#allocation2 + $0x231] sm:$0xff]
      %v2531 = vld [vmem:[#allocation2 + $0x249] sm:$0xff]
      %v2532 = vld [vmem:[#allocation2 + $0x251] sm:$0xff]
      %v2533 = vld [vmem:[#allocation2 + $0x269] sm:$0xff]
      %v2534 = vld [vmem:[#allocation2 + $0x271] sm:$0xff]
      %v2535 = vld [vmem:[#allocation2 + $0x289] sm:$0xff]
      %v2536 = vld [vmem:[#allocation2 + $0x291] sm:$0xff]
      %v2537 = vld [vmem:[#allocation2 + $0x2a9] sm:$0xff]
      %v2538 = vld [vmem:[#allocation2 + $0x2b1] sm:$0xff]
      %v2539 = vlaneseq
      %v2540 = vshrl.u32 %v2539, 7
      %v2541 = vsub.s32 4, %v2540
      %v2542 = vrot.slane %v408, %v2541
      %v2543 = vmul.f32 %v2495, %v2542
      %v2544 = vmul.f32 %v2496, %v2542
      %v2545 = vmul.f32 %v2497, %v2542
      %v2546 = vmul.f32 %v2498, %v2542
      %v2547 = vmul.f32 %v2499, %v2542
      %v2548 = vmul.f32 %v2500, %v2542
      %v2549 = vmul.f32 %v2501, %v2542
      %v2550 = vmul.f32 %v2502, %v2542
      %v2551 = vmul.f32 %v2503, %v2542
      %v2552 = vmul.f32 %v2504, %v2542
      %v2553 = vmul.f32 %v2505, %v2542
      %v2554 = vmul.f32 %v2506, %v2542
      %v2555 = vmul.f32 %v2507, %v2542
      %v2556 = vmul.f32 %v2508, %v2542
      %v2557 = vmul.f32 %v2509, %v2542
      %v2558 = vmul.f32 %v2510, %v2542
      %v2559 = vmul.f32 %v2511, %v2542
      %v2560 = vmul.f32 %v2512, %v2542
      %v2561 = vmul.f32 %v2513, %v2542
      %v2562 = vmul.f32 %v2514, %v2542
      %v2563 = vmul.f32 %v2515, %v2542
      %v2564 = vmul.f32 %v2516, %v2542
      %v2565 = vmul.f32 %v2517, %v2542
      %v2566 = vmul.f32 %v2518, %v2542
      %v2567 = vmul.f32 %v2519, %v2542
      %v2568 = vmul.f32 %v2520, %v2542
      %v2569 = vmul.f32 %v2521, %v2542
      %v2570 = vmul.f32 %v2522, %v2542
      %v2571 = vmul.f32 %v2523, %v2542
      %v2572 = vmul.f32 %v2524, %v2542
      %v2573 = vmul.f32 %v2525, %v2542
      %v2574 = vmul.f32 %v2526, %v2542
      %v2575 = vadd.f32 %v2463, %v2543
      %v2576 = vadd.f32 %v2464, %v2544
      %v2577 = vadd.f32 %v2465, %v2545
      %v2578 = vadd.f32 %v2466, %v2546
      %v2579 = vadd.f32 %v2467, %v2547
      %v2580 = vadd.f32 %v2468, %v2548
      %v2581 = vadd.f32 %v2469, %v2549
      %v2582 = vadd.f32 %v2470, %v2550
      %v2583 = vadd.f32 %v2471, %v2551
      %v2584 = vadd.f32 %v2472, %v2552
      %v2585 = vadd.f32 %v2473, %v2553
      %v2586 = vadd.f32 %v2474, %v2554
      %v2587 = vadd.f32 %v2475, %v2555
      %v2588 = vadd.f32 %v2476, %v2556
      %v2589 = vadd.f32 %v2477, %v2557
      %v2590 = vadd.f32 %v2478, %v2558
      %v2591 = vadd.f32 %v2479, %v2559
      %v2592 = vadd.f32 %v2480, %v2560
      %v2593 = vadd.f32 %v2481, %v2561
      %v2594 = vadd.f32 %v2482, %v2562
      %v2595 = vadd.f32 %v2483, %v2563
      %v2596 = vadd.f32 %v2484, %v2564
      %v2597 = vadd.f32 %v2485, %v2565
      %v2598 = vadd.f32 %v2486, %v2566
      %v2599 = vadd.f32 %v2487, %v2567
      %v2600 = vadd.f32 %v2488, %v2568
      %v2601 = vadd.f32 %v2489, %v2569
      %v2602 = vadd.f32 %v2490, %v2570
      %v2603 = vadd.f32 %v2491, %v2571
      %v2604 = vadd.f32 %v2492, %v2572
      %v2605 = vadd.f32 %v2493, %v2573
      %v2606 = vadd.f32 %v2494, %v2574
      %v2607 = vlaneseq
      %v2608 = vshrl.u32 %v2607, 7
      %v2609 = vsub.s32 4, %v2608
      %v2610 = vrot.slane %v409, %v2609
      %v2611 = vmul.f32 %v2497, %v2610
      %v2612 = vmul.f32 %v2498, %v2610
      %v2613 = vmul.f32 %v2499, %v2610
      %v2614 = vmul.f32 %v2500, %v2610
      %v2615 = vmul.f32 %v2501, %v2610
      %v2616 = vmul.f32 %v2502, %v2610
      %v2617 = vmul.f32 %v2503, %v2610
      %v2618 = vmul.f32 %v2504, %v2610
      %v2619 = vmul.f32 %v2505, %v2610
      %v2620 = vmul.f32 %v2506, %v2610
      %v2621 = vmul.f32 %v2507, %v2610
      %v2622 = vmul.f32 %v2508, %v2610
      %v2623 = vmul.f32 %v2509, %v2610
      %v2624 = vmul.f32 %v2510, %v2610
      %v2625 = vmul.f32 %v2511, %v2610
      %v2626 = vmul.f32 %v2512, %v2610
      %v2627 = vmul.f32 %v2513, %v2610
      %v2628 = vmul.f32 %v2514, %v2610
      %v2629 = vmul.f32 %v2515, %v2610
      %v2630 = vmul.f32 %v2516, %v2610
      %v2631 = vmul.f32 %v2517, %v2610
      %v2632 = vmul.f32 %v2518, %v2610
      %v2633 = vmul.f32 %v2519, %v2610
      %v2634 = vmul.f32 %v2520, %v2610
      %v2635 = vmul.f32 %v2521, %v2610
      %v2636 = vmul.f32 %v2522, %v2610
      %v2637 = vmul.f32 %v2523, %v2610
      %v2638 = vmul.f32 %v2524, %v2610
      %v2639 = vmul.f32 %v2525, %v2610
      %v2640 = vmul.f32 %v2526, %v2610
      %v2641 = vmul.f32 %v2527, %v2610
      %v2642 = vmul.f32 %v2528, %v2610
      %v2643 = vadd.f32 %v2575, %v2611
      %v2644 = vadd.f32 %v2576, %v2612
      %v2645 = vadd.f32 %v2577, %v2613
      %v2646 = vadd.f32 %v2578, %v2614
      %v2647 = vadd.f32 %v2579, %v2615
      %v2648 = vadd.f32 %v2580, %v2616
      %v2649 = vadd.f32 %v2581, %v2617
      %v2650 = vadd.f32 %v2582, %v2618
      %v2651 = vadd.f32 %v2583, %v2619
      %v2652 = vadd.f32 %v2584, %v2620
      %v2653 = vadd.f32 %v2585, %v2621
      %v2654 = vadd.f32 %v2586, %v2622
      %v2655 = vadd.f32 %v2587, %v2623
      %v2656 = vadd.f32 %v2588, %v2624
      %v2657 = vadd.f32 %v2589, %v2625
      %v2658 = vadd.f32 %v2590, %v2626
      %v2659 = vadd.f32 %v2591, %v2627
      %v2660 = vadd.f32 %v2592, %v2628
      %v2661 = vadd.f32 %v2593, %v2629
      %v2662 = vadd.f32 %v2594, %v2630
      %v2663 = vadd.f32 %v2595, %v2631
      %v2664 = vadd.f32 %v2596, %v2632
      %v2665 = vadd.f32 %v2597, %v2633
      %v2666 = vadd.f32 %v2598, %v2634
      %v2667 = vadd.f32 %v2599, %v2635
      %v2668 = vadd.f32 %v2600, %v2636
      %v2669 = vadd.f32 %v2601, %v2637
      %v2670 = vadd.f32 %v2602, %v2638
      %v2671 = vadd.f32 %v2603, %v2639
      %v2672 = vadd.f32 %v2604, %v2640
      %v2673 = vadd.f32 %v2605, %v2641
      %v2674 = vadd.f32 %v2606, %v2642
      %v2675 = vlaneseq
      %v2676 = vshrl.u32 %v2675, 7
      %v2677 = vsub.s32 4, %v2676
      %v2678 = vrot.slane %v410, %v2677
      %v2679 = vmul.f32 %v2499, %v2678
      %v2680 = vmul.f32 %v2500, %v2678
      %v2681 = vmul.f32 %v2501, %v2678
      %v2682 = vmul.f32 %v2502, %v2678
      %v2683 = vmul.f32 %v2503, %v2678
      %v2684 = vmul.f32 %v2504, %v2678
      %v2685 = vmul.f32 %v2505, %v2678
      %v2686 = vmul.f32 %v2506, %v2678
      %v2687 = vmul.f32 %v2507, %v2678
      %v2688 = vmul.f32 %v2508, %v2678
      %v2689 = vmul.f32 %v2509, %v2678
      %v2690 = vmul.f32 %v2510, %v2678
      %v2691 = vmul.f32 %v2511, %v2678
      %v2692 = vmul.f32 %v2512, %v2678
      %v2693 = vmul.f32 %v2513, %v2678
      %v2694 = vmul.f32 %v2514, %v2678
      %v2695 = vmul.f32 %v2515, %v2678
      %v2696 = vmul.f32 %v2516, %v2678
      %v2697 = vmul.f32 %v2517, %v2678
      %v2698 = vmul.f32 %v2518, %v2678
      %v2699 = vmul.f32 %v2519, %v2678
      %v2700 = vmul.f32 %v2520, %v2678
      %v2701 = vmul.f32 %v2521, %v2678
      %v2702 = vmul.f32 %v2522, %v2678
      %v2703 = vmul.f32 %v2523, %v2678
      %v2704 = vmul.f32 %v2524, %v2678
      %v2705 = vmul.f32 %v2525, %v2678
      %v2706 = vmul.f32 %v2526, %v2678
      %v2707 = vmul.f32 %v2527, %v2678
      %v2708 = vmul.f32 %v2528, %v2678
      %v2709 = vmul.f32 %v2529, %v2678
      %v2710 = vmul.f32 %v2530, %v2678
      %v2711 = vadd.f32 %v2643, %v2679
      %v2712 = vadd.f32 %v2644, %v2680
      %v2713 = vadd.f32 %v2645, %v2681
      %v2714 = vadd.f32 %v2646, %v2682
      %v2715 = vadd.f32 %v2647, %v2683
      %v2716 = vadd.f32 %v2648, %v2684
      %v2717 = vadd.f32 %v2649, %v2685
      %v2718 = vadd.f32 %v2650, %v2686
      %v2719 = vadd.f32 %v2651, %v2687
      %v2720 = vadd.f32 %v2652, %v2688
      %v2721 = vadd.f32 %v2653, %v2689
      %v2722 = vadd.f32 %v2654, %v2690
      %v2723 = vadd.f32 %v2655, %v2691
      %v2724 = vadd.f32 %v2656, %v2692
      %v2725 = vadd.f32 %v2657, %v2693
      %v2726 = vadd.f32 %v2658, %v2694
      %v2727 = vadd.f32 %v2659, %v2695
      %v2728 = vadd.f32 %v2660, %v2696
      %v2729 = vadd.f32 %v2661, %v2697
      %v2730 = vadd.f32 %v2662, %v2698
      %v2731 = vadd.f32 %v2663, %v2699
      %v2732 = vadd.f32 %v2664, %v2700
      %v2733 = vadd.f32 %v2665, %v2701
      %v2734 = vadd.f32 %v2666, %v2702
      %v2735 = vadd.f32 %v2667, %v2703
      %v2736 = vadd.f32 %v2668, %v2704
      %v2737 = vadd.f32 %v2669, %v2705
      %v2738 = vadd.f32 %v2670, %v2706
      %v2739 = vadd.f32 %v2671, %v2707
      %v2740 = vadd.f32 %v2672, %v2708
      %v2741 = vadd.f32 %v2673, %v2709
      %v2742 = vadd.f32 %v2674, %v2710
      %v2743 = vlaneseq
      %v2744 = vshrl.u32 %v2743, 7
      %v2745 = vsub.s32 4, %v2744
      %v2746 = vrot.slane %v411, %v2745
      %v2747 = vmul.f32 %v2501, %v2746
      %v2748 = vmul.f32 %v2502, %v2746
      %v2749 = vmul.f32 %v2503, %v2746
      %v2750 = vmul.f32 %v2504, %v2746
      %v2751 = vmul.f32 %v2505, %v2746
      %v2752 = vmul.f32 %v2506, %v2746
      %v2753 = vmul.f32 %v2507, %v2746
      %v2754 = vmul.f32 %v2508, %v2746
      %v2755 = vmul.f32 %v2509, %v2746
      %v2756 = vmul.f32 %v2510, %v2746
      %v2757 = vmul.f32 %v2511, %v2746
      %v2758 = vmul.f32 %v2512, %v2746
      %v2759 = vmul.f32 %v2513, %v2746
      %v2760 = vmul.f32 %v2514, %v2746
      %v2761 = vmul.f32 %v2515, %v2746
      %v2762 = vmul.f32 %v2516, %v2746
      %v2763 = vmul.f32 %v2517, %v2746
      %v2764 = vmul.f32 %v2518, %v2746
      %v2765 = vmul.f32 %v2519, %v2746
      %v2766 = vmul.f32 %v2520, %v2746
      %v2767 = vmul.f32 %v2521, %v2746
      %v2768 = vmul.f32 %v2522, %v2746
      %v2769 = vmul.f32 %v2523, %v2746
      %v2770 = vmul.f32 %v2524, %v2746
      %v2771 = vmul.f32 %v2525, %v2746
      %v2772 = vmul.f32 %v2526, %v2746
      %v2773 = vmul.f32 %v2527, %v2746
      %v2774 = vmul.f32 %v2528, %v2746
      %v2775 = vmul.f32 %v2529, %v2746
      %v2776 = vmul.f32 %v2530, %v2746
      %v2777 = vmul.f32 %v2531, %v2746
      %v2778 = vmul.f32 %v2532, %v2746
      %v2779 = vadd.f32 %v2711, %v2747
      %v2780 = vadd.f32 %v2712, %v2748
      %v2781 = vadd.f32 %v2713, %v2749
      %v2782 = vadd.f32 %v2714, %v2750
      %v2783 = vadd.f32 %v2715, %v2751
      %v2784 = vadd.f32 %v2716, %v2752
      %v2785 = vadd.f32 %v2717, %v2753
      %v2786 = vadd.f32 %v2718, %v2754
      %v2787 = vadd.f32 %v2719, %v2755
      %v2788 = vadd.f32 %v2720, %v2756
      %v2789 = vadd.f32 %v2721, %v2757
      %v2790 = vadd.f32 %v2722, %v2758
      %v2791 = vadd.f32 %v2723, %v2759
      %v2792 = vadd.f32 %v2724, %v2760
      %v2793 = vadd.f32 %v2725, %v2761
      %v2794 = vadd.f32 %v2726, %v2762
      %v2795 = vadd.f32 %v2727, %v2763
      %v2796 = vadd.f32 %v2728, %v2764
      %v2797 = vadd.f32 %v2729, %v2765
      %v2798 = vadd.f32 %v2730, %v2766
      %v2799 = vadd.f32 %v2731, %v2767
      %v2800 = vadd.f32 %v2732, %v2768
      %v2801 = vadd.f32 %v2733, %v2769
      %v2802 = vadd.f32 %v2734, %v2770
      %v2803 = vadd.f32 %v2735, %v2771
      %v2804 = vadd.f32 %v2736, %v2772
      %v2805 = vadd.f32 %v2737, %v2773
      %v2806 = vadd.f32 %v2738, %v2774
      %v2807 = vadd.f32 %v2739, %v2775
      %v2808 = vadd.f32 %v2740, %v2776
      %v2809 = vadd.f32 %v2741, %v2777
      %v2810 = vadd.f32 %v2742, %v2778
      %v2811 = vlaneseq
      %v2812 = vshrl.u32 %v2811, 7
      %v2813 = vsub.s32 4, %v2812
      %v2814 = vrot.slane %v412, %v2813
      %v2815 = vmul.f32 %v2503, %v2814
      %v2816 = vmul.f32 %v2504, %v2814
      %v2817 = vmul.f32 %v2505, %v2814
      %v2818 = vmul.f32 %v2506, %v2814
      %v2819 = vmul.f32 %v2507, %v2814
      %v2820 = vmul.f32 %v2508, %v2814
      %v2821 = vmul.f32 %v2509, %v2814
      %v2822 = vmul.f32 %v2510, %v2814
      %v2823 = vmul.f32 %v2511, %v2814
      %v2824 = vmul.f32 %v2512, %v2814
      %v2825 = vmul.f32 %v2513, %v2814
      %v2826 = vmul.f32 %v2514, %v2814
      %v2827 = vmul.f32 %v2515, %v2814
      %v2828 = vmul.f32 %v2516, %v2814
      %v2829 = vmul.f32 %v2517, %v2814
      %v2830 = vmul.f32 %v2518, %v2814
      %v2831 = vmul.f32 %v2519, %v2814
      %v2832 = vmul.f32 %v2520, %v2814
      %v2833 = vmul.f32 %v2521, %v2814
      %v2834 = vmul.f32 %v2522, %v2814
      %v2835 = vmul.f32 %v2523, %v2814
      %v2836 = vmul.f32 %v2524, %v2814
      %v2837 = vmul.f32 %v2525, %v2814
      %v2838 = vmul.f32 %v2526, %v2814
      %v2839 = vmul.f32 %v2527, %v2814
      %v2840 = vmul.f32 %v2528, %v2814
      %v2841 = vmul.f32 %v2529, %v2814
      %v2842 = vmul.f32 %v2530, %v2814
      %v2843 = vmul.f32 %v2531, %v2814
      %v2844 = vmul.f32 %v2532, %v2814
      %v2845 = vmul.f32 %v2533, %v2814
      %v2846 = vmul.f32 %v2534, %v2814
      %v2847 = vadd.f32 %v2779, %v2815
      %v2848 = vadd.f32 %v2780, %v2816
      %v2849 = vadd.f32 %v2781, %v2817
      %v2850 = vadd.f32 %v2782, %v2818
      %v2851 = vadd.f32 %v2783, %v2819
      %v2852 = vadd.f32 %v2784, %v2820
      %v2853 = vadd.f32 %v2785, %v2821
      %v2854 = vadd.f32 %v2786, %v2822
      %v2855 = vadd.f32 %v2787, %v2823
      %v2856 = vadd.f32 %v2788, %v2824
      %v2857 = vadd.f32 %v2789, %v2825
      %v2858 = vadd.f32 %v2790, %v2826
      %v2859 = vadd.f32 %v2791, %v2827
      %v2860 = vadd.f32 %v2792, %v2828
      %v2861 = vadd.f32 %v2793, %v2829
      %v2862 = vadd.f32 %v2794, %v2830
      %v2863 = vadd.f32 %v2795, %v2831
      %v2864 = vadd.f32 %v2796, %v2832
      %v2865 = vadd.f32 %v2797, %v2833
      %v2866 = vadd.f32 %v2798, %v2834
      %v2867 = vadd.f32 %v2799, %v2835
      %v2868 = vadd.f32 %v2800, %v2836
      %v2869 = vadd.f32 %v2801, %v2837
      %v2870 = vadd.f32 %v2802, %v2838
      %v2871 = vadd.f32 %v2803, %v2839
      %v2872 = vadd.f32 %v2804, %v2840
      %v2873 = vadd.f32 %v2805, %v2841
      %v2874 = vadd.f32 %v2806, %v2842
      %v2875 = vadd.f32 %v2807, %v2843
      %v2876 = vadd.f32 %v2808, %v2844
      %v2877 = vadd.f32 %v2809, %v2845
      %v2878 = vadd.f32 %v2810, %v2846
      %v2879 = vlaneseq
      %v2880 = vshrl.u32 %v2879, 7
      %v2881 = vsub.s32 4, %v2880
      %v2882 = vrot.slane %v413, %v2881
      %v2883 = vmul.f32 %v2505, %v2882
      %v2884 = vmul.f32 %v2506, %v2882
      %v2885 = vmul.f32 %v2507, %v2882
      %v2886 = vmul.f32 %v2508, %v2882
      %v2887 = vmul.f32 %v2509, %v2882
      %v2888 = vmul.f32 %v2510, %v2882
      %v2889 = vmul.f32 %v2511, %v2882
      %v2890 = vmul.f32 %v2512, %v2882
      %v2891 = vmul.f32 %v2513, %v2882
      %v2892 = vmul.f32 %v2514, %v2882
      %v2893 = vmul.f32 %v2515, %v2882
      %v2894 = vmul.f32 %v2516, %v2882
      %v2895 = vmul.f32 %v2517, %v2882
      %v2896 = vmul.f32 %v2518, %v2882
      %v2897 = vmul.f32 %v2519, %v2882
      %v2898 = vmul.f32 %v2520, %v2882
      %v2899 = vmul.f32 %v2521, %v2882
      %v2900 = vmul.f32 %v2522, %v2882
      %v2901 = vmul.f32 %v2523, %v2882
      %v2902 = vmul.f32 %v2524, %v2882
      %v2903 = vmul.f32 %v2525, %v2882
      %v2904 = vmul.f32 %v2526, %v2882
      %v2905 = vmul.f32 %v2527, %v2882
      %v2906 = vmul.f32 %v2528, %v2882
      %v2907 = vmul.f32 %v2529, %v2882
      %v2908 = vmul.f32 %v2530, %v2882
      %v2909 = vmul.f32 %v2531, %v2882
      %v2910 = vmul.f32 %v2532, %v2882
      %v2911 = vmul.f32 %v2533, %v2882
      %v2912 = vmul.f32 %v2534, %v2882
      %v2913 = vmul.f32 %v2535, %v2882
      %v2914 = vmul.f32 %v2536, %v2882
      %v2915 = vadd.f32 %v2847, %v2883
      %v2916 = vadd.f32 %v2848, %v2884
      %v2917 = vadd.f32 %v2849, %v2885
      %v2918 = vadd.f32 %v2850, %v2886
      %v2919 = vadd.f32 %v2851, %v2887
      %v2920 = vadd.f32 %v2852, %v2888
      %v2921 = vadd.f32 %v2853, %v2889
      %v2922 = vadd.f32 %v2854, %v2890
      %v2923 = vadd.f32 %v2855, %v2891
      %v2924 = vadd.f32 %v2856, %v2892
      %v2925 = vadd.f32 %v2857, %v2893
      %v2926 = vadd.f32 %v2858, %v2894
      %v2927 = vadd.f32 %v2859, %v2895
      %v2928 = vadd.f32 %v2860, %v2896
      %v2929 = vadd.f32 %v2861, %v2897
      %v2930 = vadd.f32 %v2862, %v2898
      %v2931 = vadd.f32 %v2863, %v2899
      %v2932 = vadd.f32 %v2864, %v2900
      %v2933 = vadd.f32 %v2865, %v2901
      %v2934 = vadd.f32 %v2866, %v2902
      %v2935 = vadd.f32 %v2867, %v2903
      %v2936 = vadd.f32 %v2868, %v2904
      %v2937 = vadd.f32 %v2869, %v2905
      %v2938 = vadd.f32 %v2870, %v2906
      %v2939 = vadd.f32 %v2871, %v2907
      %v2940 = vadd.f32 %v2872, %v2908
      %v2941 = vadd.f32 %v2873, %v2909
      %v2942 = vadd.f32 %v2874, %v2910
      %v2943 = vadd.f32 %v2875, %v2911
      %v2944 = vadd.f32 %v2876, %v2912
      %v2945 = vadd.f32 %v2877, %v2913
      %v2946 = vadd.f32 %v2878, %v2914
      %v2947 = vlaneseq
      %v2948 = vshrl.u32 %v2947, 7
      %v2949 = vsub.s32 4, %v2948
      %v2950 = vrot.slane %v414, %v2949
      %v2951 = vmul.f32 %v2507, %v2950
      %v2952 = vmul.f32 %v2508, %v2950
      %v2953 = vmul.f32 %v2509, %v2950
      %v2954 = vmul.f32 %v2510, %v2950
      %v2955 = vmul.f32 %v2511, %v2950
      %v2956 = vmul.f32 %v2512, %v2950
      %v2957 = vmul.f32 %v2513, %v2950
      %v2958 = vmul.f32 %v2514, %v2950
      %v2959 = vmul.f32 %v2515, %v2950
      %v2960 = vmul.f32 %v2516, %v2950
      %v2961 = vmul.f32 %v2517, %v2950
      %v2962 = vmul.f32 %v2518, %v2950
      %v2963 = vmul.f32 %v2519, %v2950
      %v2964 = vmul.f32 %v2520, %v2950
      %v2965 = vmul.f32 %v2521, %v2950
      %v2966 = vmul.f32 %v2522, %v2950
      %v2967 = vmul.f32 %v2523, %v2950
      %v2968 = vmul.f32 %v2524, %v2950
      %v2969 = vmul.f32 %v2525, %v2950
      %v2970 = vmul.f32 %v2526, %v2950
      %v2971 = vmul.f32 %v2527, %v2950
      %v2972 = vmul.f32 %v2528, %v2950
      %v2973 = vmul.f32 %v2529, %v2950
      %v2974 = vmul.f32 %v2530, %v2950
      %v2975 = vmul.f32 %v2531, %v2950
      %v2976 = vmul.f32 %v2532, %v2950
      %v2977 = vmul.f32 %v2533, %v2950
      %v2978 = vmul.f32 %v2534, %v2950
      %v2979 = vmul.f32 %v2535, %v2950
      %v2980 = vmul.f32 %v2536, %v2950
      %v2981 = vmul.f32 %v2537, %v2950
      %v2982 = vmul.f32 %v2538, %v2950
      %v2983 = vadd.f32 %v2915, %v2951
      %v2984 = vadd.f32 %v2916, %v2952
      %v2985 = vadd.f32 %v2917, %v2953
      %v2986 = vadd.f32 %v2918, %v2954
      %v2987 = vadd.f32 %v2919, %v2955
      %v2988 = vadd.f32 %v2920, %v2956
      %v2989 = vadd.f32 %v2921, %v2957
      %v2990 = vadd.f32 %v2922, %v2958
      %v2991 = vadd.f32 %v2923, %v2959
      %v2992 = vadd.f32 %v2924, %v2960
      %v2993 = vadd.f32 %v2925, %v2961
      %v2994 = vadd.f32 %v2926, %v2962
      %v2995 = vadd.f32 %v2927, %v2963
      %v2996 = vadd.f32 %v2928, %v2964
      %v2997 = vadd.f32 %v2929, %v2965
      %v2998 = vadd.f32 %v2930, %v2966
      %v2999 = vadd.f32 %v2931, %v2967
      %v3000 = vadd.f32 %v2932, %v2968
      %v3001 = vadd.f32 %v2933, %v2969
      %v3002 = vadd.f32 %v2934, %v2970
      %v3003 = vadd.f32 %v2935, %v2971
      %v3004 = vadd.f32 %v2936, %v2972
      %v3005 = vadd.f32 %v2937, %v2973
      %v3006 = vadd.f32 %v2938, %v2974
      %v3007 = vadd.f32 %v2939, %v2975
      %v3008 = vadd.f32 %v2940, %v2976
      %v3009 = vadd.f32 %v2941, %v2977
      %v3010 = vadd.f32 %v2942, %v2978
      %v3011 = vadd.f32 %v2943, %v2979
      %v3012 = vadd.f32 %v2944, %v2980
      %v3013 = vadd.f32 %v2945, %v2981
      %v3014 = vadd.f32 %v2946, %v2982
      %v3015 = vld [vmem:[#allocation2 + $0xa] sm:$0xff]
      %v3016 = vld [vmem:[#allocation2 + $0x12] sm:$0xff]
      %v3017 = vld [vmem:[#allocation2 + $0x2a] sm:$0xff]
      %v3018 = vld [vmem:[#allocation2 + $0x32] sm:$0xff]
      %v3019 = vld [vmem:[#allocation2 + $0x4a] sm:$0xff]
      %v3020 = vld [vmem:[#allocation2 + $0x52] sm:$0xff]
      %v3021 = vld [vmem:[#allocation2 + $0x6a] sm:$0xff]
      %v3022 = vld [vmem:[#allocation2 + $0x72] sm:$0xff]
      %v3023 = vld [vmem:[#allocation2 + $0x8a] sm:$0xff]
      %v3024 = vld [vmem:[#allocation2 + $0x92] sm:$0xff]
      %v3025 = vld [vmem:[#allocation2 + $0xaa] sm:$0xff]
      %v3026 = vld [vmem:[#allocation2 + $0xb2] sm:$0xff]
      %v3027 = vld [vmem:[#allocation2 + $0xca] sm:$0xff]
      %v3028 = vld [vmem:[#allocation2 + $0xd2] sm:$0xff]
      %v3029 = vld [vmem:[#allocation2 + $0xea] sm:$0xff]
      %v3030 = vld [vmem:[#allocation2 + $0xf2] sm:$0xff]
      %v3031 = vld [vmem:[#allocation2 + $0x10a] sm:$0xff]
      %v3032 = vld [vmem:[#allocation2 + $0x112] sm:$0xff]
      %v3033 = vld [vmem:[#allocation2 + $0x12a] sm:$0xff]
      %v3034 = vld [vmem:[#allocation2 + $0x132] sm:$0xff]
      %v3035 = vld [vmem:[#allocation2 + $0x14a] sm:$0xff]
      %v3036 = vld [vmem:[#allocation2 + $0x152] sm:$0xff]
      %v3037 = vld [vmem:[#allocation2 + $0x16a] sm:$0xff]
      %v3038 = vld [vmem:[#allocation2 + $0x172] sm:$0xff]
      %v3039 = vld [vmem:[#allocation2 + $0x18a] sm:$0xff]
      %v3040 = vld [vmem:[#allocation2 + $0x192] sm:$0xff]
      %v3041 = vld [vmem:[#allocation2 + $0x1aa] sm:$0xff]
      %v3042 = vld [vmem:[#allocation2 + $0x1b2] sm:$0xff]
      %v3043 = vld [vmem:[#allocation2 + $0x1ca] sm:$0xff]
      %v3044 = vld [vmem:[#allocation2 + $0x1d2] sm:$0xff]
      %v3045 = vld [vmem:[#allocation2 + $0x1ea] sm:$0xff]
      %v3046 = vld [vmem:[#allocation2 + $0x1f2] sm:$0xff]
      %v3047 = vld [vmem:[#allocation2 + $0x20a] sm:$0xff]
      %v3048 = vld [vmem:[#allocation2 + $0x212] sm:$0xff]
      %v3049 = vld [vmem:[#allocation2 + $0x22a] sm:$0xff]
      %v3050 = vld [vmem:[#allocation2 + $0x232] sm:$0xff]
      %v3051 = vld [vmem:[#allocation2 + $0x24a] sm:$0xff]
      %v3052 = vld [vmem:[#allocation2 + $0x252] sm:$0xff]
      %v3053 = vld [vmem:[#allocation2 + $0x26a] sm:$0xff]
      %v3054 = vld [vmem:[#allocation2 + $0x272] sm:$0xff]
      %v3055 = vld [vmem:[#allocation2 + $0x28a] sm:$0xff]
      %v3056 = vld [vmem:[#allocation2 + $0x292] sm:$0xff]
      %v3057 = vld [vmem:[#allocation2 + $0x2aa] sm:$0xff]
      %v3058 = vld [vmem:[#allocation2 + $0x2b2] sm:$0xff]
      %v3059 = vlaneseq
      %v3060 = vshrl.u32 %v3059, 7
      %v3061 = vsub.s32 5, %v3060
      %v3062 = vrot.slane %v408, %v3061
      %v3063 = vmul.f32 %v3015, %v3062
      %v3064 = vmul.f32 %v3016, %v3062
      %v3065 = vmul.f32 %v3017, %v3062
      %v3066 = vmul.f32 %v3018, %v3062
      %v3067 = vmul.f32 %v3019, %v3062
      %v3068 = vmul.f32 %v3020, %v3062
      %v3069 = vmul.f32 %v3021, %v3062
      %v3070 = vmul.f32 %v3022, %v3062
      %v3071 = vmul.f32 %v3023, %v3062
      %v3072 = vmul.f32 %v3024, %v3062
      %v3073 = vmul.f32 %v3025, %v3062
      %v3074 = vmul.f32 %v3026, %v3062
      %v3075 = vmul.f32 %v3027, %v3062
      %v3076 = vmul.f32 %v3028, %v3062
      %v3077 = vmul.f32 %v3029, %v3062
      %v3078 = vmul.f32 %v3030, %v3062
      %v3079 = vmul.f32 %v3031, %v3062
      %v3080 = vmul.f32 %v3032, %v3062
      %v3081 = vmul.f32 %v3033, %v3062
      %v3082 = vmul.f32 %v3034, %v3062
      %v3083 = vmul.f32 %v3035, %v3062
      %v3084 = vmul.f32 %v3036, %v3062
      %v3085 = vmul.f32 %v3037, %v3062
      %v3086 = vmul.f32 %v3038, %v3062
      %v3087 = vmul.f32 %v3039, %v3062
      %v3088 = vmul.f32 %v3040, %v3062
      %v3089 = vmul.f32 %v3041, %v3062
      %v3090 = vmul.f32 %v3042, %v3062
      %v3091 = vmul.f32 %v3043, %v3062
      %v3092 = vmul.f32 %v3044, %v3062
      %v3093 = vmul.f32 %v3045, %v3062
      %v3094 = vmul.f32 %v3046, %v3062
      %v3095 = vadd.f32 %v2983, %v3063
      %v3096 = vadd.f32 %v2984, %v3064
      %v3097 = vadd.f32 %v2985, %v3065
      %v3098 = vadd.f32 %v2986, %v3066
      %v3099 = vadd.f32 %v2987, %v3067
      %v3100 = vadd.f32 %v2988, %v3068
      %v3101 = vadd.f32 %v2989, %v3069
      %v3102 = vadd.f32 %v2990, %v3070
      %v3103 = vadd.f32 %v2991, %v3071
      %v3104 = vadd.f32 %v2992, %v3072
      %v3105 = vadd.f32 %v2993, %v3073
      %v3106 = vadd.f32 %v2994, %v3074
      %v3107 = vadd.f32 %v2995, %v3075
      %v3108 = vadd.f32 %v2996, %v3076
      %v3109 = vadd.f32 %v2997, %v3077
      %v3110 = vadd.f32 %v2998, %v3078
      %v3111 = vadd.f32 %v2999, %v3079
      %v3112 = vadd.f32 %v3000, %v3080
      %v3113 = vadd.f32 %v3001, %v3081
      %v3114 = vadd.f32 %v3002, %v3082
      %v3115 = vadd.f32 %v3003, %v3083
      %v3116 = vadd.f32 %v3004, %v3084
      %v3117 = vadd.f32 %v3005, %v3085
      %v3118 = vadd.f32 %v3006, %v3086
      %v3119 = vadd.f32 %v3007, %v3087
      %v3120 = vadd.f32 %v3008, %v3088
      %v3121 = vadd.f32 %v3009, %v3089
      %v3122 = vadd.f32 %v3010, %v3090
      %v3123 = vadd.f32 %v3011, %v3091
      %v3124 = vadd.f32 %v3012, %v3092
      %v3125 = vadd.f32 %v3013, %v3093
      %v3126 = vadd.f32 %v3014, %v3094
      %v3127 = vlaneseq
      %v3128 = vshrl.u32 %v3127, 7
      %v3129 = vsub.s32 5, %v3128
      %v3130 = vrot.slane %v409, %v3129
      %v3131 = vmul.f32 %v3017, %v3130
      %v3132 = vmul.f32 %v3018, %v3130
      %v3133 = vmul.f32 %v3019, %v3130
      %v3134 = vmul.f32 %v3020, %v3130
      %v3135 = vmul.f32 %v3021, %v3130
      %v3136 = vmul.f32 %v3022, %v3130
      %v3137 = vmul.f32 %v3023, %v3130
      %v3138 = vmul.f32 %v3024, %v3130
      %v3139 = vmul.f32 %v3025, %v3130
      %v3140 = vmul.f32 %v3026, %v3130
      %v3141 = vmul.f32 %v3027, %v3130
      %v3142 = vmul.f32 %v3028, %v3130
      %v3143 = vmul.f32 %v3029, %v3130
      %v3144 = vmul.f32 %v3030, %v3130
      %v3145 = vmul.f32 %v3031, %v3130
      %v3146 = vmul.f32 %v3032, %v3130
      %v3147 = vmul.f32 %v3033, %v3130
      %v3148 = vmul.f32 %v3034, %v3130
      %v3149 = vmul.f32 %v3035, %v3130
      %v3150 = vmul.f32 %v3036, %v3130
      %v3151 = vmul.f32 %v3037, %v3130
      %v3152 = vmul.f32 %v3038, %v3130
      %v3153 = vmul.f32 %v3039, %v3130
      %v3154 = vmul.f32 %v3040, %v3130
      %v3155 = vmul.f32 %v3041, %v3130
      %v3156 = vmul.f32 %v3042, %v3130
      %v3157 = vmul.f32 %v3043, %v3130
      %v3158 = vmul.f32 %v3044, %v3130
      %v3159 = vmul.f32 %v3045, %v3130
      %v3160 = vmul.f32 %v3046, %v3130
      %v3161 = vmul.f32 %v3047, %v3130
      %v3162 = vmul.f32 %v3048, %v3130
      %v3163 = vadd.f32 %v3095, %v3131
      %v3164 = vadd.f32 %v3096, %v3132
      %v3165 = vadd.f32 %v3097, %v3133
      %v3166 = vadd.f32 %v3098, %v3134
      %v3167 = vadd.f32 %v3099, %v3135
      %v3168 = vadd.f32 %v3100, %v3136
      %v3169 = vadd.f32 %v3101, %v3137
      %v3170 = vadd.f32 %v3102, %v3138
      %v3171 = vadd.f32 %v3103, %v3139
      %v3172 = vadd.f32 %v3104, %v3140
      %v3173 = vadd.f32 %v3105, %v3141
      %v3174 = vadd.f32 %v3106, %v3142
      %v3175 = vadd.f32 %v3107, %v3143
      %v3176 = vadd.f32 %v3108, %v3144
      %v3177 = vadd.f32 %v3109, %v3145
      %v3178 = vadd.f32 %v3110, %v3146
      %v3179 = vadd.f32 %v3111, %v3147
      %v3180 = vadd.f32 %v3112, %v3148
      %v3181 = vadd.f32 %v3113, %v3149
      %v3182 = vadd.f32 %v3114, %v3150
      %v3183 = vadd.f32 %v3115, %v3151
      %v3184 = vadd.f32 %v3116, %v3152
      %v3185 = vadd.f32 %v3117, %v3153
      %v3186 = vadd.f32 %v3118, %v3154
      %v3187 = vadd.f32 %v3119, %v3155
      %v3188 = vadd.f32 %v3120, %v3156
      %v3189 = vadd.f32 %v3121, %v3157
      %v3190 = vadd.f32 %v3122, %v3158
      %v3191 = vadd.f32 %v3123, %v3159
      %v3192 = vadd.f32 %v3124, %v3160
      %v3193 = vadd.f32 %v3125, %v3161
      %v3194 = vadd.f32 %v3126, %v3162
      %v3195 = vlaneseq
      %v3196 = vshrl.u32 %v3195, 7
      %v3197 = vsub.s32 5, %v3196
      %v3198 = vrot.slane %v410, %v3197
      %v3199 = vmul.f32 %v3019, %v3198
      %v3200 = vmul.f32 %v3020, %v3198
      %v3201 = vmul.f32 %v3021, %v3198
      %v3202 = vmul.f32 %v3022, %v3198
      %v3203 = vmul.f32 %v3023, %v3198
      %v3204 = vmul.f32 %v3024, %v3198
      %v3205 = vmul.f32 %v3025, %v3198
      %v3206 = vmul.f32 %v3026, %v3198
      %v3207 = vmul.f32 %v3027, %v3198
      %v3208 = vmul.f32 %v3028, %v3198
      %v3209 = vmul.f32 %v3029, %v3198
      %v3210 = vmul.f32 %v3030, %v3198
      %v3211 = vmul.f32 %v3031, %v3198
      %v3212 = vmul.f32 %v3032, %v3198
      %v3213 = vmul.f32 %v3033, %v3198
      %v3214 = vmul.f32 %v3034, %v3198
      %v3215 = vmul.f32 %v3035, %v3198
      %v3216 = vmul.f32 %v3036, %v3198
      %v3217 = vmul.f32 %v3037, %v3198
      %v3218 = vmul.f32 %v3038, %v3198
      %v3219 = vmul.f32 %v3039, %v3198
      %v3220 = vmul.f32 %v3040, %v3198
      %v3221 = vmul.f32 %v3041, %v3198
      %v3222 = vmul.f32 %v3042, %v3198
      %v3223 = vmul.f32 %v3043, %v3198
      %v3224 = vmul.f32 %v3044, %v3198
      %v3225 = vmul.f32 %v3045, %v3198
      %v3226 = vmul.f32 %v3046, %v3198
      %v3227 = vmul.f32 %v3047, %v3198
      %v3228 = vmul.f32 %v3048, %v3198
      %v3229 = vmul.f32 %v3049, %v3198
      %v3230 = vmul.f32 %v3050, %v3198
      %v3231 = vadd.f32 %v3163, %v3199
      %v3232 = vadd.f32 %v3164, %v3200
      %v3233 = vadd.f32 %v3165, %v3201
      %v3234 = vadd.f32 %v3166, %v3202
      %v3235 = vadd.f32 %v3167, %v3203
      %v3236 = vadd.f32 %v3168, %v3204
      %v3237 = vadd.f32 %v3169, %v3205
      %v3238 = vadd.f32 %v3170, %v3206
      %v3239 = vadd.f32 %v3171, %v3207
      %v3240 = vadd.f32 %v3172, %v3208
      %v3241 = vadd.f32 %v3173, %v3209
      %v3242 = vadd.f32 %v3174, %v3210
      %v3243 = vadd.f32 %v3175, %v3211
      %v3244 = vadd.f32 %v3176, %v3212
      %v3245 = vadd.f32 %v3177, %v3213
      %v3246 = vadd.f32 %v3178, %v3214
      %v3247 = vadd.f32 %v3179, %v3215
      %v3248 = vadd.f32 %v3180, %v3216
      %v3249 = vadd.f32 %v3181, %v3217
      %v3250 = vadd.f32 %v3182, %v3218
      %v3251 = vadd.f32 %v3183, %v3219
      %v3252 = vadd.f32 %v3184, %v3220
      %v3253 = vadd.f32 %v3185, %v3221
      %v3254 = vadd.f32 %v3186, %v3222
      %v3255 = vadd.f32 %v3187, %v3223
      %v3256 = vadd.f32 %v3188, %v3224
      %v3257 = vadd.f32 %v3189, %v3225
      %v3258 = vadd.f32 %v3190, %v3226
      %v3259 = vadd.f32 %v3191, %v3227
      %v3260 = vadd.f32 %v3192, %v3228
      %v3261 = vadd.f32 %v3193, %v3229
      %v3262 = vadd.f32 %v3194, %v3230
      %v3263 = vlaneseq
      %v3264 = vshrl.u32 %v3263, 7
      %v3265 = vsub.s32 5, %v3264
      %v3266 = vrot.slane %v411, %v3265
      %v3267 = vmul.f32 %v3021, %v3266
      %v3268 = vmul.f32 %v3022, %v3266
      %v3269 = vmul.f32 %v3023, %v3266
      %v3270 = vmul.f32 %v3024, %v3266
      %v3271 = vmul.f32 %v3025, %v3266
      %v3272 = vmul.f32 %v3026, %v3266
      %v3273 = vmul.f32 %v3027, %v3266
      %v3274 = vmul.f32 %v3028, %v3266
      %v3275 = vmul.f32 %v3029, %v3266
      %v3276 = vmul.f32 %v3030, %v3266
      %v3277 = vmul.f32 %v3031, %v3266
      %v3278 = vmul.f32 %v3032, %v3266
      %v3279 = vmul.f32 %v3033, %v3266
      %v3280 = vmul.f32 %v3034, %v3266
      %v3281 = vmul.f32 %v3035, %v3266
      %v3282 = vmul.f32 %v3036, %v3266
      %v3283 = vmul.f32 %v3037, %v3266
      %v3284 = vmul.f32 %v3038, %v3266
      %v3285 = vmul.f32 %v3039, %v3266
      %v3286 = vmul.f32 %v3040, %v3266
      %v3287 = vmul.f32 %v3041, %v3266
      %v3288 = vmul.f32 %v3042, %v3266
      %v3289 = vmul.f32 %v3043, %v3266
      %v3290 = vmul.f32 %v3044, %v3266
      %v3291 = vmul.f32 %v3045, %v3266
      %v3292 = vmul.f32 %v3046, %v3266
      %v3293 = vmul.f32 %v3047, %v3266
      %v3294 = vmul.f32 %v3048, %v3266
      %v3295 = vmul.f32 %v3049, %v3266
      %v3296 = vmul.f32 %v3050, %v3266
      %v3297 = vmul.f32 %v3051, %v3266
      %v3298 = vmul.f32 %v3052, %v3266
      %v3299 = vadd.f32 %v3231, %v3267
      %v3300 = vadd.f32 %v3232, %v3268
      %v3301 = vadd.f32 %v3233, %v3269
      %v3302 = vadd.f32 %v3234, %v3270
      %v3303 = vadd.f32 %v3235, %v3271
      %v3304 = vadd.f32 %v3236, %v3272
      %v3305 = vadd.f32 %v3237, %v3273
      %v3306 = vadd.f32 %v3238, %v3274
      %v3307 = vadd.f32 %v3239, %v3275
      %v3308 = vadd.f32 %v3240, %v3276
      %v3309 = vadd.f32 %v3241, %v3277
      %v3310 = vadd.f32 %v3242, %v3278
      %v3311 = vadd.f32 %v3243, %v3279
      %v3312 = vadd.f32 %v3244, %v3280
      %v3313 = vadd.f32 %v3245, %v3281
      %v3314 = vadd.f32 %v3246, %v3282
      %v3315 = vadd.f32 %v3247, %v3283
      %v3316 = vadd.f32 %v3248, %v3284
      %v3317 = vadd.f32 %v3249, %v3285
      %v3318 = vadd.f32 %v3250, %v3286
      %v3319 = vadd.f32 %v3251, %v3287
      %v3320 = vadd.f32 %v3252, %v3288
      %v3321 = vadd.f32 %v3253, %v3289
      %v3322 = vadd.f32 %v3254, %v3290
      %v3323 = vadd.f32 %v3255, %v3291
      %v3324 = vadd.f32 %v3256, %v3292
      %v3325 = vadd.f32 %v3257, %v3293
      %v3326 = vadd.f32 %v3258, %v3294
      %v3327 = vadd.f32 %v3259, %v3295
      %v3328 = vadd.f32 %v3260, %v3296
      %v3329 = vadd.f32 %v3261, %v3297
      %v3330 = vadd.f32 %v3262, %v3298
      %v3331 = vlaneseq
      %v3332 = vshrl.u32 %v3331, 7
      %v3333 = vsub.s32 5, %v3332
      %v3334 = vrot.slane %v412, %v3333
      %v3335 = vmul.f32 %v3023, %v3334
      %v3336 = vmul.f32 %v3024, %v3334
      %v3337 = vmul.f32 %v3025, %v3334
      %v3338 = vmul.f32 %v3026, %v3334
      %v3339 = vmul.f32 %v3027, %v3334
      %v3340 = vmul.f32 %v3028, %v3334
      %v3341 = vmul.f32 %v3029, %v3334
      %v3342 = vmul.f32 %v3030, %v3334
      %v3343 = vmul.f32 %v3031, %v3334
      %v3344 = vmul.f32 %v3032, %v3334
      %v3345 = vmul.f32 %v3033, %v3334
      %v3346 = vmul.f32 %v3034, %v3334
      %v3347 = vmul.f32 %v3035, %v3334
      %v3348 = vmul.f32 %v3036, %v3334
      %v3349 = vmul.f32 %v3037, %v3334
      %v3350 = vmul.f32 %v3038, %v3334
      %v3351 = vmul.f32 %v3039, %v3334
      %v3352 = vmul.f32 %v3040, %v3334
      %v3353 = vmul.f32 %v3041, %v3334
      %v3354 = vmul.f32 %v3042, %v3334
      %v3355 = vmul.f32 %v3043, %v3334
      %v3356 = vmul.f32 %v3044, %v3334
      %v3357 = vmul.f32 %v3045, %v3334
      %v3358 = vmul.f32 %v3046, %v3334
      %v3359 = vmul.f32 %v3047, %v3334
      %v3360 = vmul.f32 %v3048, %v3334
      %v3361 = vmul.f32 %v3049, %v3334
      %v3362 = vmul.f32 %v3050, %v3334
      %v3363 = vmul.f32 %v3051, %v3334
      %v3364 = vmul.f32 %v3052, %v3334
      %v3365 = vmul.f32 %v3053, %v3334
      %v3366 = vmul.f32 %v3054, %v3334
      %v3367 = vadd.f32 %v3299, %v3335
      %v3368 = vadd.f32 %v3300, %v3336
      %v3369 = vadd.f32 %v3301, %v3337
      %v3370 = vadd.f32 %v3302, %v3338
      %v3371 = vadd.f32 %v3303, %v3339
      %v3372 = vadd.f32 %v3304, %v3340
      %v3373 = vadd.f32 %v3305, %v3341
      %v3374 = vadd.f32 %v3306, %v3342
      %v3375 = vadd.f32 %v3307, %v3343
      %v3376 = vadd.f32 %v3308, %v3344
      %v3377 = vadd.f32 %v3309, %v3345
      %v3378 = vadd.f32 %v3310, %v3346
      %v3379 = vadd.f32 %v3311, %v3347
      %v3380 = vadd.f32 %v3312, %v3348
      %v3381 = vadd.f32 %v3313, %v3349
      %v3382 = vadd.f32 %v3314, %v3350
      %v3383 = vadd.f32 %v3315, %v3351
      %v3384 = vadd.f32 %v3316, %v3352
      %v3385 = vadd.f32 %v3317, %v3353
      %v3386 = vadd.f32 %v3318, %v3354
      %v3387 = vadd.f32 %v3319, %v3355
      %v3388 = vadd.f32 %v3320, %v3356
      %v3389 = vadd.f32 %v3321, %v3357
      %v3390 = vadd.f32 %v3322, %v3358
      %v3391 = vadd.f32 %v3323, %v3359
      %v3392 = vadd.f32 %v3324, %v3360
      %v3393 = vadd.f32 %v3325, %v3361
      %v3394 = vadd.f32 %v3326, %v3362
      %v3395 = vadd.f32 %v3327, %v3363
      %v3396 = vadd.f32 %v3328, %v3364
      %v3397 = vadd.f32 %v3329, %v3365
      %v3398 = vadd.f32 %v3330, %v3366
      %v3399 = vlaneseq
      %v3400 = vshrl.u32 %v3399, 7
      %v3401 = vsub.s32 5, %v3400
      %v3402 = vrot.slane %v413, %v3401
      %v3403 = vmul.f32 %v3025, %v3402
      %v3404 = vmul.f32 %v3026, %v3402
      %v3405 = vmul.f32 %v3027, %v3402
      %v3406 = vmul.f32 %v3028, %v3402
      %v3407 = vmul.f32 %v3029, %v3402
      %v3408 = vmul.f32 %v3030, %v3402
      %v3409 = vmul.f32 %v3031, %v3402
      %v3410 = vmul.f32 %v3032, %v3402
      %v3411 = vmul.f32 %v3033, %v3402
      %v3412 = vmul.f32 %v3034, %v3402
      %v3413 = vmul.f32 %v3035, %v3402
      %v3414 = vmul.f32 %v3036, %v3402
      %v3415 = vmul.f32 %v3037, %v3402
      %v3416 = vmul.f32 %v3038, %v3402
      %v3417 = vmul.f32 %v3039, %v3402
      %v3418 = vmul.f32 %v3040, %v3402
      %v3419 = vmul.f32 %v3041, %v3402
      %v3420 = vmul.f32 %v3042, %v3402
      %v3421 = vmul.f32 %v3043, %v3402
      %v3422 = vmul.f32 %v3044, %v3402
      %v3423 = vmul.f32 %v3045, %v3402
      %v3424 = vmul.f32 %v3046, %v3402
      %v3425 = vmul.f32 %v3047, %v3402
      %v3426 = vmul.f32 %v3048, %v3402
      %v3427 = vmul.f32 %v3049, %v3402
      %v3428 = vmul.f32 %v3050, %v3402
      %v3429 = vmul.f32 %v3051, %v3402
      %v3430 = vmul.f32 %v3052, %v3402
      %v3431 = vmul.f32 %v3053, %v3402
      %v3432 = vmul.f32 %v3054, %v3402
      %v3433 = vmul.f32 %v3055, %v3402
      %v3434 = vmul.f32 %v3056, %v3402
      %v3435 = vadd.f32 %v3367, %v3403
      %v3436 = vadd.f32 %v3368, %v3404
      %v3437 = vadd.f32 %v3369, %v3405
      %v3438 = vadd.f32 %v3370, %v3406
      %v3439 = vadd.f32 %v3371, %v3407
      %v3440 = vadd.f32 %v3372, %v3408
      %v3441 = vadd.f32 %v3373, %v3409
      %v3442 = vadd.f32 %v3374, %v3410
      %v3443 = vadd.f32 %v3375, %v3411
      %v3444 = vadd.f32 %v3376, %v3412
      %v3445 = vadd.f32 %v3377, %v3413
      %v3446 = vadd.f32 %v3378, %v3414
      %v3447 = vadd.f32 %v3379, %v3415
      %v3448 = vadd.f32 %v3380, %v3416
      %v3449 = vadd.f32 %v3381, %v3417
      %v3450 = vadd.f32 %v3382, %v3418
      %v3451 = vadd.f32 %v3383, %v3419
      %v3452 = vadd.f32 %v3384, %v3420
      %v3453 = vadd.f32 %v3385, %v3421
      %v3454 = vadd.f32 %v3386, %v3422
      %v3455 = vadd.f32 %v3387, %v3423
      %v3456 = vadd.f32 %v3388, %v3424
      %v3457 = vadd.f32 %v3389, %v3425
      %v3458 = vadd.f32 %v3390, %v3426
      %v3459 = vadd.f32 %v3391, %v3427
      %v3460 = vadd.f32 %v3392, %v3428
      %v3461 = vadd.f32 %v3393, %v3429
      %v3462 = vadd.f32 %v3394, %v3430
      %v3463 = vadd.f32 %v3395, %v3431
      %v3464 = vadd.f32 %v3396, %v3432
      %v3465 = vadd.f32 %v3397, %v3433
      %v3466 = vadd.f32 %v3398, %v3434
      %v3467 = vlaneseq
      %v3468 = vshrl.u32 %v3467, 7
      %v3469 = vsub.s32 5, %v3468
      %v3470 = vrot.slane %v414, %v3469
      %v3471 = vmul.f32 %v3027, %v3470
      %v3472 = vmul.f32 %v3028, %v3470
      %v3473 = vmul.f32 %v3029, %v3470
      %v3474 = vmul.f32 %v3030, %v3470
      %v3475 = vmul.f32 %v3031, %v3470
      %v3476 = vmul.f32 %v3032, %v3470
      %v3477 = vmul.f32 %v3033, %v3470
      %v3478 = vmul.f32 %v3034, %v3470
      %v3479 = vmul.f32 %v3035, %v3470
      %v3480 = vmul.f32 %v3036, %v3470
      %v3481 = vmul.f32 %v3037, %v3470
      %v3482 = vmul.f32 %v3038, %v3470
      %v3483 = vmul.f32 %v3039, %v3470
      %v3484 = vmul.f32 %v3040, %v3470
      %v3485 = vmul.f32 %v3041, %v3470
      %v3486 = vmul.f32 %v3042, %v3470
      %v3487 = vmul.f32 %v3043, %v3470
      %v3488 = vmul.f32 %v3044, %v3470
      %v3489 = vmul.f32 %v3045, %v3470
      %v3490 = vmul.f32 %v3046, %v3470
      %v3491 = vmul.f32 %v3047, %v3470
      %v3492 = vmul.f32 %v3048, %v3470
      %v3493 = vmul.f32 %v3049, %v3470
      %v3494 = vmul.f32 %v3050, %v3470
      %v3495 = vmul.f32 %v3051, %v3470
      %v3496 = vmul.f32 %v3052, %v3470
      %v3497 = vmul.f32 %v3053, %v3470
      %v3498 = vmul.f32 %v3054, %v3470
      %v3499 = vmul.f32 %v3055, %v3470
      %v3500 = vmul.f32 %v3056, %v3470
      %v3501 = vmul.f32 %v3057, %v3470
      %v3502 = vmul.f32 %v3058, %v3470
      %v3503 = vadd.f32 %v3435, %v3471
      %v3504 = vadd.f32 %v3436, %v3472
      %v3505 = vadd.f32 %v3437, %v3473
      %v3506 = vadd.f32 %v3438, %v3474
      %v3507 = vadd.f32 %v3439, %v3475
      %v3508 = vadd.f32 %v3440, %v3476
      %v3509 = vadd.f32 %v3441, %v3477
      %v3510 = vadd.f32 %v3442, %v3478
      %v3511 = vadd.f32 %v3443, %v3479
      %v3512 = vadd.f32 %v3444, %v3480
      %v3513 = vadd.f32 %v3445, %v3481
      %v3514 = vadd.f32 %v3446, %v3482
      %v3515 = vadd.f32 %v3447, %v3483
      %v3516 = vadd.f32 %v3448, %v3484
      %v3517 = vadd.f32 %v3449, %v3485
      %v3518 = vadd.f32 %v3450, %v3486
      %v3519 = vadd.f32 %v3451, %v3487
      %v3520 = vadd.f32 %v3452, %v3488
      %v3521 = vadd.f32 %v3453, %v3489
      %v3522 = vadd.f32 %v3454, %v3490
      %v3523 = vadd.f32 %v3455, %v3491
      %v3524 = vadd.f32 %v3456, %v3492
      %v3525 = vadd.f32 %v3457, %v3493
      %v3526 = vadd.f32 %v3458, %v3494
      %v3527 = vadd.f32 %v3459, %v3495
      %v3528 = vadd.f32 %v3460, %v3496
      %v3529 = vadd.f32 %v3461, %v3497
      %v3530 = vadd.f32 %v3462, %v3498
      %v3531 = vadd.f32 %v3463, %v3499
      %v3532 = vadd.f32 %v3464, %v3500
      %v3533 = vadd.f32 %v3465, %v3501
      %v3534 = vadd.f32 %v3466, %v3502
      %v3535 = vld [vmem:[#allocation2 + $0xb] sm:$0xff]
      %v3536 = vld [vmem:[#allocation2 + $0x13] sm:$0xff]
      %v3537 = vld [vmem:[#allocation2 + $0x2b] sm:$0xff]
      %v3538 = vld [vmem:[#allocation2 + $0x33] sm:$0xff]
      %v3539 = vld [vmem:[#allocation2 + $0x4b] sm:$0xff]
      %v3540 = vld [vmem:[#allocation2 + $0x53] sm:$0xff]
      %v3541 = vld [vmem:[#allocation2 + $0x6b] sm:$0xff]
      %v3542 = vld [vmem:[#allocation2 + $0x73] sm:$0xff]
      %v3543 = vld [vmem:[#allocation2 + $0x8b] sm:$0xff]
      %v3544 = vld [vmem:[#allocation2 + $0x93] sm:$0xff]
      %v3545 = vld [vmem:[#allocation2 + $0xab] sm:$0xff]
      %v3546 = vld [vmem:[#allocation2 + $0xb3] sm:$0xff]
      %v3547 = vld [vmem:[#allocation2 + $0xcb] sm:$0xff]
      %v3548 = vld [vmem:[#allocation2 + $0xd3] sm:$0xff]
      %v3549 = vld [vmem:[#allocation2 + $0xeb] sm:$0xff]
      %v3550 = vld [vmem:[#allocation2 + $0xf3] sm:$0xff]
      %v3551 = vld [vmem:[#allocation2 + $0x10b] sm:$0xff]
      %v3552 = vld [vmem:[#allocation2 + $0x113] sm:$0xff]
      %v3553 = vld [vmem:[#allocation2 + $0x12b] sm:$0xff]
      %v3554 = vld [vmem:[#allocation2 + $0x133] sm:$0xff]
      %v3555 = vld [vmem:[#allocation2 + $0x14b] sm:$0xff]
      %v3556 = vld [vmem:[#allocation2 + $0x153] sm:$0xff]
      %v3557 = vld [vmem:[#allocation2 + $0x16b] sm:$0xff]
      %v3558 = vld [vmem:[#allocation2 + $0x173] sm:$0xff]
      %v3559 = vld [vmem:[#allocation2 + $0x18b] sm:$0xff]
      %v3560 = vld [vmem:[#allocation2 + $0x193] sm:$0xff]
      %v3561 = vld [vmem:[#allocation2 + $0x1ab] sm:$0xff]
      %v3562 = vld [vmem:[#allocation2 + $0x1b3] sm:$0xff]
      %v3563 = vld [vmem:[#allocation2 + $0x1cb] sm:$0xff]
      %v3564 = vld [vmem:[#allocation2 + $0x1d3] sm:$0xff]
      %v3565 = vld [vmem:[#allocation2 + $0x1eb] sm:$0xff]
      %v3566 = vld [vmem:[#allocation2 + $0x1f3] sm:$0xff]
      %v3567 = vld [vmem:[#allocation2 + $0x20b] sm:$0xff]
      %v3568 = vld [vmem:[#allocation2 + $0x213] sm:$0xff]
      %v3569 = vld [vmem:[#allocation2 + $0x22b] sm:$0xff]
      %v3570 = vld [vmem:[#allocation2 + $0x233] sm:$0xff]
      %v3571 = vld [vmem:[#allocation2 + $0x24b] sm:$0xff]
      %v3572 = vld [vmem:[#allocation2 + $0x253] sm:$0xff]
      %v3573 = vld [vmem:[#allocation2 + $0x26b] sm:$0xff]
      %v3574 = vld [vmem:[#allocation2 + $0x273] sm:$0xff]
      %v3575 = vld [vmem:[#allocation2 + $0x28b] sm:$0xff]
      %v3576 = vld [vmem:[#allocation2 + $0x293] sm:$0xff]
      %v3577 = vld [vmem:[#allocation2 + $0x2ab] sm:$0xff]
      %v3578 = vld [vmem:[#allocation2 + $0x2b3] sm:$0xff]
      %v3579 = vlaneseq
      %v3580 = vshrl.u32 %v3579, 7
      %v3581 = vsub.s32 6, %v3580
      %v3582 = vrot.slane %v408, %v3581
      %v3583 = vmul.f32 %v3535, %v3582
      %v3584 = vmul.f32 %v3536, %v3582
      %v3585 = vmul.f32 %v3537, %v3582
      %v3586 = vmul.f32 %v3538, %v3582
      %v3587 = vmul.f32 %v3539, %v3582
      %v3588 = vmul.f32 %v3540, %v3582
      %v3589 = vmul.f32 %v3541, %v3582
      %v3590 = vmul.f32 %v3542, %v3582
      %v3591 = vmul.f32 %v3543, %v3582
      %v3592 = vmul.f32 %v3544, %v3582
      %v3593 = vmul.f32 %v3545, %v3582
      %v3594 = vmul.f32 %v3546, %v3582
      %v3595 = vmul.f32 %v3547, %v3582
      %v3596 = vmul.f32 %v3548, %v3582
      %v3597 = vmul.f32 %v3549, %v3582
      %v3598 = vmul.f32 %v3550, %v3582
      %v3599 = vmul.f32 %v3551, %v3582
      %v3600 = vmul.f32 %v3552, %v3582
      %v3601 = vmul.f32 %v3553, %v3582
      %v3602 = vmul.f32 %v3554, %v3582
      %v3603 = vmul.f32 %v3555, %v3582
      %v3604 = vmul.f32 %v3556, %v3582
      %v3605 = vmul.f32 %v3557, %v3582
      %v3606 = vmul.f32 %v3558, %v3582
      %v3607 = vmul.f32 %v3559, %v3582
      %v3608 = vmul.f32 %v3560, %v3582
      %v3609 = vmul.f32 %v3561, %v3582
      %v3610 = vmul.f32 %v3562, %v3582
      %v3611 = vmul.f32 %v3563, %v3582
      %v3612 = vmul.f32 %v3564, %v3582
      %v3613 = vmul.f32 %v3565, %v3582
      %v3614 = vmul.f32 %v3566, %v3582
      %v3615 = vadd.f32 %v3503, %v3583
      %v3616 = vadd.f32 %v3504, %v3584
      %v3617 = vadd.f32 %v3505, %v3585
      %v3618 = vadd.f32 %v3506, %v3586
      %v3619 = vadd.f32 %v3507, %v3587
      %v3620 = vadd.f32 %v3508, %v3588
      %v3621 = vadd.f32 %v3509, %v3589
      %v3622 = vadd.f32 %v3510, %v3590
      %v3623 = vadd.f32 %v3511, %v3591
      %v3624 = vadd.f32 %v3512, %v3592
      %v3625 = vadd.f32 %v3513, %v3593
      %v3626 = vadd.f32 %v3514, %v3594
      %v3627 = vadd.f32 %v3515, %v3595
      %v3628 = vadd.f32 %v3516, %v3596
      %v3629 = vadd.f32 %v3517, %v3597
      %v3630 = vadd.f32 %v3518, %v3598
      %v3631 = vadd.f32 %v3519, %v3599
      %v3632 = vadd.f32 %v3520, %v3600
      %v3633 = vadd.f32 %v3521, %v3601
      %v3634 = vadd.f32 %v3522, %v3602
      %v3635 = vadd.f32 %v3523, %v3603
      %v3636 = vadd.f32 %v3524, %v3604
      %v3637 = vadd.f32 %v3525, %v3605
      %v3638 = vadd.f32 %v3526, %v3606
      %v3639 = vadd.f32 %v3527, %v3607
      %v3640 = vadd.f32 %v3528, %v3608
      %v3641 = vadd.f32 %v3529, %v3609
      %v3642 = vadd.f32 %v3530, %v3610
      %v3643 = vadd.f32 %v3531, %v3611
      %v3644 = vadd.f32 %v3532, %v3612
      %v3645 = vadd.f32 %v3533, %v3613
      %v3646 = vadd.f32 %v3534, %v3614
      %v3647 = vlaneseq
      %v3648 = vshrl.u32 %v3647, 7
      %v3649 = vsub.s32 6, %v3648
      %v3650 = vrot.slane %v409, %v3649
      %v3651 = vmul.f32 %v3537, %v3650
      %v3652 = vmul.f32 %v3538, %v3650
      %v3653 = vmul.f32 %v3539, %v3650
      %v3654 = vmul.f32 %v3540, %v3650
      %v3655 = vmul.f32 %v3541, %v3650
      %v3656 = vmul.f32 %v3542, %v3650
      %v3657 = vmul.f32 %v3543, %v3650
      %v3658 = vmul.f32 %v3544, %v3650
      %v3659 = vmul.f32 %v3545, %v3650
      %v3660 = vmul.f32 %v3546, %v3650
      %v3661 = vmul.f32 %v3547, %v3650
      %v3662 = vmul.f32 %v3548, %v3650
      %v3663 = vmul.f32 %v3549, %v3650
      %v3664 = vmul.f32 %v3550, %v3650
      %v3665 = vmul.f32 %v3551, %v3650
      %v3666 = vmul.f32 %v3552, %v3650
      %v3667 = vmul.f32 %v3553, %v3650
      %v3668 = vmul.f32 %v3554, %v3650
      %v3669 = vmul.f32 %v3555, %v3650
      %v3670 = vmul.f32 %v3556, %v3650
      %v3671 = vmul.f32 %v3557, %v3650
      %v3672 = vmul.f32 %v3558, %v3650
      %v3673 = vmul.f32 %v3559, %v3650
      %v3674 = vmul.f32 %v3560, %v3650
      %v3675 = vmul.f32 %v3561, %v3650
      %v3676 = vmul.f32 %v3562, %v3650
      %v3677 = vmul.f32 %v3563, %v3650
      %v3678 = vmul.f32 %v3564, %v3650
      %v3679 = vmul.f32 %v3565, %v3650
      %v3680 = vmul.f32 %v3566, %v3650
      %v3681 = vmul.f32 %v3567, %v3650
      %v3682 = vmul.f32 %v3568, %v3650
      %v3683 = vadd.f32 %v3615, %v3651
      %v3684 = vadd.f32 %v3616, %v3652
      %v3685 = vadd.f32 %v3617, %v3653
      %v3686 = vadd.f32 %v3618, %v3654
      %v3687 = vadd.f32 %v3619, %v3655
      %v3688 = vadd.f32 %v3620, %v3656
      %v3689 = vadd.f32 %v3621, %v3657
      %v3690 = vadd.f32 %v3622, %v3658
      %v3691 = vadd.f32 %v3623, %v3659
      %v3692 = vadd.f32 %v3624, %v3660
      %v3693 = vadd.f32 %v3625, %v3661
      %v3694 = vadd.f32 %v3626, %v3662
      %v3695 = vadd.f32 %v3627, %v3663
      %v3696 = vadd.f32 %v3628, %v3664
      %v3697 = vadd.f32 %v3629, %v3665
      %v3698 = vadd.f32 %v3630, %v3666
      %v3699 = vadd.f32 %v3631, %v3667
      %v3700 = vadd.f32 %v3632, %v3668
      %v3701 = vadd.f32 %v3633, %v3669
      %v3702 = vadd.f32 %v3634, %v3670
      %v3703 = vadd.f32 %v3635, %v3671
      %v3704 = vadd.f32 %v3636, %v3672
      %v3705 = vadd.f32 %v3637, %v3673
      %v3706 = vadd.f32 %v3638, %v3674
      %v3707 = vadd.f32 %v3639, %v3675
      %v3708 = vadd.f32 %v3640, %v3676
      %v3709 = vadd.f32 %v3641, %v3677
      %v3710 = vadd.f32 %v3642, %v3678
      %v3711 = vadd.f32 %v3643, %v3679
      %v3712 = vadd.f32 %v3644, %v3680
      %v3713 = vadd.f32 %v3645, %v3681
      %v3714 = vadd.f32 %v3646, %v3682
      %v3715 = vlaneseq
      %v3716 = vshrl.u32 %v3715, 7
      %v3717 = vsub.s32 6, %v3716
      %v3718 = vrot.slane %v410, %v3717
      %v3719 = vmul.f32 %v3539, %v3718
      %v3720 = vmul.f32 %v3540, %v3718
      %v3721 = vmul.f32 %v3541, %v3718
      %v3722 = vmul.f32 %v3542, %v3718
      %v3723 = vmul.f32 %v3543, %v3718
      %v3724 = vmul.f32 %v3544, %v3718
      %v3725 = vmul.f32 %v3545, %v3718
      %v3726 = vmul.f32 %v3546, %v3718
      %v3727 = vmul.f32 %v3547, %v3718
      %v3728 = vmul.f32 %v3548, %v3718
      %v3729 = vmul.f32 %v3549, %v3718
      %v3730 = vmul.f32 %v3550, %v3718
      %v3731 = vmul.f32 %v3551, %v3718
      %v3732 = vmul.f32 %v3552, %v3718
      %v3733 = vmul.f32 %v3553, %v3718
      %v3734 = vmul.f32 %v3554, %v3718
      %v3735 = vmul.f32 %v3555, %v3718
      %v3736 = vmul.f32 %v3556, %v3718
      %v3737 = vmul.f32 %v3557, %v3718
      %v3738 = vmul.f32 %v3558, %v3718
      %v3739 = vmul.f32 %v3559, %v3718
      %v3740 = vmul.f32 %v3560, %v3718
      %v3741 = vmul.f32 %v3561, %v3718
      %v3742 = vmul.f32 %v3562, %v3718
      %v3743 = vmul.f32 %v3563, %v3718
      %v3744 = vmul.f32 %v3564, %v3718
      %v3745 = vmul.f32 %v3565, %v3718
      %v3746 = vmul.f32 %v3566, %v3718
      %v3747 = vmul.f32 %v3567, %v3718
      %v3748 = vmul.f32 %v3568, %v3718
      %v3749 = vmul.f32 %v3569, %v3718
      %v3750 = vmul.f32 %v3570, %v3718
      %v3751 = vadd.f32 %v3683, %v3719
      %v3752 = vadd.f32 %v3684, %v3720
      %v3753 = vadd.f32 %v3685, %v3721
      %v3754 = vadd.f32 %v3686, %v3722
      %v3755 = vadd.f32 %v3687, %v3723
      %v3756 = vadd.f32 %v3688, %v3724
      %v3757 = vadd.f32 %v3689, %v3725
      %v3758 = vadd.f32 %v3690, %v3726
      %v3759 = vadd.f32 %v3691, %v3727
      %v3760 = vadd.f32 %v3692, %v3728
      %v3761 = vadd.f32 %v3693, %v3729
      %v3762 = vadd.f32 %v3694, %v3730
      %v3763 = vadd.f32 %v3695, %v3731
      %v3764 = vadd.f32 %v3696, %v3732
      %v3765 = vadd.f32 %v3697, %v3733
      %v3766 = vadd.f32 %v3698, %v3734
      %v3767 = vadd.f32 %v3699, %v3735
      %v3768 = vadd.f32 %v3700, %v3736
      %v3769 = vadd.f32 %v3701, %v3737
      %v3770 = vadd.f32 %v3702, %v3738
      %v3771 = vadd.f32 %v3703, %v3739
      %v3772 = vadd.f32 %v3704, %v3740
      %v3773 = vadd.f32 %v3705, %v3741
      %v3774 = vadd.f32 %v3706, %v3742
      %v3775 = vadd.f32 %v3707, %v3743
      %v3776 = vadd.f32 %v3708, %v3744
      %v3777 = vadd.f32 %v3709, %v3745
      %v3778 = vadd.f32 %v3710, %v3746
      %v3779 = vadd.f32 %v3711, %v3747
      %v3780 = vadd.f32 %v3712, %v3748
      %v3781 = vadd.f32 %v3713, %v3749
      %v3782 = vadd.f32 %v3714, %v3750
      %v3783 = vlaneseq
      %v3784 = vshrl.u32 %v3783, 7
      %v3785 = vsub.s32 6, %v3784
      %v3786 = vrot.slane %v411, %v3785
      %v3787 = vmul.f32 %v3541, %v3786
      %v3788 = vmul.f32 %v3542, %v3786
      %v3789 = vmul.f32 %v3543, %v3786
      %v3790 = vmul.f32 %v3544, %v3786
      %v3791 = vmul.f32 %v3545, %v3786
      %v3792 = vmul.f32 %v3546, %v3786
      %v3793 = vmul.f32 %v3547, %v3786
      %v3794 = vmul.f32 %v3548, %v3786
      %v3795 = vmul.f32 %v3549, %v3786
      %v3796 = vmul.f32 %v3550, %v3786
      %v3797 = vmul.f32 %v3551, %v3786
      %v3798 = vmul.f32 %v3552, %v3786
      %v3799 = vmul.f32 %v3553, %v3786
      %v3800 = vmul.f32 %v3554, %v3786
      %v3801 = vmul.f32 %v3555, %v3786
      %v3802 = vmul.f32 %v3556, %v3786
      %v3803 = vmul.f32 %v3557, %v3786
      %v3804 = vmul.f32 %v3558, %v3786
      %v3805 = vmul.f32 %v3559, %v3786
      %v3806 = vmul.f32 %v3560, %v3786
      %v3807 = vmul.f32 %v3561, %v3786
      %v3808 = vmul.f32 %v3562, %v3786
      %v3809 = vmul.f32 %v3563, %v3786
      %v3810 = vmul.f32 %v3564, %v3786
      %v3811 = vmul.f32 %v3565, %v3786
      %v3812 = vmul.f32 %v3566, %v3786
      %v3813 = vmul.f32 %v3567, %v3786
      %v3814 = vmul.f32 %v3568, %v3786
      %v3815 = vmul.f32 %v3569, %v3786
      %v3816 = vmul.f32 %v3570, %v3786
      %v3817 = vmul.f32 %v3571, %v3786
      %v3818 = vmul.f32 %v3572, %v3786
      %v3819 = vadd.f32 %v3751, %v3787
      %v3820 = vadd.f32 %v3752, %v3788
      %v3821 = vadd.f32 %v3753, %v3789
      %v3822 = vadd.f32 %v3754, %v3790
      %v3823 = vadd.f32 %v3755, %v3791
      %v3824 = vadd.f32 %v3756, %v3792
      %v3825 = vadd.f32 %v3757, %v3793
      %v3826 = vadd.f32 %v3758, %v3794
      %v3827 = vadd.f32 %v3759, %v3795
      %v3828 = vadd.f32 %v3760, %v3796
      %v3829 = vadd.f32 %v3761, %v3797
      %v3830 = vadd.f32 %v3762, %v3798
      %v3831 = vadd.f32 %v3763, %v3799
      %v3832 = vadd.f32 %v3764, %v3800
      %v3833 = vadd.f32 %v3765, %v3801
      %v3834 = vadd.f32 %v3766, %v3802
      %v3835 = vadd.f32 %v3767, %v3803
      %v3836 = vadd.f32 %v3768, %v3804
      %v3837 = vadd.f32 %v3769, %v3805
      %v3838 = vadd.f32 %v3770, %v3806
      %v3839 = vadd.f32 %v3771, %v3807
      %v3840 = vadd.f32 %v3772, %v3808
      %v3841 = vadd.f32 %v3773, %v3809
      %v3842 = vadd.f32 %v3774, %v3810
      %v3843 = vadd.f32 %v3775, %v3811
      %v3844 = vadd.f32 %v3776, %v3812
      %v3845 = vadd.f32 %v3777, %v3813
      %v3846 = vadd.f32 %v3778, %v3814
      %v3847 = vadd.f32 %v3779, %v3815
      %v3848 = vadd.f32 %v3780, %v3816
      %v3849 = vadd.f32 %v3781, %v3817
      %v3850 = vadd.f32 %v3782, %v3818
      %v3851 = vlaneseq
      %v3852 = vshrl.u32 %v3851, 7
      %v3853 = vsub.s32 6, %v3852
      %v3854 = vrot.slane %v412, %v3853
      %v3855 = vmul.f32 %v3543, %v3854
      %v3856 = vmul.f32 %v3544, %v3854
      %v3857 = vmul.f32 %v3545, %v3854
      %v3858 = vmul.f32 %v3546, %v3854
      %v3859 = vmul.f32 %v3547, %v3854
      %v3860 = vmul.f32 %v3548, %v3854
      %v3861 = vmul.f32 %v3549, %v3854
      %v3862 = vmul.f32 %v3550, %v3854
      %v3863 = vmul.f32 %v3551, %v3854
      %v3864 = vmul.f32 %v3552, %v3854
      %v3865 = vmul.f32 %v3553, %v3854
      %v3866 = vmul.f32 %v3554, %v3854
      %v3867 = vmul.f32 %v3555, %v3854
      %v3868 = vmul.f32 %v3556, %v3854
      %v3869 = vmul.f32 %v3557, %v3854
      %v3870 = vmul.f32 %v3558, %v3854
      %v3871 = vmul.f32 %v3559, %v3854
      %v3872 = vmul.f32 %v3560, %v3854
      %v3873 = vmul.f32 %v3561, %v3854
      %v3874 = vmul.f32 %v3562, %v3854
      %v3875 = vmul.f32 %v3563, %v3854
      %v3876 = vmul.f32 %v3564, %v3854
      %v3877 = vmul.f32 %v3565, %v3854
      %v3878 = vmul.f32 %v3566, %v3854
      %v3879 = vmul.f32 %v3567, %v3854
      %v3880 = vmul.f32 %v3568, %v3854
      %v3881 = vmul.f32 %v3569, %v3854
      %v3882 = vmul.f32 %v3570, %v3854
      %v3883 = vmul.f32 %v3571, %v3854
      %v3884 = vmul.f32 %v3572, %v3854
      %v3885 = vmul.f32 %v3573, %v3854
      %v3886 = vmul.f32 %v3574, %v3854
      %v3887 = vadd.f32 %v3819, %v3855
      %v3888 = vadd.f32 %v3820, %v3856
      %v3889 = vadd.f32 %v3821, %v3857
      %v3890 = vadd.f32 %v3822, %v3858
      %v3891 = vadd.f32 %v3823, %v3859
      %v3892 = vadd.f32 %v3824, %v3860
      %v3893 = vadd.f32 %v3825, %v3861
      %v3894 = vadd.f32 %v3826, %v3862
      %v3895 = vadd.f32 %v3827, %v3863
      %v3896 = vadd.f32 %v3828, %v3864
      %v3897 = vadd.f32 %v3829, %v3865
      %v3898 = vadd.f32 %v3830, %v3866
      %v3899 = vadd.f32 %v3831, %v3867
      %v3900 = vadd.f32 %v3832, %v3868
      %v3901 = vadd.f32 %v3833, %v3869
      %v3902 = vadd.f32 %v3834, %v3870
      %v3903 = vadd.f32 %v3835, %v3871
      %v3904 = vadd.f32 %v3836, %v3872
      %v3905 = vadd.f32 %v3837, %v3873
      %v3906 = vadd.f32 %v3838, %v3874
      %v3907 = vadd.f32 %v3839, %v3875
      %v3908 = vadd.f32 %v3840, %v3876
      %v3909 = vadd.f32 %v3841, %v3877
      %v3910 = vadd.f32 %v3842, %v3878
      %v3911 = vadd.f32 %v3843, %v3879
      %v3912 = vadd.f32 %v3844, %v3880
      %v3913 = vadd.f32 %v3845, %v3881
      %v3914 = vadd.f32 %v3846, %v3882
      %v3915 = vadd.f32 %v3847, %v3883
      %v3916 = vadd.f32 %v3848, %v3884
      %v3917 = vadd.f32 %v3849, %v3885
      %v3918 = vadd.f32 %v3850, %v3886
      %v3919 = vlaneseq
      %v3920 = vshrl.u32 %v3919, 7
      %v3921 = vsub.s32 6, %v3920
      %v3922 = vrot.slane %v413, %v3921
      %v3923 = vmul.f32 %v3545, %v3922
      %v3924 = vmul.f32 %v3546, %v3922
      %v3925 = vmul.f32 %v3547, %v3922
      %v3926 = vmul.f32 %v3548, %v3922
      %v3927 = vmul.f32 %v3549, %v3922
      %v3928 = vmul.f32 %v3550, %v3922
      %v3929 = vmul.f32 %v3551, %v3922
      %v3930 = vmul.f32 %v3552, %v3922
      %v3931 = vmul.f32 %v3553, %v3922
      %v3932 = vmul.f32 %v3554, %v3922
      %v3933 = vmul.f32 %v3555, %v3922
      %v3934 = vmul.f32 %v3556, %v3922
      %v3935 = vmul.f32 %v3557, %v3922
      %v3936 = vmul.f32 %v3558, %v3922
      %v3937 = vmul.f32 %v3559, %v3922
      %v3938 = vmul.f32 %v3560, %v3922
      %v3939 = vmul.f32 %v3561, %v3922
      %v3940 = vmul.f32 %v3562, %v3922
      %v3941 = vmul.f32 %v3563, %v3922
      %v3942 = vmul.f32 %v3564, %v3922
      %v3943 = vmul.f32 %v3565, %v3922
      %v3944 = vmul.f32 %v3566, %v3922
      %v3945 = vmul.f32 %v3567, %v3922
      %v3946 = vmul.f32 %v3568, %v3922
      %v3947 = vmul.f32 %v3569, %v3922
      %v3948 = vmul.f32 %v3570, %v3922
      %v3949 = vmul.f32 %v3571, %v3922
      %v3950 = vmul.f32 %v3572, %v3922
      %v3951 = vmul.f32 %v3573, %v3922
      %v3952 = vmul.f32 %v3574, %v3922
      %v3953 = vmul.f32 %v3575, %v3922
      %v3954 = vmul.f32 %v3576, %v3922
      %v3955 = vadd.f32 %v3887, %v3923
      %v3956 = vadd.f32 %v3888, %v3924
      %v3957 = vadd.f32 %v3889, %v3925
      %v3958 = vadd.f32 %v3890, %v3926
      %v3959 = vadd.f32 %v3891, %v3927
      %v3960 = vadd.f32 %v3892, %v3928
      %v3961 = vadd.f32 %v3893, %v3929
      %v3962 = vadd.f32 %v3894, %v3930
      %v3963 = vadd.f32 %v3895, %v3931
      %v3964 = vadd.f32 %v3896, %v3932
      %v3965 = vadd.f32 %v3897, %v3933
      %v3966 = vadd.f32 %v3898, %v3934
      %v3967 = vadd.f32 %v3899, %v3935
      %v3968 = vadd.f32 %v3900, %v3936
      %v3969 = vadd.f32 %v3901, %v3937
      %v3970 = vadd.f32 %v3902, %v3938
      %v3971 = vadd.f32 %v3903, %v3939
      %v3972 = vadd.f32 %v3904, %v3940
      %v3973 = vadd.f32 %v3905, %v3941
      %v3974 = vadd.f32 %v3906, %v3942
      %v3975 = vadd.f32 %v3907, %v3943
      %v3976 = vadd.f32 %v3908, %v3944
      %v3977 = vadd.f32 %v3909, %v3945
      %v3978 = vadd.f32 %v3910, %v3946
      %v3979 = vadd.f32 %v3911, %v3947
      %v3980 = vadd.f32 %v3912, %v3948
      %v3981 = vadd.f32 %v3913, %v3949
      %v3982 = vadd.f32 %v3914, %v3950
      %v3983 = vadd.f32 %v3915, %v3951
      %v3984 = vadd.f32 %v3916, %v3952
      %v3985 = vadd.f32 %v3917, %v3953
      %v3986 = vadd.f32 %v3918, %v3954
      %v3987 = vlaneseq
      %v3988 = vshrl.u32 %v3987, 7
      %v3989 = vsub.s32 6, %v3988
      %v3990 = vrot.slane %v414, %v3989
      %v3991 = vmul.f32 %v3547, %v3990
      %v3992 = vmul.f32 %v3548, %v3990
      %v3993 = vmul.f32 %v3549, %v3990
      %v3994 = vmul.f32 %v3550, %v3990
      %v3995 = vmul.f32 %v3551, %v3990
      %v3996 = vmul.f32 %v3552, %v3990
      %v3997 = vmul.f32 %v3553, %v3990
      %v3998 = vmul.f32 %v3554, %v3990
      %v3999 = vmul.f32 %v3555, %v3990
      %v4000 = vmul.f32 %v3556, %v3990
      %v4001 = vmul.f32 %v3557, %v3990
      %v4002 = vmul.f32 %v3558, %v3990
      %v4003 = vmul.f32 %v3559, %v3990
      %v4004 = vmul.f32 %v3560, %v3990
      %v4005 = vmul.f32 %v3561, %v3990
      %v4006 = vmul.f32 %v3562, %v3990
      %v4007 = vmul.f32 %v3563, %v3990
      %v4008 = vmul.f32 %v3564, %v3990
      %v4009 = vmul.f32 %v3565, %v3990
      %v4010 = vmul.f32 %v3566, %v3990
      %v4011 = vmul.f32 %v3567, %v3990
      %v4012 = vmul.f32 %v3568, %v3990
      %v4013 = vmul.f32 %v3569, %v3990
      %v4014 = vmul.f32 %v3570, %v3990
      %v4015 = vmul.f32 %v3571, %v3990
      %v4016 = vmul.f32 %v3572, %v3990
      %v4017 = vmul.f32 %v3573, %v3990
      %v4018 = vmul.f32 %v3574, %v3990
      %v4019 = vmul.f32 %v3575, %v3990
      %v4020 = vmul.f32 %v3576, %v3990
      %v4021 = vmul.f32 %v3577, %v3990
      %v4022 = vmul.f32 %v3578, %v3990
      %v4023 = vadd.f32 %v3955, %v3991
      %v4024 = vadd.f32 %v3956, %v3992
      %v4025 = vadd.f32 %v3957, %v3993
      %v4026 = vadd.f32 %v3958, %v3994
      %v4027 = vadd.f32 %v3959, %v3995
      %v4028 = vadd.f32 %v3960, %v3996
      %v4029 = vadd.f32 %v3961, %v3997
      %v4030 = vadd.f32 %v3962, %v3998
      %v4031 = vadd.f32 %v3963, %v3999
      %v4032 = vadd.f32 %v3964, %v4000
      %v4033 = vadd.f32 %v3965, %v4001
      %v4034 = vadd.f32 %v3966, %v4002
      %v4035 = vadd.f32 %v3967, %v4003
      %v4036 = vadd.f32 %v3968, %v4004
      %v4037 = vadd.f32 %v3969, %v4005
      %v4038 = vadd.f32 %v3970, %v4006
      %v4039 = vadd.f32 %v3971, %v4007
      %v4040 = vadd.f32 %v3972, %v4008
      %v4041 = vadd.f32 %v3973, %v4009
      %v4042 = vadd.f32 %v3974, %v4010
      %v4043 = vadd.f32 %v3975, %v4011
      %v4044 = vadd.f32 %v3976, %v4012
      %v4045 = vadd.f32 %v3977, %v4013
      %v4046 = vadd.f32 %v3978, %v4014
      %v4047 = vadd.f32 %v3979, %v4015
      %v4048 = vadd.f32 %v3980, %v4016
      %v4049 = vadd.f32 %v3981, %v4017
      %v4050 = vadd.f32 %v3982, %v4018
      %v4051 = vadd.f32 %v3983, %v4019
      %v4052 = vadd.f32 %v3984, %v4020
      %v4053 = vadd.f32 %v3985, %v4021
      %v4054 = vadd.f32 %v3986, %v4022
      %v4055 = vsel %vm253, %v4023, 0.0
      %v4056 = vsel %vm253, %v4024, 0.0
      %v4057 = vadd.f32 %v4055, %v4056
      %v4058 = vsel %vm253, %v4025, 0.0
      %v4059 = vadd.f32 %v4057, %v4058
      %v4060 = vsel %vm253, %v4026, 0.0
      %v4061 = vadd.f32 %v4059, %v4060
      %v4062 = vsel %vm253, %v4027, 0.0
      %v4063 = vadd.f32 %v4061, %v4062
      %v4064 = vsel %vm253, %v4028, 0.0
      %v4065 = vadd.f32 %v4063, %v4064
      %v4066 = vsel %vm253, %v4029, 0.0
      %v4067 = vadd.f32 %v4065, %v4066
      %v4068 = vsel %vm253, %v4030, 0.0
      %v4069 = vadd.f32 %v4067, %v4068
      %v4070 = vsel %vm253, %v4031, 0.0
      %v4071 = vadd.f32 %v4069, %v4070
      %v4072 = vsel %vm253, %v4032, 0.0
      %v4073 = vadd.f32 %v4071, %v4072
      %v4074 = vsel %vm253, %v4033, 0.0
      %v4075 = vadd.f32 %v4073, %v4074
      %v4076 = vsel %vm253, %v4034, 0.0
      %v4077 = vadd.f32 %v4075, %v4076
      %v4078 = vsel %vm253, %v4035, 0.0
      %v4079 = vadd.f32 %v4077, %v4078
      %v4080 = vsel %vm253, %v4036, 0.0
      %v4081 = vadd.f32 %v4079, %v4080
      %v4082 = vsel %vm253, %v4037, 0.0
      %v4083 = vadd.f32 %v4081, %v4082
      %v4084 = vsel %vm253, %v4038, 0.0
      %v4085 = vadd.f32 %v4083, %v4084
      %v4086 = vsel %vm253, %v4039, 0.0
      %v4087 = vadd.f32 %v4085, %v4086
      %v4088 = vsel %vm253, %v4040, 0.0
      %v4089 = vadd.f32 %v4087, %v4088
      %v4090 = vsel %vm253, %v4041, 0.0
      %v4091 = vadd.f32 %v4089, %v4090
      %v4092 = vsel %vm253, %v4042, 0.0
      %v4093 = vadd.f32 %v4091, %v4092
      %v4094 = vsel %vm253, %v4043, 0.0
      %v4095 = vadd.f32 %v4093, %v4094
      %v4096 = vsel %vm253, %v4044, 0.0
      %v4097 = vadd.f32 %v4095, %v4096
      %v4098 = vsel %vm253, %v4045, 0.0
      %v4099 = vadd.f32 %v4097, %v4098
      %v4100 = vsel %vm253, %v4046, 0.0
      %v4101 = vadd.f32 %v4099, %v4100
      %v4102 = vsel %vm253, %v4047, 0.0
      %v4103 = vadd.f32 %v4101, %v4102
      %v4104 = vsel %vm253, %v4048, 0.0
      %v4105 = vadd.f32 %v4103, %v4104
      %v4106 = vsel %vm253, %v4049, 0.0
      %v4107 = vadd.f32 %v4105, %v4106
      %v4108 = vsel %vm253, %v4050, 0.0
      %v4109 = vadd.f32 %v4107, %v4108
      %v4110 = vsel %vm253, %v4051, 0.0
      %v4111 = vadd.f32 %v4109, %v4110
      %v4112 = vsel %vm253, %v4052, 0.0
      %v4113 = vadd.f32 %v4111, %v4112
      %v4114 = vsel %vm253, %v4053, 0.0
      %v4115 = vadd.f32 %v4113, %v4114
      %v4116 = vsel %vm253, %v4054, 0.0
      %v4117 = vadd.f32 %v4115, %v4116
      %v4118 = vrot.slane %v4117, 4
      %v4119 = vadd.f32 %v4117, %v4118
      %v4120 = vrot.slane %v4119, 2
      %v4121 = vadd.f32 %v4119, %v4120
      %v4122 = vrot.slane %v4121, 1
      %v4123 = vadd.f32 %v4121, %v4122
      %v4124 = vrcp.pop 256.0
      %v4125 = vmul.f32 %v4123, %v4124
      %v4126 = vsub.f32 %v4023, %v4125
      %v4127 = vsub.f32 %v4024, %v4125
      %v4128 = vsub.f32 %v4025, %v4125
      %v4129 = vsub.f32 %v4026, %v4125
      %v4130 = vsub.f32 %v4027, %v4125
      %v4131 = vsub.f32 %v4028, %v4125
      %v4132 = vsub.f32 %v4029, %v4125
      %v4133 = vsub.f32 %v4030, %v4125
      %v4134 = vsub.f32 %v4031, %v4125
      %v4135 = vsub.f32 %v4032, %v4125
      %v4136 = vsub.f32 %v4033, %v4125
      %v4137 = vsub.f32 %v4034, %v4125
      %v4138 = vsub.f32 %v4035, %v4125
      %v4139 = vsub.f32 %v4036, %v4125
      %v4140 = vsub.f32 %v4037, %v4125
      %v4141 = vsub.f32 %v4038, %v4125
      %v4142 = vsub.f32 %v4039, %v4125
      %v4143 = vsub.f32 %v4040, %v4125
      %v4144 = vsub.f32 %v4041, %v4125
      %v4145 = vsub.f32 %v4042, %v4125
      %v4146 = vsub.f32 %v4043, %v4125
      %v4147 = vsub.f32 %v4044, %v4125
      %v4148 = vsub.f32 %v4045, %v4125
      %v4149 = vsub.f32 %v4046, %v4125
      %v4150 = vsub.f32 %v4047, %v4125
      %v4151 = vsub.f32 %v4048, %v4125
      %v4152 = vsub.f32 %v4049, %v4125
      %v4153 = vsub.f32 %v4050, %v4125
      %v4154 = vsub.f32 %v4051, %v4125
      %v4155 = vsub.f32 %v4052, %v4125
      %v4156 = vsub.f32 %v4053, %v4125
      %v4157 = vsub.f32 %v4054, %v4125
      %v4158 = vmul.f32 %v4126, %v4126
      %v4159 = vmul.f32 %v4127, %v4127
      %v4160 = vmul.f32 %v4128, %v4128
      %v4161 = vmul.f32 %v4129, %v4129
      %v4162 = vmul.f32 %v4130, %v4130
      %v4163 = vmul.f32 %v4131, %v4131
      %v4164 = vmul.f32 %v4132, %v4132
      %v4165 = vmul.f32 %v4133, %v4133
      %v4166 = vmul.f32 %v4134, %v4134
      %v4167 = vmul.f32 %v4135, %v4135
      %v4168 = vmul.f32 %v4136, %v4136
      %v4169 = vmul.f32 %v4137, %v4137
      %v4170 = vmul.f32 %v4138, %v4138
      %v4171 = vmul.f32 %v4139, %v4139
      %v4172 = vmul.f32 %v4140, %v4140
      %v4173 = vmul.f32 %v4141, %v4141
      %v4174 = vmul.f32 %v4142, %v4142
      %v4175 = vmul.f32 %v4143, %v4143
      %v4176 = vmul.f32 %v4144, %v4144
      %v4177 = vmul.f32 %v4145, %v4145
      %v4178 = vmul.f32 %v4146, %v4146
      %v4179 = vmul.f32 %v4147, %v4147
      %v4180 = vmul.f32 %v4148, %v4148
      %v4181 = vmul.f32 %v4149, %v4149
      %v4182 = vmul.f32 %v4150, %v4150
      %v4183 = vmul.f32 %v4151, %v4151
      %v4184 = vmul.f32 %v4152, %v4152
      %v4185 = vmul.f32 %v4153, %v4153
      %v4186 = vmul.f32 %v4154, %v4154
      %v4187 = vmul.f32 %v4155, %v4155
      %v4188 = vmul.f32 %v4156, %v4156
      %v4189 = vmul.f32 %v4157, %v4157
      %v4190 = vsel %vm253, %v4158, 0.0
      %v4191 = vsel %vm253, %v4159, 0.0
      %v4192 = vadd.f32 %v4190, %v4191
      %v4193 = vsel %vm253, %v4160, 0.0
      %v4194 = vadd.f32 %v4192, %v4193
      %v4195 = vsel %vm253, %v4161, 0.0
      %v4196 = vadd.f32 %v4194, %v4195
      %v4197 = vsel %vm253, %v4162, 0.0
      %v4198 = vadd.f32 %v4196, %v4197
      %v4199 = vsel %vm253, %v4163, 0.0
      %v4200 = vadd.f32 %v4198, %v4199
      %v4201 = vsel %vm253, %v4164, 0.0
      %v4202 = vadd.f32 %v4200, %v4201
      %v4203 = vsel %vm253, %v4165, 0.0
      %v4204 = vadd.f32 %v4202, %v4203
      %v4205 = vsel %vm253, %v4166, 0.0
      %v4206 = vadd.f32 %v4204, %v4205
      %v4207 = vsel %vm253, %v4167, 0.0
      %v4208 = vadd.f32 %v4206, %v4207
      %v4209 = vsel %vm253, %v4168, 0.0
      %v4210 = vadd.f32 %v4208, %v4209
      %v4211 = vsel %vm253, %v4169, 0.0
      %v4212 = vadd.f32 %v4210, %v4211
      %v4213 = vsel %vm253, %v4170, 0.0
      %v4214 = vadd.f32 %v4212, %v4213
      %v4215 = vsel %vm253, %v4171, 0.0
      %v4216 = vadd.f32 %v4214, %v4215
      %v4217 = vsel %vm253, %v4172, 0.0
      %v4218 = vadd.f32 %v4216, %v4217
      %v4219 = vsel %vm253, %v4173, 0.0
      %v4220 = vadd.f32 %v4218, %v4219
      %v4221 = vsel %vm253, %v4174, 0.0
      %v4222 = vadd.f32 %v4220, %v4221
      %v4223 = vsel %vm253, %v4175, 0.0
      %v4224 = vadd.f32 %v4222, %v4223
      %v4225 = vsel %vm253, %v4176, 0.0
      %v4226 = vadd.f32 %v4224, %v4225
      %v4227 = vsel %vm253, %v4177, 0.0
      %v4228 = vadd.f32 %v4226, %v4227
      %v4229 = vsel %vm253, %v4178, 0.0
      %v4230 = vadd.f32 %v4228, %v4229
      %v4231 = vsel %vm253, %v4179, 0.0
      %v4232 = vadd.f32 %v4230, %v4231
      %v4233 = vsel %vm253, %v4180, 0.0
      %v4234 = vadd.f32 %v4232, %v4233
      %v4235 = vsel %vm253, %v4181, 0.0
      %v4236 = vadd.f32 %v4234, %v4235
      %v4237 = vsel %vm253, %v4182, 0.0
      %v4238 = vadd.f32 %v4236, %v4237
      %v4239 = vsel %vm253, %v4183, 0.0
      %v4240 = vadd.f32 %v4238, %v4239
      %v4241 = vsel %vm253, %v4184, 0.0
      %v4242 = vadd.f32 %v4240, %v4241
      %v4243 = vsel %vm253, %v4185, 0.0
      %v4244 = vadd.f32 %v4242, %v4243
      %v4245 = vsel %vm253, %v4186, 0.0
      %v4246 = vadd.f32 %v4244, %v4245
      %v4247 = vsel %vm253, %v4187, 0.0
      %v4248 = vadd.f32 %v4246, %v4247
      %v4249 = vsel %vm253, %v4188, 0.0
      %v4250 = vadd.f32 %v4248, %v4249
      %v4251 = vsel %vm253, %v4189, 0.0
      %v4252 = vadd.f32 %v4250, %v4251
      %v4253 = vrot.slane %v4252, 4
      %v4254 = vadd.f32 %v4252, %v4253
      %v4255 = vrot.slane %v4254, 2
      %v4256 = vadd.f32 %v4254, %v4255
      %v4257 = vrot.slane %v4256, 1
      %v4258 = vadd.f32 %v4256, %v4257
      %v4259 = vrcp.pop 255.0
      %v4260 = vmul.f32 %v4258, %v4259
      %v4261 = vrsqrt.pop %v4260
      %v4262 = vmul.f32 %v4260, %v4261
      %vm4263 = vcmp.eq.f32.partialorder %v4260, inf
      %v4264 = vsel %vm4263, %v4260, %v4262
      %vm4265 = vcmp.eq.f32.partialorder %v4260, 0.0
      %v4266 = vand.u32 %v4260, 2147483648
      %v4267 = vsel %vm4265, %v4266, %v4264
      %v4268 = vadd.f32 %v4267, 1e-05
      %v4269 = vrcp.pop %v4268
      %v4270 = vld [vmem:[%s2] sm:$0x1]
      %v4271 = vmul.f32 %v4270, %v4269
      %v4272 = vld [vmem:[%s3] sm:$0x1]
      %v4273 = vmul.f32 %v4125, %v4271
      %v4274 = vsub.f32 %v4272, %v4273
      %v4276 = vlaneseq
      %v4277 = vshrl.u32 %v4276, 7
      %v4278 = vsub.s32 0, %v4277
      %v4279 = vrot.slane %v4271, %v4278
      %v4281 = vmul.f32 %v4023, %v4279
      %v4282 = vmul.f32 %v4024, %v4279
      %v4283 = vmul.f32 %v4025, %v4279
      %v4284 = vmul.f32 %v4026, %v4279
      %v4285 = vmul.f32 %v4027, %v4279
      %v4286 = vmul.f32 %v4028, %v4279
      %v4287 = vmul.f32 %v4029, %v4279
      %v4288 = vmul.f32 %v4030, %v4279
      %v4289 = vmul.f32 %v4031, %v4279
      %v4290 = vmul.f32 %v4032, %v4279
      %v4291 = vmul.f32 %v4033, %v4279
      %v4292 = vmul.f32 %v4034, %v4279
      %v4293 = vmul.f32 %v4035, %v4279
      %v4294 = vmul.f32 %v4036, %v4279
      %v4295 = vmul.f32 %v4037, %v4279
      %v4296 = vmul.f32 %v4038, %v4279
      %v4297 = vmul.f32 %v4039, %v4279
      %v4298 = vmul.f32 %v4040, %v4279
      %v4299 = vmul.f32 %v4041, %v4279
      %v4300 = vmul.f32 %v4042, %v4279
      %v4301 = vmul.f32 %v4043, %v4279
      %v4302 = vmul.f32 %v4044, %v4279
      %v4303 = vmul.f32 %v4045, %v4279
      %v4304 = vmul.f32 %v4046, %v4279
      %v4305 = vmul.f32 %v4047, %v4279
      %v4306 = vmul.f32 %v4048, %v4279
      %v4307 = vmul.f32 %v4049, %v4279
      %v4308 = vmul.f32 %v4050, %v4279
      %v4309 = vmul.f32 %v4051, %v4279
      %v4310 = vmul.f32 %v4052, %v4279
      %v4311 = vmul.f32 %v4053, %v4279
      %v4312 = vmul.f32 %v4054, %v4279
      %v4314 = vlaneseq
      %v4315 = vshrl.u32 %v4314, 7
      %v4316 = vsub.s32 0, %v4315
      %v4317 = vrot.slane %v4274, %v4316
      %v4319 = vadd.f32 %v4281, %v4317
      %v4320 = vadd.f32 %v4282, %v4317
      %v4321 = vadd.f32 %v4283, %v4317
      %v4322 = vadd.f32 %v4284, %v4317
      %v4323 = vadd.f32 %v4285, %v4317
      %v4324 = vadd.f32 %v4286, %v4317
      %v4325 = vadd.f32 %v4287, %v4317
      %v4326 = vadd.f32 %v4288, %v4317
      %v4327 = vadd.f32 %v4289, %v4317
      %v4328 = vadd.f32 %v4290, %v4317
      %v4329 = vadd.f32 %v4291, %v4317
      %v4330 = vadd.f32 %v4292, %v4317
      %v4331 = vadd.f32 %v4293, %v4317
      %v4332 = vadd.f32 %v4294, %v4317
      %v4333 = vadd.f32 %v4295, %v4317
      %v4334 = vadd.f32 %v4296, %v4317
      %v4335 = vadd.f32 %v4297, %v4317
      %v4336 = vadd.f32 %v4298, %v4317
      %v4337 = vadd.f32 %v4299, %v4317
      %v4338 = vadd.f32 %v4300, %v4317
      %v4339 = vadd.f32 %v4301, %v4317
      %v4340 = vadd.f32 %v4302, %v4317
      %v4341 = vadd.f32 %v4303, %v4317
      %v4342 = vadd.f32 %v4304, %v4317
      %v4343 = vadd.f32 %v4305, %v4317
      %v4344 = vadd.f32 %v4306, %v4317
      %v4345 = vadd.f32 %v4307, %v4317
      %v4346 = vadd.f32 %v4308, %v4317
      %v4347 = vadd.f32 %v4309, %v4317
      %v4348 = vadd.f32 %v4310, %v4317
      %v4349 = vadd.f32 %v4311, %v4317
      %v4350 = vadd.f32 %v4312, %v4317
      %v4351 = vpack.c.bf16 %v4320, %v4319
      %v4352 = vpack.c.bf16 %v4322, %v4321
      %v4353 = vpack.c.bf16 %v4324, %v4323
      %v4354 = vpack.c.bf16 %v4326, %v4325
      %v4355 = vpack.c.bf16 %v4328, %v4327
      %v4356 = vpack.c.bf16 %v4330, %v4329
      %v4357 = vpack.c.bf16 %v4332, %v4331
      %v4358 = vpack.c.bf16 %v4334, %v4333
      %v4359 = vpack.c.bf16 %v4336, %v4335
      %v4360 = vpack.c.bf16 %v4338, %v4337
      %v4361 = vpack.c.bf16 %v4340, %v4339
      %v4362 = vpack.c.bf16 %v4342, %v4341
      %v4363 = vpack.c.bf16 %v4344, %v4343
      %v4364 = vpack.c.bf16 %v4346, %v4345
      %v4365 = vpack.c.bf16 %v4348, %v4347
      %v4366 = vpack.c.bf16 %v4350, %v4349
      %v4367 = vld [vmem:[%s4] sm:$0x3]
      %v4369 = vsel %vm253, %v4351, 0
      %v4372 = vsel %vm253, %v4352, 0
      %v4375 = vsel %vm253, %v4353, 0
      %v4378 = vsel %vm253, %v4354, 0
      %v4381 = vsel %vm253, %v4355, 0
      %v4384 = vsel %vm253, %v4356, 0
      %v4387 = vsel %vm253, %v4357, 0
      %v4390 = vsel %vm253, %v4358, 0
      %v4393 = vsel %vm253, %v4359, 0
      %v4396 = vsel %vm253, %v4360, 0
      %v4399 = vsel %vm253, %v4361, 0
      %v4402 = vsel %vm253, %v4362, 0
      %v4405 = vsel %vm253, %v4363, 0
      %v4408 = vsel %vm253, %v4364, 0
      %v4411 = vsel %vm253, %v4365, 0
      %v4414 = vsel %vm253, %v4366, 0
      %vm4416 = vcmask 1041408
      %v4418 = vsel %vm4416, %v4367, 0
      %4420 = vmatprep.subr.bf16.mxu0 0
      %4421 = vmatpush1.bf16.msra.mxu0 %v4418
      %4422 = vmatprep.subr.bf16.mxu0 0
      %4423 = vmatpush1.bf16.msra.mxu0 0
      %4424 = vmatprep.subr.bf16.mxu0 0
      %4425 = vmatpush1.bf16.msra.mxu0 0
      %4426 = vmatprep.subr.bf16.mxu0 0
      %4427 = vmatpush1.bf16.msra.mxu0 0
      %4428 = vmatprep.subr.bf16.mxu0 0
      %4429 = vmatpush1.bf16.msra.mxu0 0
      %4430 = vmatprep.subr.bf16.mxu0 0
      %4431 = vmatpush1.bf16.msra.mxu0 0
      %4432 = vmatprep.subr.bf16.mxu0 0
      %4433 = vmatpush1.bf16.msra.mxu0 0
      %4434 = vmatprep.subr.bf16.mxu0 0
      %4435 = vmatpush1.bf16.msra.mxu0 0
      %4436 = vmatprep.subr.bf16.mxu0 0
      %4437 = vmatpush1.bf16.msra.mxu0 0
      %4438 = vmatprep.subr.bf16.mxu0 0
      %4439 = vmatpush1.bf16.msra.mxu0 0
      %4440 = vmatprep.subr.bf16.mxu0 0
      %4441 = vmatpush1.bf16.msra.mxu0 0
      %4442 = vmatprep.subr.bf16.mxu0 0
      %4443 = vmatpush1.bf16.msra.mxu0 0
      %4444 = vmatprep.subr.bf16.mxu0 0
      %4445 = vmatpush1.bf16.msra.mxu0 0
      %4446 = vmatprep.subr.bf16.mxu0 0
      %4447 = vmatpush1.bf16.msra.mxu0 0
      %4448 = vmatprep.subr.bf16.mxu0 0
      %4449 = vmatpush1.bf16.msra.mxu0 0
      %4450 = vmatprep.subr.bf16.mxu0 0
      %4451 = vmatpush1.bf16.msra.mxu0 0
      %4452 = vmatprep.mubr.bf16.mxu0 0
      %4453 = vmatmul.mubr.bf16.gmra.mrb[0].mxu0 %v4369
      %v4454 = vpop.f32.mrb[0].mxu0
      %v4455 = vadd.f32 0.0, %v4454
      %v4456 = vpop.f32.mrb[0].mxu0
      %v4457 = vpop.f32.mrb[0].mxu0
      %v4458 = vadd.f32 0.0, %v4457
      %v4459 = vpop.f32.mrb[0].mxu0
      %4460 = vmatprep.mubr.bf16.mxu0 0
      %4461 = vmatmul.mubr.bf16.gmra.mrb[0].mxu0 %v4372
      %v4462 = vpop.f32.mrb[0].mxu0
      %v4463 = vadd.f32 0.0, %v4462
      %v4464 = vpop.f32.mrb[0].mxu0
      %v4465 = vpop.f32.mrb[0].mxu0
      %v4466 = vadd.f32 0.0, %v4465
      %v4467 = vpop.f32.mrb[0].mxu0
      %4468 = vmatprep.mubr.bf16.mxu0 0
      %4469 = vmatmul.mubr.bf16.gmra.mrb[0].mxu0 %v4375
      %v4470 = vpop.f32.mrb[0].mxu0
      %v4471 = vadd.f32 0.0, %v4470
      %v4472 = vpop.f32.mrb[0].mxu0
      %v4473 = vpop.f32.mrb[0].mxu0
      %v4474 = vadd.f32 0.0, %v4473
      %v4475 = vpop.f32.mrb[0].mxu0
      %4476 = vmatprep.mubr.bf16.mxu0 0
      %4477 = vmatmul.mubr.bf16.gmra.mrb[0].mxu0 %v4378
      %v4478 = vpop.f32.mrb[0].mxu0
      %v4479 = vadd.f32 0.0, %v4478
      %v4480 = vpop.f32.mrb[0].mxu0
      %v4481 = vpop.f32.mrb[0].mxu0
      %v4482 = vadd.f32 0.0, %v4481
      %v4483 = vpop.f32.mrb[0].mxu0
      %4484 = vmatprep.mubr.bf16.mxu0 0
      %4485 = vmatmul.mubr.bf16.gmra.mrb[0].mxu0 %v4381
      %v4486 = vpop.f32.mrb[0].mxu0
      %v4487 = vadd.f32 0.0, %v4486
      %v4488 = vpop.f32.mrb[0].mxu0
      %v4489 = vpop.f32.mrb[0].mxu0
      %v4490 = vadd.f32 0.0, %v4489
      %v4491 = vpop.f32.mrb[0].mxu0
      %4492 = vmatprep.mubr.bf16.mxu0 0
      %4493 = vmatmul.mubr.bf16.gmra.mrb[0].mxu0 %v4384
      %v4494 = vpop.f32.mrb[0].mxu0
      %v4495 = vadd.f32 0.0, %v4494
      %v4496 = vpop.f32.mrb[0].mxu0
      %v4497 = vpop.f32.mrb[0].mxu0
      %v4498 = vadd.f32 0.0, %v4497
      %v4499 = vpop.f32.mrb[0].mxu0
      %4500 = vmatprep.mubr.bf16.mxu0 0
      %4501 = vmatmul.mubr.bf16.gmra.mrb[0].mxu0 %v4387
      %v4502 = vpop.f32.mrb[0].mxu0
      %v4503 = vadd.f32 0.0, %v4502
      %v4504 = vpop.f32.mrb[0].mxu0
      %v4505 = vpop.f32.mrb[0].mxu0
      %v4506 = vadd.f32 0.0, %v4505
      %v4507 = vpop.f32.mrb[0].mxu0
      %4508 = vmatprep.mubr.bf16.mxu0 0
      %4509 = vmatmul.mubr.bf16.gmra.mrb[0].mxu0 %v4390
      %v4510 = vpop.f32.mrb[0].mxu0
      %v4511 = vadd.f32 0.0, %v4510
      %v4512 = vpop.f32.mrb[0].mxu0
      %v4513 = vpop.f32.mrb[0].mxu0
      %v4514 = vadd.f32 0.0, %v4513
      %v4515 = vpop.f32.mrb[0].mxu0
      %4516 = vmatprep.mubr.bf16.mxu0 0
      %4517 = vmatmul.mubr.bf16.gmra.mrb[0].mxu0 %v4393
      %v4518 = vpop.f32.mrb[0].mxu0
      %v4519 = vadd.f32 0.0, %v4518
      %v4520 = vpop.f32.mrb[0].mxu0
      %v4521 = vpop.f32.mrb[0].mxu0
      %v4522 = vadd.f32 0.0, %v4521
      %v4523 = vpop.f32.mrb[0].mxu0
      %4524 = vmatprep.mubr.bf16.mxu0 0
      %4525 = vmatmul.mubr.bf16.gmra.mrb[0].mxu0 %v4396
      %v4526 = vpop.f32.mrb[0].mxu0
      %v4527 = vadd.f32 0.0, %v4526
      %v4528 = vpop.f32.mrb[0].mxu0
      %v4529 = vpop.f32.mrb[0].mxu0
      %v4530 = vadd.f32 0.0, %v4529
      %v4531 = vpop.f32.mrb[0].mxu0
      %4532 = vmatprep.mubr.bf16.mxu0 0
      %4533 = vmatmul.mubr.bf16.gmra.mrb[0].mxu0 %v4399
      %v4534 = vpop.f32.mrb[0].mxu0
      %v4535 = vadd.f32 0.0, %v4534
      %v4536 = vpop.f32.mrb[0].mxu0
      %v4537 = vpop.f32.mrb[0].mxu0
      %v4538 = vadd.f32 0.0, %v4537
      %v4539 = vpop.f32.mrb[0].mxu0
      %4540 = vmatprep.mubr.bf16.mxu0 0
      %4541 = vmatmul.mubr.bf16.gmra.mrb[0].mxu0 %v4402
      %v4542 = vpop.f32.mrb[0].mxu0
      %v4543 = vadd.f32 0.0, %v4542
      %v4544 = vpop.f32.mrb[0].mxu0
      %v4545 = vpop.f32.mrb[0].mxu0
      %v4546 = vadd.f32 0.0, %v4545
      %v4547 = vpop.f32.mrb[0].mxu0
      %4548 = vmatprep.mubr.bf16.mxu0 0
      %4549 = vmatmul.mubr.bf16.gmra.mrb[0].mxu0 %v4405
      %v4550 = vpop.f32.mrb[0].mxu0
      %v4551 = vadd.f32 0.0, %v4550
      %v4552 = vpop.f32.mrb[0].mxu0
      %v4553 = vpop.f32.mrb[0].mxu0
      %v4554 = vadd.f32 0.0, %v4553
      %v4555 = vpop.f32.mrb[0].mxu0
      %4556 = vmatprep.mubr.bf16.mxu0 0
      %4557 = vmatmul.mubr.bf16.gmra.mrb[0].mxu0 %v4408
      %v4558 = vpop.f32.mrb[0].mxu0
      %v4559 = vadd.f32 0.0, %v4558
      %v4560 = vpop.f32.mrb[0].mxu0
      %v4561 = vpop.f32.mrb[0].mxu0
      %v4562 = vadd.f32 0.0, %v4561
      %v4563 = vpop.f32.mrb[0].mxu0
      %4564 = vmatprep.mubr.bf16.mxu0 0
      %4565 = vmatmul.mubr.bf16.gmra.mrb[0].mxu0 %v4411
      %v4566 = vpop.f32.mrb[0].mxu0
      %v4567 = vadd.f32 0.0, %v4566
      %v4568 = vpop.f32.mrb[0].mxu0
      %v4569 = vpop.f32.mrb[0].mxu0
      %v4570 = vadd.f32 0.0, %v4569
      %v4571 = vpop.f32.mrb[0].mxu0
      %4572 = vmatprep.mubr.bf16.mxu0 0
      %4573 = vmatmul.mubr.bf16.gmra.mrb[0].mxu0 %v4414
      %v4574 = vpop.f32.mrb[0].mxu0
      %v4575 = vadd.f32 0.0, %v4574
      %v4576 = vpop.f32.mrb[0].mxu0
      %v4577 = vpop.f32.mrb[0].mxu0
      %v4578 = vadd.f32 0.0, %v4577
      %v4579 = vpop.f32.mrb[0].mxu0
      %4580 = vdwg.mxu0
      %v4581 = vmul.f32 %v4455, 0.5
      %v4582 = vmul.f32 %v4458, 0.5
      %v4583 = vmul.f32 %v4463, 0.5
      %v4584 = vmul.f32 %v4466, 0.5
      %v4585 = vmul.f32 %v4471, 0.5
      %v4586 = vmul.f32 %v4474, 0.5
      %v4587 = vmul.f32 %v4479, 0.5
      %v4588 = vmul.f32 %v4482, 0.5
      %v4589 = vmul.f32 %v4487, 0.5
      %v4590 = vmul.f32 %v4490, 0.5
      %v4591 = vmul.f32 %v4495, 0.5
      %v4592 = vmul.f32 %v4498, 0.5
      %v4593 = vmul.f32 %v4503, 0.5
      %v4594 = vmul.f32 %v4506, 0.5
      %v4595 = vmul.f32 %v4511, 0.5
      %v4596 = vmul.f32 %v4514, 0.5
      %v4597 = vmul.f32 %v4519, 0.5
      %v4598 = vmul.f32 %v4522, 0.5
      %v4599 = vmul.f32 %v4527, 0.5
      %v4600 = vmul.f32 %v4530, 0.5
      %v4601 = vmul.f32 %v4535, 0.5
      %v4602 = vmul.f32 %v4538, 0.5
      %v4603 = vmul.f32 %v4543, 0.5
      %v4604 = vmul.f32 %v4546, 0.5
      %v4605 = vmul.f32 %v4551, 0.5
      %v4606 = vmul.f32 %v4554, 0.5
      %v4607 = vmul.f32 %v4559, 0.5
      %v4608 = vmul.f32 %v4562, 0.5
      %v4609 = vmul.f32 %v4567, 0.5
      %v4610 = vmul.f32 %v4570, 0.5
      %v4611 = vmul.f32 %v4575, 0.5
      %v4612 = vmul.f32 %v4578, 0.5
      %v4613 = vmul.f32 %v4455, 0.70710677
      %v4614 = vmul.f32 %v4458, 0.70710677
      %v4615 = vmul.f32 %v4463, 0.70710677
      %v4616 = vmul.f32 %v4466, 0.70710677
      %v4617 = vmul.f32 %v4471, 0.70710677
      %v4618 = vmul.f32 %v4474, 0.70710677
      %v4619 = vmul.f32 %v4479, 0.70710677
      %v4620 = vmul.f32 %v4482, 0.70710677
      %v4621 = vmul.f32 %v4487, 0.70710677
      %v4622 = vmul.f32 %v4490, 0.70710677
      %v4623 = vmul.f32 %v4495, 0.70710677
      %v4624 = vmul.f32 %v4498, 0.70710677
      %v4625 = vmul.f32 %v4503, 0.70710677
      %v4626 = vmul.f32 %v4506, 0.70710677
      %v4627 = vmul.f32 %v4511, 0.70710677
      %v4628 = vmul.f32 %v4514, 0.70710677
      %v4629 = vmul.f32 %v4519, 0.70710677
      %v4630 = vmul.f32 %v4522, 0.70710677
      %v4631 = vmul.f32 %v4527, 0.70710677
      %v4632 = vmul.f32 %v4530, 0.70710677
      %v4633 = vmul.f32 %v4535, 0.70710677
      %v4634 = vmul.f32 %v4538, 0.70710677
      %v4635 = vmul.f32 %v4543, 0.70710677
      %v4636 = vmul.f32 %v4546, 0.70710677
      %v4637 = vmul.f32 %v4551, 0.70710677
      %v4638 = vmul.f32 %v4554, 0.70710677
      %v4639 = vmul.f32 %v4559, 0.70710677
      %v4640 = vmul.f32 %v4562, 0.70710677
      %v4641 = vmul.f32 %v4567, 0.70710677
      %v4642 = vmul.f32 %v4570, 0.70710677
      %v4643 = vmul.f32 %v4575, 0.70710677
      %v4644 = vmul.f32 %v4578, 0.70710677
      %v4645 = verf.f32.pop %v4613
      %v4646 = verf.f32.pop %v4614
      %v4647 = verf.f32.pop %v4615
      %v4648 = verf.f32.pop %v4616
      %v4649 = verf.f32.pop %v4617
      %v4650 = verf.f32.pop %v4618
      %v4651 = verf.f32.pop %v4619
      %v4652 = verf.f32.pop %v4620
      %v4653 = verf.f32.pop %v4621
      %v4654 = verf.f32.pop %v4622
      %v4655 = verf.f32.pop %v4623
      %v4656 = verf.f32.pop %v4624
      %v4657 = verf.f32.pop %v4625
      %v4658 = verf.f32.pop %v4626
      %v4659 = verf.f32.pop %v4627
      %v4660 = verf.f32.pop %v4628
      %v4661 = verf.f32.pop %v4629
      %v4662 = verf.f32.pop %v4630
      %v4663 = verf.f32.pop %v4631
      %v4664 = verf.f32.pop %v4632
      %v4665 = verf.f32.pop %v4633
      %v4666 = verf.f32.pop %v4634
      %v4667 = verf.f32.pop %v4635
      %v4668 = verf.f32.pop %v4636
      %v4669 = verf.f32.pop %v4637
      %v4670 = verf.f32.pop %v4638
      %v4671 = verf.f32.pop %v4639
      %v4672 = verf.f32.pop %v4640
      %v4673 = verf.f32.pop %v4641
      %v4674 = verf.f32.pop %v4642
      %v4675 = verf.f32.pop %v4643
      %v4676 = verf.f32.pop %v4644
      %v4677 = vadd.f32 %v4645, 1.0
      %v4678 = vadd.f32 %v4646, 1.0
      %v4679 = vadd.f32 %v4647, 1.0
      %v4680 = vadd.f32 %v4648, 1.0
      %v4681 = vadd.f32 %v4649, 1.0
      %v4682 = vadd.f32 %v4650, 1.0
      %v4683 = vadd.f32 %v4651, 1.0
      %v4684 = vadd.f32 %v4652, 1.0
      %v4685 = vadd.f32 %v4653, 1.0
      %v4686 = vadd.f32 %v4654, 1.0
      %v4687 = vadd.f32 %v4655, 1.0
      %v4688 = vadd.f32 %v4656, 1.0
      %v4689 = vadd.f32 %v4657, 1.0
      %v4690 = vadd.f32 %v4658, 1.0
      %v4691 = vadd.f32 %v4659, 1.0
      %v4692 = vadd.f32 %v4660, 1.0
      %v4693 = vadd.f32 %v4661, 1.0
      %v4694 = vadd.f32 %v4662, 1.0
      %v4695 = vadd.f32 %v4663, 1.0
      %v4696 = vadd.f32 %v4664, 1.0
      %v4697 = vadd.f32 %v4665, 1.0
      %v4698 = vadd.f32 %v4666, 1.0
      %v4699 = vadd.f32 %v4667, 1.0
      %v4700 = vadd.f32 %v4668, 1.0
      %v4701 = vadd.f32 %v4669, 1.0
      %v4702 = vadd.f32 %v4670, 1.0
      %v4703 = vadd.f32 %v4671, 1.0
      %v4704 = vadd.f32 %v4672, 1.0
      %v4705 = vadd.f32 %v4673, 1.0
      %v4706 = vadd.f32 %v4674, 1.0
      %v4707 = vadd.f32 %v4675, 1.0
      %v4708 = vadd.f32 %v4676, 1.0
      %v4709 = vmul.f32 %v4581, %v4677
      %v4710 = vmul.f32 %v4582, %v4678
      %v4711 = vmul.f32 %v4583, %v4679
      %v4712 = vmul.f32 %v4584, %v4680
      %v4713 = vmul.f32 %v4585, %v4681
      %v4714 = vmul.f32 %v4586, %v4682
      %v4715 = vmul.f32 %v4587, %v4683
      %v4716 = vmul.f32 %v4588, %v4684
      %v4717 = vmul.f32 %v4589, %v4685
      %v4718 = vmul.f32 %v4590, %v4686
      %v4719 = vmul.f32 %v4591, %v4687
      %v4720 = vmul.f32 %v4592, %v4688
      %v4721 = vmul.f32 %v4593, %v4689
      %v4722 = vmul.f32 %v4594, %v4690
      %v4723 = vmul.f32 %v4595, %v4691
      %v4724 = vmul.f32 %v4596, %v4692
      %v4725 = vmul.f32 %v4597, %v4693
      %v4726 = vmul.f32 %v4598, %v4694
      %v4727 = vmul.f32 %v4599, %v4695
      %v4728 = vmul.f32 %v4600, %v4696
      %v4729 = vmul.f32 %v4601, %v4697
      %v4730 = vmul.f32 %v4602, %v4698
      %v4731 = vmul.f32 %v4603, %v4699
      %v4732 = vmul.f32 %v4604, %v4700
      %v4733 = vmul.f32 %v4605, %v4701
      %v4734 = vmul.f32 %v4606, %v4702
      %v4735 = vmul.f32 %v4607, %v4703
      %v4736 = vmul.f32 %v4608, %v4704
      %v4737 = vmul.f32 %v4609, %v4705
      %v4738 = vmul.f32 %v4610, %v4706
      %v4739 = vmul.f32 %v4611, %v4707
      %v4740 = vmul.f32 %v4612, %v4708
      %v4741 = vpack.c.bf16 %v4710, %v4709
      %v4742 = vpack.c.bf16 %v4712, %v4711
      %v4743 = vpack.c.bf16 %v4714, %v4713
      %v4744 = vpack.c.bf16 %v4716, %v4715
      %v4745 = vpack.c.bf16 %v4718, %v4717
      %v4746 = vpack.c.bf16 %v4720, %v4719
      %v4747 = vpack.c.bf16 %v4722, %v4721
      %v4748 = vpack.c.bf16 %v4724, %v4723
      %v4749 = vpack.c.bf16 %v4726, %v4725
      %v4750 = vpack.c.bf16 %v4728, %v4727
      %v4751 = vpack.c.bf16 %v4730, %v4729
      %v4752 = vpack.c.bf16 %v4732, %v4731
      %v4753 = vpack.c.bf16 %v4734, %v4733
      %v4754 = vpack.c.bf16 %v4736, %v4735
      %v4755 = vpack.c.bf16 %v4738, %v4737
      %v4756 = vpack.c.bf16 %v4740, %v4739
      %v4757 = vld [vmem:[%s5] sm:$0xf]
      %v4758 = vld [vmem:[%s5 + $0x4] sm:$0xf]
      %v4759 = vld [vmem:[%s246] sm:$0xff]
      %v4760 = vld [vmem:[%s246 + $0x8] sm:$0xff]
      %v4761 = vld [vmem:[%s246 + $0x10] sm:$0xff]
      %v4762 = vld [vmem:[%s246 + $0x18] sm:$0xff]
      %v4763 = vld [vmem:[%s246 + $0x20] sm:$0xff]
      %v4764 = vld [vmem:[%s246 + $0x28] sm:$0xff]
      %v4765 = vld [vmem:[%s246 + $0x30] sm:$0xff]
      %v4766 = vld [vmem:[%s246 + $0x38] sm:$0xff]
      %v4767 = vld [vmem:[%s246 + $0x40] sm:$0xff]
      %v4768 = vld [vmem:[%s246 + $0x48] sm:$0xff]
      %v4769 = vld [vmem:[%s246 + $0x50] sm:$0xff]
      %v4770 = vld [vmem:[%s246 + $0x58] sm:$0xff]
      %v4771 = vld [vmem:[%s246 + $0x60] sm:$0xff]
      %v4772 = vld [vmem:[%s246 + $0x68] sm:$0xff]
      %v4773 = vld [vmem:[%s246 + $0x70] sm:$0xff]
      %v4774 = vld [vmem:[%s246 + $0x78] sm:$0xff]
      %v4775 = vld [vmem:[%s246 + $0x80] sm:$0xff]
      %v4776 = vld [vmem:[%s246 + $0x88] sm:$0xff]
      %v4777 = vld [vmem:[%s246 + $0x90] sm:$0xff]
      %v4778 = vld [vmem:[%s246 + $0x98] sm:$0xff]
      %v4779 = vld [vmem:[%s246 + $0xa0] sm:$0xff]
      %v4780 = vld [vmem:[%s246 + $0xa8] sm:$0xff]
      %v4781 = vld [vmem:[%s246 + $0xb0] sm:$0xff]
      %v4782 = vld [vmem:[%s246 + $0xb8] sm:$0xff]
      %v4783 = vld [vmem:[%s246 + $0xc0] sm:$0xff]
      %v4784 = vld [vmem:[%s246 + $0xc8] sm:$0xff]
      %v4785 = vld [vmem:[%s246 + $0xd0] sm:$0xff]
      %v4786 = vld [vmem:[%s246 + $0xd8] sm:$0xff]
      %v4787 = vld [vmem:[%s246 + $0xe0] sm:$0xff]
      %v4788 = vld [vmem:[%s246 + $0xe8] sm:$0xff]
      %v4789 = vld [vmem:[%s246 + $0xf0] sm:$0xff]
      %v4790 = vld [vmem:[%s246 + $0xf8] sm:$0xff]
      %v4793 = vunpack.c.l.b16 %v4757
      %v4794 = vunpack.c.l.b16 %v4758
      %v4795 = vpack.c.b16 %v4794, %v4793
      %vm4797 = vcmask 130048
      %v4799 = vsel %vm4797, %v4741, 0
      %v4802 = vsel %vm4797, %v4742, 0
      %v4805 = vsel %vm4797, %v4743, 0
      %v4808 = vsel %vm4797, %v4744, 0
      %v4811 = vsel %vm4797, %v4745, 0
      %v4814 = vsel %vm4797, %v4746, 0
      %v4817 = vsel %vm4797, %v4747, 0
      %v4820 = vsel %vm4797, %v4748, 0
      %v4823 = vsel %vm4797, %v4749, 0
      %v4826 = vsel %vm4797, %v4750, 0
      %v4829 = vsel %vm4797, %v4751, 0
      %v4832 = vsel %vm4797, %v4752, 0
      %v4835 = vsel %vm4797, %v4753, 0
      %v4838 = vsel %vm4797, %v4754, 0
      %v4841 = vsel %vm4797, %v4755, 0
      %v4844 = vsel %vm4797, %v4756, 0
      %4846 = vmatprep.subr.bf16.mxu0 0
      %4847 = vmatpush1.bf16.msra.mxu0 %v4795
      %4848 = vmatprep.subr.bf16.mxu0 0
      %4849 = vmatpush1.bf16.msra.mxu0 0
      %4850 = vmatprep.subr.bf16.mxu0 0
      %4851 = vmatpush1.bf16.msra.mxu0 0
      %4852 = vmatprep.subr.bf16.mxu0 0
      %4853 = vmatpush1.bf16.msra.mxu0 0
      %4854 = vmatprep.subr.bf16.mxu0 0
      %4855 = vmatpush1.bf16.msra.mxu0 0
      %4856 = vmatprep.subr.bf16.mxu0 0
      %4857 = vmatpush1.bf16.msra.mxu0 0
      %4858 = vmatprep.subr.bf16.mxu0 0
      %4859 = vmatpush1.bf16.msra.mxu0 0
      %4860 = vmatprep.subr.bf16.mxu0 0
      %4861 = vmatpush1.bf16.msra.mxu0 0
      %4862 = vmatprep.subr.bf16.mxu0 0
      %4863 = vmatpush1.bf16.msra.mxu0 0
      %4864 = vmatprep.subr.bf16.mxu0 0
      %4865 = vmatpush1.bf16.msra.mxu0 0
      %4866 = vmatprep.subr.bf16.mxu0 0
      %4867 = vmatpush1.bf16.msra.mxu0 0
      %4868 = vmatprep.subr.bf16.mxu0 0
      %4869 = vmatpush1.bf16.msra.mxu0 0
      %4870 = vmatprep.subr.bf16.mxu0 0
      %4871 = vmatpush1.bf16.msra.mxu0 0
      %4872 = vmatprep.subr.bf16.mxu0 0
      %4873 = vmatpush1.bf16.msra.mxu0 0
      %4874 = vmatprep.subr.bf16.mxu0 0
      %4875 = vmatpush1.bf16.msra.mxu0 0
      %4876 = vmatprep.subr.bf16.mxu0 0
      %4877 = vmatpush1.bf16.msra.mxu0 0
      %4878 = vmatprep.mubr.bf16.mxu0 0
      %4879 = vmatmul.mubr.bf16.gmra.mrb[0].mxu0 %v4799
      %v4880 = vpop.f32.mrb[0].mxu0
      %v4881 = vadd.f32 %v4759, %v4880
      %v4882 = vpop.f32.mrb[0].mxu0
      %v4883 = vpop.f32.mrb[0].mxu0
      %v4884 = vadd.f32 %v4760, %v4883
      %v4885 = vpop.f32.mrb[0].mxu0
      %4886 = vmatprep.mubr.bf16.mxu0 0
      %4887 = vmatmul.mubr.bf16.gmra.mrb[0].mxu0 %v4802
      %v4888 = vpop.f32.mrb[0].mxu0
      %v4889 = vadd.f32 %v4761, %v4888
      %v4890 = vpop.f32.mrb[0].mxu0
      %v4891 = vpop.f32.mrb[0].mxu0
      %v4892 = vadd.f32 %v4762, %v4891
      %v4893 = vpop.f32.mrb[0].mxu0
      %4894 = vmatprep.mubr.bf16.mxu0 0
      %4895 = vmatmul.mubr.bf16.gmra.mrb[0].mxu0 %v4805
      %v4896 = vpop.f32.mrb[0].mxu0
      %v4897 = vadd.f32 %v4763, %v4896
      %v4898 = vpop.f32.mrb[0].mxu0
      %v4899 = vpop.f32.mrb[0].mxu0
      %v4900 = vadd.f32 %v4764, %v4899
      %v4901 = vpop.f32.mrb[0].mxu0
      %4902 = vmatprep.mubr.bf16.mxu0 0
      %4903 = vmatmul.mubr.bf16.gmra.mrb[0].mxu0 %v4808
      %v4904 = vpop.f32.mrb[0].mxu0
      %v4905 = vadd.f32 %v4765, %v4904
      %v4906 = vpop.f32.mrb[0].mxu0
      %v4907 = vpop.f32.mrb[0].mxu0
      %v4908 = vadd.f32 %v4766, %v4907
      %v4909 = vpop.f32.mrb[0].mxu0
      %4910 = vmatprep.mubr.bf16.mxu0 0
      %4911 = vmatmul.mubr.bf16.gmra.mrb[0].mxu0 %v4811
      %v4912 = vpop.f32.mrb[0].mxu0
      %v4913 = vadd.f32 %v4767, %v4912
      %v4914 = vpop.f32.mrb[0].mxu0
      %v4915 = vpop.f32.mrb[0].mxu0
      %v4916 = vadd.f32 %v4768, %v4915
      %v4917 = vpop.f32.mrb[0].mxu0
      %4918 = vmatprep.mubr.bf16.mxu0 0
      %4919 = vmatmul.mubr.bf16.gmra.mrb[0].mxu0 %v4814
      %v4920 = vpop.f32.mrb[0].mxu0
      %v4921 = vadd.f32 %v4769, %v4920
      %v4922 = vpop.f32.mrb[0].mxu0
      %v4923 = vpop.f32.mrb[0].mxu0
      %v4924 = vadd.f32 %v4770, %v4923
      %v4925 = vpop.f32.mrb[0].mxu0
      %4926 = vmatprep.mubr.bf16.mxu0 0
      %4927 = vmatmul.mubr.bf16.gmra.mrb[0].mxu0 %v4817
      %v4928 = vpop.f32.mrb[0].mxu0
      %v4929 = vadd.f32 %v4771, %v4928
      %v4930 = vpop.f32.mrb[0].mxu0
      %v4931 = vpop.f32.mrb[0].mxu0
      %v4932 = vadd.f32 %v4772, %v4931
      %v4933 = vpop.f32.mrb[0].mxu0
      %4934 = vmatprep.mubr.bf16.mxu0 0
      %4935 = vmatmul.mubr.bf16.gmra.mrb[0].mxu0 %v4820
      %v4936 = vpop.f32.mrb[0].mxu0
      %v4937 = vadd.f32 %v4773, %v4936
      %v4938 = vpop.f32.mrb[0].mxu0
      %v4939 = vpop.f32.mrb[0].mxu0
      %v4940 = vadd.f32 %v4774, %v4939
      %v4941 = vpop.f32.mrb[0].mxu0
      %4942 = vmatprep.mubr.bf16.mxu0 0
      %4943 = vmatmul.mubr.bf16.gmra.mrb[0].mxu0 %v4823
      %v4944 = vpop.f32.mrb[0].mxu0
      %v4945 = vadd.f32 %v4775, %v4944
      %v4946 = vpop.f32.mrb[0].mxu0
      %v4947 = vpop.f32.mrb[0].mxu0
      %v4948 = vadd.f32 %v4776, %v4947
      %v4949 = vpop.f32.mrb[0].mxu0
      %4950 = vmatprep.mubr.bf16.mxu0 0
      %4951 = vmatmul.mubr.bf16.gmra.mrb[0].mxu0 %v4826
      %v4952 = vpop.f32.mrb[0].mxu0
      %v4953 = vadd.f32 %v4777, %v4952
      %v4954 = vpop.f32.mrb[0].mxu0
      %v4955 = vpop.f32.mrb[0].mxu0
      %v4956 = vadd.f32 %v4778, %v4955
      %v4957 = vpop.f32.mrb[0].mxu0
      %4958 = vmatprep.mubr.bf16.mxu0 0
      %4959 = vmatmul.mubr.bf16.gmra.mrb[0].mxu0 %v4829
      %v4960 = vpop.f32.mrb[0].mxu0
      %v4961 = vadd.f32 %v4779, %v4960
      %v4962 = vpop.f32.mrb[0].mxu0
      %v4963 = vpop.f32.mrb[0].mxu0
      %v4964 = vadd.f32 %v4780, %v4963
      %v4965 = vpop.f32.mrb[0].mxu0
      %4966 = vmatprep.mubr.bf16.mxu0 0
      %4967 = vmatmul.mubr.bf16.gmra.mrb[0].mxu0 %v4832
      %v4968 = vpop.f32.mrb[0].mxu0
      %v4969 = vadd.f32 %v4781, %v4968
      %v4970 = vpop.f32.mrb[0].mxu0
      %v4971 = vpop.f32.mrb[0].mxu0
      %v4972 = vadd.f32 %v4782, %v4971
      %v4973 = vpop.f32.mrb[0].mxu0
      %4974 = vmatprep.mubr.bf16.mxu0 0
      %4975 = vmatmul.mubr.bf16.gmra.mrb[0].mxu0 %v4835
      %v4976 = vpop.f32.mrb[0].mxu0
      %v4977 = vadd.f32 %v4783, %v4976
      %v4978 = vpop.f32.mrb[0].mxu0
      %v4979 = vpop.f32.mrb[0].mxu0
      %v4980 = vadd.f32 %v4784, %v4979
      %v4981 = vpop.f32.mrb[0].mxu0
      %4982 = vmatprep.mubr.bf16.mxu0 0
      %4983 = vmatmul.mubr.bf16.gmra.mrb[0].mxu0 %v4838
      %v4984 = vpop.f32.mrb[0].mxu0
      %v4985 = vadd.f32 %v4785, %v4984
      %v4986 = vpop.f32.mrb[0].mxu0
      %v4987 = vpop.f32.mrb[0].mxu0
      %v4988 = vadd.f32 %v4786, %v4987
      %v4989 = vpop.f32.mrb[0].mxu0
      %4990 = vmatprep.mubr.bf16.mxu0 0
      %4991 = vmatmul.mubr.bf16.gmra.mrb[0].mxu0 %v4841
      %v4992 = vpop.f32.mrb[0].mxu0
      %v4993 = vadd.f32 %v4787, %v4992
      %v4994 = vpop.f32.mrb[0].mxu0
      %v4995 = vpop.f32.mrb[0].mxu0
      %v4996 = vadd.f32 %v4788, %v4995
      %v4997 = vpop.f32.mrb[0].mxu0
      %4998 = vmatprep.mubr.bf16.mxu0 0
      %4999 = vmatmul.mubr.bf16.gmra.mrb[0].mxu0 %v4844
      %v5000 = vpop.f32.mrb[0].mxu0
      %v5001 = vadd.f32 %v4789, %v5000
      %v5002 = vpop.f32.mrb[0].mxu0
      %v5003 = vpop.f32.mrb[0].mxu0
      %v5004 = vadd.f32 %v4790, %v5003
      %v5005 = vpop.f32.mrb[0].mxu0
      %5006 = vdwg.mxu0
      %5007 = vst.msk [vmem:[%s251] sm:$0xff] %vm253, %v4881
      %5008 = vst.msk [vmem:[%s251 + $0x8] sm:$0xff] %vm253, %v4884
      %5009 = vst.msk [vmem:[%s251 + $0x10] sm:$0xff] %vm253, %v4889
      %5010 = vst.msk [vmem:[%s251 + $0x18] sm:$0xff] %vm253, %v4892
      %5011 = vst.msk [vmem:[%s251 + $0x20] sm:$0xff] %vm253, %v4897
      %5012 = vst.msk [vmem:[%s251 + $0x28] sm:$0xff] %vm253, %v4900
      %5013 = vst.msk [vmem:[%s251 + $0x30] sm:$0xff] %vm253, %v4905
      %5014 = vst.msk [vmem:[%s251 + $0x38] sm:$0xff] %vm253, %v4908
      %5015 = vst.msk [vmem:[%s251 + $0x40] sm:$0xff] %vm253, %v4913
      %5016 = vst.msk [vmem:[%s251 + $0x48] sm:$0xff] %vm253, %v4916
      %5017 = vst.msk [vmem:[%s251 + $0x50] sm:$0xff] %vm253, %v4921
      %5018 = vst.msk [vmem:[%s251 + $0x58] sm:$0xff] %vm253, %v4924
      %5019 = vst.msk [vmem:[%s251 + $0x60] sm:$0xff] %vm253, %v4929
      %5020 = vst.msk [vmem:[%s251 + $0x68] sm:$0xff] %vm253, %v4932
      %5021 = vst.msk [vmem:[%s251 + $0x70] sm:$0xff] %vm253, %v4937
      %5022 = vst.msk [vmem:[%s251 + $0x78] sm:$0xff] %vm253, %v4940
      %5023 = vst.msk [vmem:[%s251 + $0x80] sm:$0xff] %vm253, %v4945
      %5024 = vst.msk [vmem:[%s251 + $0x88] sm:$0xff] %vm253, %v4948
      %5025 = vst.msk [vmem:[%s251 + $0x90] sm:$0xff] %vm253, %v4953
      %5026 = vst.msk [vmem:[%s251 + $0x98] sm:$0xff] %vm253, %v4956
      %5027 = vst.msk [vmem:[%s251 + $0xa0] sm:$0xff] %vm253, %v4961
      %5028 = vst.msk [vmem:[%s251 + $0xa8] sm:$0xff] %vm253, %v4964
      %5029 = vst.msk [vmem:[%s251 + $0xb0] sm:$0xff] %vm253, %v4969
      %5030 = vst.msk [vmem:[%s251 + $0xb8] sm:$0xff] %vm253, %v4972
      %5031 = vst.msk [vmem:[%s251 + $0xc0] sm:$0xff] %vm253, %v4977
      %5032 = vst.msk [vmem:[%s251 + $0xc8] sm:$0xff] %vm253, %v4980
      %5033 = vst.msk [vmem:[%s251 + $0xd0] sm:$0xff] %vm253, %v4985
      %5034 = vst.msk [vmem:[%s251 + $0xd8] sm:$0xff] %vm253, %v4988
      %5035 = vst.msk [vmem:[%s251 + $0xe0] sm:$0xff] %vm253, %v4993
      %5036 = vst.msk [vmem:[%s251 + $0xe8] sm:$0xff] %vm253, %v4996
      %5037 = vst.msk [vmem:[%s251 + $0xf0] sm:$0xff] %vm253, %v5001
      %5038 = vst.msk [vmem:[%s251 + $0xf8] sm:$0xff] %vm253, %v5004
      %p5039 = scmp.lt.s32.totalorder %s17, 1
      %s5040 = scalar_select %p5039, %s17, 1
      %s5041 = smul.addr %s5040, 32
      %s5042 = smul.addr %s5041, 8
      %s5043 = scalar_lea.vmem %s6, %s5042
      // Predicated region
      $region45: #{tpu_custom_call.1} parent=43 // pred_check
        %p5044 = pneg %p166
      $region46: #{tpu_custom_call.1} parent=43 // pred_check_branch
        %5046 = sbr.rel (%p5044) target = $region48
      $region47: #{tpu_custom_call.1} parent=43 // pred_region
        _
      $region48: #{tpu_custom_call.1} parent=43 // pred_fallthru
        _
    $region44: #{tpu_custom_call.1} parent=5 // pred_fallthru
      _
    %p5047 = scmp.le.s32.totalorder 2, %s12
    // Predicated region
    $region49: #{tpu_custom_call.1} parent=5 // pred_check
      %p5048 = pneg %p5047
    $region50: #{tpu_custom_call.1} parent=5 // pred_check_branch
      %5050 = sbr.rel (%p5048) target = $region52
    $region51: #{tpu_custom_call.1} parent=5 // pred_region
      %s5051 = ssub.s32 %s12, 2
      // Predicated region
      $region53: #{tpu_custom_call.1} parent=51 // pred_check
        %p5052 = pneg %p172
      $region54: #{tpu_custom_call.1} parent=51 // pred_check_branch
        %5054 = sbr.rel (%p5052) target = $region56
      $region55: #{tpu_custom_call.1} parent=51 // pred_region
        %p5055 = scmp.lt.s32.totalorder %s18, 1
        %s5056 = scalar_select %p5055, %s18, 1
        %s5057 = smul.addr %s5056, 32
        %s5058 = smul.addr %s5057, 8
        %s5059 = scalar_lea.vmem %s6, %s5058
      $region56: #{tpu_custom_call.1} parent=51 // pred_fallthru
        _
    $region52: #{tpu_custom_call.1} parent=5 // pred_fallthru
      _
  $region6: #{tpu_custom_call.1} parent=0 // loop_footer
    %s16 = sadd.s32 1, %s12
  $region7: #{tpu_custom_call.1} parent=0 // loop_footer_branch
    %11 = sbr.rel target = $region3
  $region8: #{tpu_custom_call.1} parent=0 // loop_exit
    _

</llo_original>
